<compile_context>
chip_gen: v7x
topology: tpu7x:2x2x1
jax: 0.10.0
libtpu: 0.0.40
codegen_flags: <defaults>
</compile_context>

<pallas_src>
import jax
import jax.numpy as jnp
from jax.experimental import pallas as pl
from jax.experimental.pallas import tpu as pltpu

D_INPUT = 3
K_PAD = 8                  # input channels padded to the 8-sublane granule
N_LAYERS = 8
D_FILTER = 128             # hidden width (lane-aligned)
SKIP = (4,)
D_OUT = 4                  # d_viewdirs is None -> final Linear(d_filter, 4)
N_HIDDEN_W = 7             # stacked (d_filter, d_filter) weights: layers 1..7
TILE_N = 512               # points per grid step


def nerf_kernel(x_ref, w_in_ref, w_hid_ref, b_ref, wo_ref, bo_ref, o_ref):
    # x_ref:     (TILE_N, K_PAD)            bf16  zero-padded input points
    # w_in_ref:  (K_PAD, 2*D_FILTER)        bf16  [w0 | w5_x] fused along out dim
    # w_hid_ref: (7, D_FILTER, D_FILTER)    bf16  layers 1,2,3,4, 5_hidden, 6, 7
    # b_ref:     (N_LAYERS, D_FILTER)       f32   biases for layers 0..7
    # wo_ref:    (D_FILTER, D_FILTER)       bf16  output weight, cols 4..127 zero
    # bo_ref:    (1, D_FILTER)              f32   output bias,   cols 4..127 zero
    # o_ref:     (TILE_N, D_FILTER)         f32   lane-dense output (cols 0..3 valid)
    x_in = x_ref[...]                                             # bf16

    # One fused K=8 matmul covers both input-side projections:
    #   x @ [w0 | w5_x]  ->  [layer-0 pre-activation | layer-5 skip term]
    xin_proj = jnp.dot(x_in, w_in_ref[...], preferred_element_type=jnp.float32)
    skip5 = xin_proj[:, D_FILTER:]                                # x_in @ w5_x (f32)
    h = jnp.maximum(xin_proj[:, :D_FILTER] + b_ref[0:1, :], 0.0)  # layer 0 + ReLU

    def hidden(h_f32, w_idx, layer_idx, extra=None):
        y = jnp.dot(h_f32.astype(jnp.bfloat16), w_hid_ref[w_idx],
                    preferred_element_type=jnp.float32)
        if extra is not None:
            y = y + extra
        return jnp.maximum(y + b_ref[layer_idx:layer_idx + 1, :], 0.0)

    h = hidden(h, 0, 1)            # layer 1
    h = hidden(h, 1, 2)            # layer 2
    h = hidden(h, 2, 3)            # layer 3
    h = hidden(h, 3, 4)            # layer 4
    # skip after layer 4:  concat([h, x_in]) @ W5 == h @ w5_h + x_in @ w5_x
    h = hidden(h, 4, 5, extra=skip5)   # layer 5
    h = hidden(h, 5, 6)            # layer 6
    h = hidden(h, 6, 7)            # layer 7

    # output layer: Linear(d_filter, 4), padded to 128 lanes for a dense store
    out = jnp.dot(h.astype(jnp.bfloat16), wo_ref[...],
                  preferred_element_type=jnp.float32) + bo_ref[...]
    o_ref[...] = out


def _pack_params(params):
    """Pack natural-shape params into the kernel's lane/sublane-aligned bf16 layout."""
    f32, bf16 = jnp.float32, jnp.bfloat16
    w5 = params["w5"]                                   # (D_FILTER + D_INPUT, D_FILTER)

    # fused input-side weight [w0 | w5_x], K padded 3 -> 8 with zero rows
    w_in = jnp.zeros((K_PAD, 2 * D_FILTER), bf16)
    w_in = w_in.at[:D_INPUT, :D_FILTER].set(params["w0"].astype(bf16))
    w_in = w_in.at[:D_INPUT, D_FILTER:].set(w5[D_FILTER:].astype(bf16))

    # stacked hidden weights: layers 1..7 (layer 5 contributes only its hidden rows)
    hidden_ws = [params["w1"], params["w2"], params["w3"], params["w4"],
                 w5[:D_FILTER], params["w6"], params["w7"]]
    w_hid = jnp.stack([w.astype(bf16) for w in hidden_ws], axis=0)

    # stacked biases (kept f32)
    b_stack = jnp.stack([params[f"b{i}"].astype(f32) for i in range(N_LAYERS)], axis=0)

    # output weight / bias padded to a lane-dense 128-wide block (exact zeros elsewhere)
    wo_pad = jnp.zeros((D_FILTER, D_FILTER), bf16).at[:, :D_OUT].set(
        params["wo"].astype(bf16))
    bo_pad = jnp.zeros((1, D_FILTER), f32).at[0, :D_OUT].set(params["bo"].astype(f32))
    return w_in, w_hid, b_stack, wo_pad, bo_pad


def nerf_forward(x, params, *, tile_n=TILE_N):
    """x: (N, D_INPUT) float32.  params: natural-shape dict (see make_params)."""
    N = x.shape[0]
    n_blocks = pl.cdiv(N, tile_n)
    if n_blocks > 1 and n_blocks % 2:
        n_blocks += 1                  # even grid shards cleanly across v7x's 2 TCs
    n_pad = n_blocks * tile_n

    # pad points to the tile boundary and K_PAD lanes; bf16 operands for the MXU
    x_pad = jnp.zeros((n_pad, K_PAD), jnp.bfloat16)
    x_pad = x_pad.at[:N, :D_INPUT].set(x.astype(jnp.bfloat16))

    w_in, w_hid, b_stack, wo_pad, bo_pad = _pack_params(params)

    flops = 2 * n_pad * (K_PAD * 2 * D_FILTER
                         + N_HIDDEN_W * D_FILTER * D_FILTER
                         + D_FILTER * D_FILTER)
    bytes_accessed = (x_pad.size * x_pad.dtype.itemsize
                      + n_pad * D_FILTER * 4
                      + sum(a.size * a.dtype.itemsize
                            for a in (w_in, w_hid, b_stack, wo_pad, bo_pad)))

    full2 = lambda i: (0, 0)           # grid-invariant weight blocks (stay resident)
    tiled = lambda i: (i, 0)           # points / output tiled along N

    out = pl.pallas_call(
        nerf_kernel,
        out_shape=jax.ShapeDtypeStruct((n_pad, D_FILTER), jnp.float32),
        grid_spec=pltpu.PrefetchScalarGridSpec(
            num_scalar_prefetch=0,
            grid=(n_blocks,),
            in_specs=[
                pl.BlockSpec((tile_n, K_PAD), tiled),
                pl.BlockSpec((K_PAD, 2 * D_FILTER), full2),
                pl.BlockSpec((N_HIDDEN_W, D_FILTER, D_FILTER), lambda i: (0, 0, 0)),
                pl.BlockSpec((N_LAYERS, D_FILTER), full2),
                pl.BlockSpec((D_FILTER, D_FILTER), full2),
                pl.BlockSpec((1, D_FILTER), full2),
            ],
            out_specs=pl.BlockSpec((tile_n, D_FILTER), tiled),
        ),
        compiler_params=pltpu.CompilerParams(
            dimension_semantics=("parallel",),
            vmem_limit_bytes=32 * 1024 * 1024,
        ),
        cost_estimate=pl.CostEstimate(
            flops=flops, transcendentals=0, bytes_accessed=bytes_accessed),
    )(x_pad, w_in, w_hid, b_stack, wo_pad, bo_pad)

    return out[:N, :D_OUT]


def make_params(key):
    """Deterministic synthetic parameters in natural (in, out) layout.

    PyTorch Linear stores W as (out, in); here weights are kept pre-transposed as
    (in, out) so every layer is x @ W + b (same math as x @ W_pt.T + b).  Layer 5
    (built with i=4 in skip) has in_features = d_filter + d_input.
    """
    params = {}
    keys = iter(jax.random.split(key, 2 * (N_LAYERS + 1)))

    def init(shape):
        scale = (2.0 / shape[0]) ** 0.5      # keeps activations O(1) through 8 layers
        return (scale * jax.random.normal(next(keys), shape)).astype(jnp.float32)

    in_dims = [D_INPUT] + [D_FILTER + D_INPUT if (i - 1) in SKIP else D_FILTER
                           for i in range(1, N_LAYERS)]
    for i, d_in in enumerate(in_dims):
        params[f"w{i}"] = init((d_in, D_FILTER))
        params[f"b{i}"] = (0.01 * jax.random.normal(next(keys), (D_FILTER,))
                           ).astype(jnp.float32)
    params["wo"] = init((D_FILTER, D_OUT))
    params["bo"] = (0.01 * jax.random.normal(next(keys), (D_OUT,))).astype(jnp.float32)
    return params


def nerf_reference(x, params, compute_dtype=jnp.float32):
    """Pure-JAX reference reproducing the PyTorch forward (d_viewdirs=None).

    compute_dtype=jnp.bfloat16 mirrors the kernel's bf16-operand / f32-accumulate
    matmul precision for a matched-precision comparison.
    """
    def dense(h, w, b):
        return jnp.dot(h.astype(compute_dtype), w.astype(compute_dtype),
                       preferred_element_type=jnp.float32) + b

    x_input = x
    h = x
    for i in range(N_LAYERS):
        h = jax.nn.relu(dense(h, params[f"w{i}"], params[f"b{i}"]))
        if i in SKIP:
            h = jnp.concatenate([h, x_input], axis=-1)
    return dense(h, params["wo"], params["bo"])


if __name__ == "__main__":
    key = jax.random.PRNGKey(0)
    k_x, k_p = jax.random.split(key)

    N = 1000   # deliberately NOT a multiple of TILE_N: exercises the padded tail
    x = jax.random.normal(k_x, (N, D_INPUT), dtype=jnp.float32)
    params = make_params(k_p)

    out = jax.block_until_ready(nerf_forward(x, params))
    assert out.shape == (N, D_OUT), out.shape

    # Matched-precision reference (bf16 operands, f32 accumulation, like the MXU path).
    ref = nerf_reference(x, params, compute_dtype=jnp.bfloat16)
    max_err = float(jnp.max(jnp.abs(out - ref)))
    assert jnp.allclose(out, ref, atol=1e-2, rtol=1e-2), max_err

    print("KERNEL_OK")
</pallas_src>

<mosaic_0001>
module attributes {stable_mosaic.version = 11 : i64} {
  func.func @nerf_kernel(%arg0: i32, %arg1: memref<512x8xbf16, #tpu.memory_space<vmem>>, %arg2: memref<8x256xbf16, #tpu.memory_space<vmem>>, %arg3: memref<7x128x128xbf16, #tpu.memory_space<vmem>>, %arg4: memref<8x128xf32, #tpu.memory_space<vmem>>, %arg5: memref<128x128xbf16, #tpu.memory_space<vmem>>, %arg6: memref<1x128xf32, #tpu.memory_space<vmem>>, %arg7: memref<512x128xf32, #tpu.memory_space<vmem>>) attributes {dimension_semantics = [#tpu.dimension_semantics<parallel>], iteration_bounds = array<i64: 2>, scalar_prefetch = 0 : i64, scratch_operands = 0 : i64, tpu.core_type = #tpu.core_type<tc>, window_params = [{transform_indices = @transform_0, window_bounds = array<i64: 512, 8>}, {pipeline_mode = #tpu.pipeline_mode<synchronous>, transform_indices = @transform_1, window_bounds = array<i64: 8, 256>}, {pipeline_mode = #tpu.pipeline_mode<synchronous>, transform_indices = @transform_2, window_bounds = array<i64: 7, 128, 128>}, {pipeline_mode = #tpu.pipeline_mode<synchronous>, transform_indices = @transform_3, window_bounds = array<i64: 8, 128>}, {pipeline_mode = #tpu.pipeline_mode<synchronous>, transform_indices = @transform_4, window_bounds = array<i64: 128, 128>}, {pipeline_mode = #tpu.pipeline_mode<synchronous>, transform_indices = @transform_5, window_bounds = array<i64: 1, 128>}, {transform_indices = @transform_6, window_bounds = array<i64: 512, 128>}]} {
    %c0 = arith.constant 0 : index
    %c0_0 = arith.constant 0 : index
    %0 = vector.load %arg1[%c0, %c0_0] : memref<512x8xbf16, #tpu.memory_space<vmem>>, vector<512x8xbf16>
    %c0_1 = arith.constant 0 : index
    %c0_2 = arith.constant 0 : index
    %1 = vector.load %arg2[%c0_1, %c0_2] : memref<8x256xbf16, #tpu.memory_space<vmem>>, vector<8x256xbf16>
    %cst = arith.constant dense<0.000000e+00> : vector<512x256xf32>
    %2 = tpu.matmul %0, %1, %cst {dimension_numbers = #tpu.dot_dimension_numbers<[1], [0], [0], [1], [0, 0, 1, 1], [], []>} : vector<512x8xbf16>, vector<8x256xbf16>, vector<512x256xf32> -> vector<512x256xf32>
    %3 = vector.extract_strided_slice %2 {offsets = [0, 128], sizes = [512, 128], strides = [1, 1]} : vector<512x256xf32> to vector<512x128xf32>
    %4 = vector.extract_strided_slice %2 {offsets = [0, 0], sizes = [512, 128], strides = [1, 1]} : vector<512x256xf32> to vector<512x128xf32>
    %c0_3 = arith.constant 0 : index
    %c0_4 = arith.constant 0 : index
    %5 = vector.load %arg4[%c0_3, %c0_4] : memref<8x128xf32, #tpu.memory_space<vmem>>, vector<1x128xf32>
    %6 = vector.broadcast %5 : vector<1x128xf32> to vector<512x128xf32>
    %7 = arith.addf %4, %6 : vector<512x128xf32>
    %cst_5 = arith.constant 0.000000e+00 : f32
    %8 = vector.broadcast %cst_5 : f32 to vector<512x128xf32>
    %9 = arith.maximumf %7, %8 : vector<512x128xf32>
    %10 = arith.truncf %9 : vector<512x128xf32> to vector<512x128xbf16>
    %c0_6 = arith.constant 0 : index
    %c0_7 = arith.constant 0 : index
    %c0_8 = arith.constant 0 : index
    %11 = vector.load %arg3[%c0_6, %c0_7, %c0_8] : memref<7x128x128xbf16, #tpu.memory_space<vmem>>, vector<1x128x128xbf16>
    %12 = vector.shape_cast %11 : vector<1x128x128xbf16> to vector<128x128xbf16>
    %cst_9 = arith.constant dense<0.000000e+00> : vector<512x128xf32>
    %13 = tpu.matmul %10, %12, %cst_9 {dimension_numbers = #tpu.dot_dimension_numbers<[1], [0], [0], [1], [0, 0, 1, 1], [], []>} : vector<512x128xbf16>, vector<128x128xbf16>, vector<512x128xf32> -> vector<512x128xf32>
    %c1 = arith.constant 1 : index
    %c0_10 = arith.constant 0 : index
    %14 = vector.load %arg4[%c1, %c0_10] : memref<8x128xf32, #tpu.memory_space<vmem>>, vector<1x128xf32>
    %15 = vector.broadcast %14 : vector<1x128xf32> to vector<512x128xf32>
    %16 = arith.addf %13, %15 : vector<512x128xf32>
    %cst_11 = arith.constant 0.000000e+00 : f32
    %17 = vector.broadcast %cst_11 : f32 to vector<512x128xf32>
    %18 = arith.maximumf %16, %17 : vector<512x128xf32>
    %19 = arith.truncf %18 : vector<512x128xf32> to vector<512x128xbf16>
    %c1_12 = arith.constant 1 : index
    %c0_13 = arith.constant 0 : index
    %c0_14 = arith.constant 0 : index
    %20 = vector.load %arg3[%c1_12, %c0_13, %c0_14] : memref<7x128x128xbf16, #tpu.memory_space<vmem>>, vector<1x128x128xbf16>
    %21 = vector.shape_cast %20 : vector<1x128x128xbf16> to vector<128x128xbf16>
    %cst_15 = arith.constant dense<0.000000e+00> : vector<512x128xf32>
    %22 = tpu.matmul %19, %21, %cst_15 {dimension_numbers = #tpu.dot_dimension_numbers<[1], [0], [0], [1], [0, 0, 1, 1], [], []>} : vector<512x128xbf16>, vector<128x128xbf16>, vector<512x128xf32> -> vector<512x128xf32>
    %c2 = arith.constant 2 : index
    %c0_16 = arith.constant 0 : index
    %23 = vector.load %arg4[%c2, %c0_16] : memref<8x128xf32, #tpu.memory_space<vmem>>, vector<1x128xf32>
    %24 = vector.broadcast %23 : vector<1x128xf32> to vector<512x128xf32>
    %25 = arith.addf %22, %24 : vector<512x128xf32>
    %cst_17 = arith.constant 0.000000e+00 : f32
    %26 = vector.broadcast %cst_17 : f32 to vector<512x128xf32>
    %27 = arith.maximumf %25, %26 : vector<512x128xf32>
    %28 = arith.truncf %27 : vector<512x128xf32> to vector<512x128xbf16>
    %c2_18 = arith.constant 2 : index
    %c0_19 = arith.constant 0 : index
    %c0_20 = arith.constant 0 : index
    %29 = vector.load %arg3[%c2_18, %c0_19, %c0_20] : memref<7x128x128xbf16, #tpu.memory_space<vmem>>, vector<1x128x128xbf16>
    %30 = vector.shape_cast %29 : vector<1x128x128xbf16> to vector<128x128xbf16>
    %cst_21 = arith.constant dense<0.000000e+00> : vector<512x128xf32>
    %31 = tpu.matmul %28, %30, %cst_21 {dimension_numbers = #tpu.dot_dimension_numbers<[1], [0], [0], [1], [0, 0, 1, 1], [], []>} : vector<512x128xbf16>, vector<128x128xbf16>, vector<512x128xf32> -> vector<512x128xf32>
    %c3 = arith.constant 3 : index
    %c0_22 = arith.constant 0 : index
    %32 = vector.load %arg4[%c3, %c0_22] : memref<8x128xf32, #tpu.memory_space<vmem>>, vector<1x128xf32>
    %33 = vector.broadcast %32 : vector<1x128xf32> to vector<512x128xf32>
    %34 = arith.addf %31, %33 : vector<512x128xf32>
    %cst_23 = arith.constant 0.000000e+00 : f32
    %35 = vector.broadcast %cst_23 : f32 to vector<512x128xf32>
    %36 = arith.maximumf %34, %35 : vector<512x128xf32>
    %37 = arith.truncf %36 : vector<512x128xf32> to vector<512x128xbf16>
    %c3_24 = arith.constant 3 : index
    %c0_25 = arith.constant 0 : index
    %c0_26 = arith.constant 0 : index
    %38 = vector.load %arg3[%c3_24, %c0_25, %c0_26] : memref<7x128x128xbf16, #tpu.memory_space<vmem>>, vector<1x128x128xbf16>
    %39 = vector.shape_cast %38 : vector<1x128x128xbf16> to vector<128x128xbf16>
    %cst_27 = arith.constant dense<0.000000e+00> : vector<512x128xf32>
    %40 = tpu.matmul %37, %39, %cst_27 {dimension_numbers = #tpu.dot_dimension_numbers<[1], [0], [0], [1], [0, 0, 1, 1], [], []>} : vector<512x128xbf16>, vector<128x128xbf16>, vector<512x128xf32> -> vector<512x128xf32>
    %c4 = arith.constant 4 : index
    %c0_28 = arith.constant 0 : index
    %41 = vector.load %arg4[%c4, %c0_28] : memref<8x128xf32, #tpu.memory_space<vmem>>, vector<1x128xf32>
    %42 = vector.broadcast %41 : vector<1x128xf32> to vector<512x128xf32>
    %43 = arith.addf %40, %42 : vector<512x128xf32>
    %cst_29 = arith.constant 0.000000e+00 : f32
    %44 = vector.broadcast %cst_29 : f32 to vector<512x128xf32>
    %45 = arith.maximumf %43, %44 : vector<512x128xf32>
    %46 = arith.truncf %45 : vector<512x128xf32> to vector<512x128xbf16>
    %c4_30 = arith.constant 4 : index
    %c0_31 = arith.constant 0 : index
    %c0_32 = arith.constant 0 : index
    %47 = vector.load %arg3[%c4_30, %c0_31, %c0_32] : memref<7x128x128xbf16, #tpu.memory_space<vmem>>, vector<1x128x128xbf16>
    %48 = vector.shape_cast %47 : vector<1x128x128xbf16> to vector<128x128xbf16>
    %cst_33 = arith.constant dense<0.000000e+00> : vector<512x128xf32>
    %49 = tpu.matmul %46, %48, %cst_33 {dimension_numbers = #tpu.dot_dimension_numbers<[1], [0], [0], [1], [0, 0, 1, 1], [], []>} : vector<512x128xbf16>, vector<128x128xbf16>, vector<512x128xf32> -> vector<512x128xf32>
    %50 = arith.addf %49, %3 : vector<512x128xf32>
    %c5 = arith.constant 5 : index
    %c0_34 = arith.constant 0 : index
    %51 = vector.load %arg4[%c5, %c0_34] : memref<8x128xf32, #tpu.memory_space<vmem>>, vector<1x128xf32>
    %52 = vector.broadcast %51 : vector<1x128xf32> to vector<512x128xf32>
    %53 = arith.addf %50, %52 : vector<512x128xf32>
    %cst_35 = arith.constant 0.000000e+00 : f32
    %54 = vector.broadcast %cst_35 : f32 to vector<512x128xf32>
    %55 = arith.maximumf %53, %54 : vector<512x128xf32>
    %56 = arith.truncf %55 : vector<512x128xf32> to vector<512x128xbf16>
    %c5_36 = arith.constant 5 : index
    %c0_37 = arith.constant 0 : index
    %c0_38 = arith.constant 0 : index
    %57 = vector.load %arg3[%c5_36, %c0_37, %c0_38] : memref<7x128x128xbf16, #tpu.memory_space<vmem>>, vector<1x128x128xbf16>
    %58 = vector.shape_cast %57 : vector<1x128x128xbf16> to vector<128x128xbf16>
    %cst_39 = arith.constant dense<0.000000e+00> : vector<512x128xf32>
    %59 = tpu.matmul %56, %58, %cst_39 {dimension_numbers = #tpu.dot_dimension_numbers<[1], [0], [0], [1], [0, 0, 1, 1], [], []>} : vector<512x128xbf16>, vector<128x128xbf16>, vector<512x128xf32> -> vector<512x128xf32>
    %c6 = arith.constant 6 : index
    %c0_40 = arith.constant 0 : index
    %60 = vector.load %arg4[%c6, %c0_40] : memref<8x128xf32, #tpu.memory_space<vmem>>, vector<1x128xf32>
    %61 = vector.broadcast %60 : vector<1x128xf32> to vector<512x128xf32>
    %62 = arith.addf %59, %61 : vector<512x128xf32>
    %cst_41 = arith.constant 0.000000e+00 : f32
    %63 = vector.broadcast %cst_41 : f32 to vector<512x128xf32>
    %64 = arith.maximumf %62, %63 : vector<512x128xf32>
    %65 = arith.truncf %64 : vector<512x128xf32> to vector<512x128xbf16>
    %c6_42 = arith.constant 6 : index
    %c0_43 = arith.constant 0 : index
    %c0_44 = arith.constant 0 : index
    %66 = vector.load %arg3[%c6_42, %c0_43, %c0_44] : memref<7x128x128xbf16, #tpu.memory_space<vmem>>, vector<1x128x128xbf16>
    %67 = vector.shape_cast %66 : vector<1x128x128xbf16> to vector<128x128xbf16>
    %cst_45 = arith.constant dense<0.000000e+00> : vector<512x128xf32>
    %68 = tpu.matmul %65, %67, %cst_45 {dimension_numbers = #tpu.dot_dimension_numbers<[1], [0], [0], [1], [0, 0, 1, 1], [], []>} : vector<512x128xbf16>, vector<128x128xbf16>, vector<512x128xf32> -> vector<512x128xf32>
    %c7 = arith.constant 7 : index
    %c0_46 = arith.constant 0 : index
    %69 = vector.load %arg4[%c7, %c0_46] : memref<8x128xf32, #tpu.memory_space<vmem>>, vector<1x128xf32>
    %70 = vector.broadcast %69 : vector<1x128xf32> to vector<512x128xf32>
    %71 = arith.addf %68, %70 : vector<512x128xf32>
    %cst_47 = arith.constant 0.000000e+00 : f32
    %72 = vector.broadcast %cst_47 : f32 to vector<512x128xf32>
    %73 = arith.maximumf %71, %72 : vector<512x128xf32>
    %74 = arith.truncf %73 : vector<512x128xf32> to vector<512x128xbf16>
    %c0_48 = arith.constant 0 : index
    %c0_49 = arith.constant 0 : index
    %75 = vector.load %arg5[%c0_48, %c0_49] : memref<128x128xbf16, #tpu.memory_space<vmem>>, vector<128x128xbf16>
    %cst_50 = arith.constant dense<0.000000e+00> : vector<512x128xf32>
    %76 = tpu.matmul %74, %75, %cst_50 {dimension_numbers = #tpu.dot_dimension_numbers<[1], [0], [0], [1], [0, 0, 1, 1], [], []>} : vector<512x128xbf16>, vector<128x128xbf16>, vector<512x128xf32> -> vector<512x128xf32>
    %c0_51 = arith.constant 0 : index
    %c0_52 = arith.constant 0 : index
    %77 = vector.load %arg6[%c0_51, %c0_52] : memref<1x128xf32, #tpu.memory_space<vmem>>, vector<1x128xf32>
    %78 = vector.broadcast %77 : vector<1x128xf32> to vector<512x128xf32>
    %79 = arith.addf %76, %78 : vector<512x128xf32>
    %c0_53 = arith.constant 0 : index
    %c0_54 = arith.constant 0 : index
    %80 = vector.load %arg7[%c0_53, %c0_54] : memref<512x128xf32, #tpu.memory_space<vmem>>, vector<512x128xf32>
    tpu.vector_store %arg7[%c0_53, %c0_54], %79 {strides = array<i32>} : memref<512x128xf32, #tpu.memory_space<vmem>>, vector<512x128xf32>,
    return
  }
  func.func @transform_0(%arg0: i32) -> (i32, i32) {
    %c0_i32 = arith.constant 0 : i32
    %c0_i32_0 = arith.constant 0 : i32
    return %arg0, %c0_i32 : i32, i32
  }
  func.func @transform_1(%arg0: i32) -> (i32, i32) {
    %c0_i32 = arith.constant 0 : i32
    %c0_i32_0 = arith.constant 0 : i32
    %c0_i32_1 = arith.constant 0 : i32
    return %c0_i32, %c0_i32_0 : i32, i32
  }
  func.func @transform_2(%arg0: i32) -> (i32, i32, i32) {
    %c0_i32 = arith.constant 0 : i32
    %c0_i32_0 = arith.constant 0 : i32
    %c0_i32_1 = arith.constant 0 : i32
    %c0_i32_2 = arith.constant 0 : i32
    return %c0_i32, %c0_i32_0, %c0_i32_1 : i32, i32, i32
  }
  func.func @transform_3(%arg0: i32) -> (i32, i32) {
    %c0_i32 = arith.constant 0 : i32
    %c0_i32_0 = arith.constant 0 : i32
    %c0_i32_1 = arith.constant 0 : i32
    return %c0_i32, %c0_i32_0 : i32, i32
  }
  func.func @transform_4(%arg0: i32) -> (i32, i32) {
    %c0_i32 = arith.constant 0 : i32
    %c0_i32_0 = arith.constant 0 : i32
    %c0_i32_1 = arith.constant 0 : i32
    return %c0_i32, %c0_i32_0 : i32, i32
  }
  func.func @transform_5(%arg0: i32) -> (i32, i32) {
    %c0_i32 = arith.constant 0 : i32
    %c0_i32_0 = arith.constant 0 : i32
    %c0_i32_1 = arith.constant 0 : i32
    return %c0_i32, %c0_i32_0 : i32, i32
  }
  func.func @transform_6(%arg0: i32) -> (i32, i32) {
    %c0_i32 = arith.constant 0 : i32
    %c0_i32_0 = arith.constant 0 : i32
    return %arg0, %c0_i32 : i32, i32
  }
}

</mosaic_0001>

<llo_original>
// kernel: tpu_custom_call.1
$region0: #{tpu_custom_call.1}
  #allocation0 [shape = 'u32[]', space=smem, size = 0x4, offset = 0x4, fixed_abs, tag = 'smem constant byte address 0x4 - core index']
  #allocation1 [shape = 'u32[144,128]{1,0:T(1,128)}', space=vmem, size = 0x12000, scoped, tag = 'internal scratch']
  %s0 = inlined_call_operand.vmem [shape: bf16[1024,8], index: 0, kind: input, shape index: {}]
  %s1 = inlined_call_operand.vmem [shape: bf16[8,256], index: 1, kind: input, shape index: {}]
  %s2 = inlined_call_operand.vmem [shape: bf16[7,128,128], index: 2, kind: input, shape index: {}]
  %s3 = inlined_call_operand.vmem [shape: f32[8,128], index: 3, kind: input, shape index: {}]
  %s4 = inlined_call_operand.vmem [shape: bf16[128,128], index: 4, kind: input, shape index: {}]
  %s5 = inlined_call_operand.vmem [shape: f32[1,128], index: 5, kind: input, shape index: {}]
  %s6 = inlined_call_operand.hbm [shape: f32[1024,128], index: 6, kind: output, shape index: {}]
  %s7 = sld [smem:[#allocation0]]
  $region57: #{tpu_custom_call.1} parent=0
    _
  %s9 = ssub.s32 1, %s7
  %s10 = scalar_select 0, %s9, %s7
  $region1: #{tpu_custom_call.1} parent=0
    #allocation2 [shape = 'u8[524288]{0}', space=vmem, size = 0x80000, scoped, tag = 'output window, operand 0']
    #allocation3 [shape = 's32[2]{0}', space=sflag, size = 0x8, scoped, tag = 'scoped memory for tpu_custom_call.1']
    %11 = vsyncpa [#allocation3], 0
    %s12 = scalar_lea.sflag [#allocation3], 1
    %13 = vsyncpa %s12, 0
    loop: start=0, step=1, limit=4
    $region2: #{tpu_custom_call.1} parent=1 // loop_pre_header
      _
    $region3: #{tpu_custom_call.1} parent=1 // loop_header
      %s15 = sphi 0, %s19
      %p16 = scmp.ge.s32.totalorder %s15, 4
      %s25 = sphi 0, %s27
      %s28 = sphi 0, %s25
      %s29 = sphi 0, %s28
      %s45 = sphi 0, %s29
      %s49 = sphi 0, %s49
      %s51 = sphi 0, %s49
      %s52 = sphi 0, %s51
      %s66 = sphi 0, %s52
      %s70 = sphi 0, %s70
      %s72 = sphi 0, %s70
      %s73 = sphi 0, %s72
      %s87 = sphi 0, %s73
      %s91 = sphi 0, %s91
      %s93 = sphi 0, %s91
      %s94 = sphi 0, %s93
      %s108 = sphi 0, %s94
      %s112 = sphi 0, %s112
      %s114 = sphi 0, %s112
      %s115 = sphi 0, %s114
      %s129 = sphi 0, %s115
      %s133 = sphi 0, %s133
      %s135 = sphi 0, %s133
      %s136 = sphi 0, %s135
      %s150 = sphi 0, %s136
      %s156 = sphi 0, %s158
      %s159 = sphi 0, %s156
      %s160 = sphi 0, %s159
      %s176 = sphi 0, %s160
    $region4: #{tpu_custom_call.1} parent=1 // loop_header_branch
      %18 = sbr.rel (%p16) target = $region8
    $region5: #{tpu_custom_call.1} parent=1 // loop_body
      %s20 = ssub.s32 %s15, 1
      %s21 = ssub.s32 %s15, 2
      %s22 = sadd.s32 %s15, 1
      %s23 = ssub.s32 %s15, %s22
      %p24 = scmp.eq.s32.totalorder %s23, 0
      %s26 = sadd.s32 %s25, 1
      %s27 = scalar_select %p24, %s25, %s26
      %p30 = pneg %p24
      %p31 = scmp.eq.s32.totalorder %s15, 1
      %p32 = por %p30, %p31
      %p33 = scmp.ne.s32.totalorder %s25, %s28
      %p34 = scmp.eq.s32.totalorder %s15, 0
      %p35 = por %p33, %p34
      %p36 = scmp.ne.s32.totalorder %s25, %s28
      %p37 = scmp.eq.s32.totalorder %s20, 1
      %p38 = por %p36, %p37
      %p39 = scmp.ne.s32.totalorder %s28, %s29
      %p40 = scmp.eq.s32.totalorder %s20, 0
      %p41 = por %p39, %p40
      %p42 = scmp.ne.s32.totalorder %s28, %s29
      %p43 = scmp.eq.s32.totalorder %s21, 1
      %p44 = por %p42, %p43
      %p46 = scmp.ne.s32.totalorder %s29, %s45
      %p47 = scmp.eq.s32.totalorder %s21, 0
      %p48 = por %p46, %p47
      %s50 = sadd.s32 %s49, 1
      %p53 = scmp.eq.s32.totalorder %s15, 1
      %p54 = scmp.ne.s32.totalorder %s49, %s51
      %p55 = scmp.eq.s32.totalorder %s15, 0
      %p56 = por %p54, %p55
      %p57 = scmp.ne.s32.totalorder %s49, %s51
      %p58 = scmp.eq.s32.totalorder %s20, 1
      %p59 = por %p57, %p58
      %p60 = scmp.ne.s32.totalorder %s51, %s52
      %p61 = scmp.eq.s32.totalorder %s20, 0
      %p62 = por %p60, %p61
      %p63 = scmp.ne.s32.totalorder %s51, %s52
      %p64 = scmp.eq.s32.totalorder %s21, 1
      %p65 = por %p63, %p64
      %p67 = scmp.ne.s32.totalorder %s52, %s66
      %p68 = scmp.eq.s32.totalorder %s21, 0
      %p69 = por %p67, %p68
      %s71 = sadd.s32 %s70, 1
      %p74 = scmp.eq.s32.totalorder %s15, 1
      %p75 = scmp.ne.s32.totalorder %s70, %s72
      %p76 = scmp.eq.s32.totalorder %s15, 0
      %p77 = por %p75, %p76
      %p78 = scmp.ne.s32.totalorder %s70, %s72
      %p79 = scmp.eq.s32.totalorder %s20, 1
      %p80 = por %p78, %p79
      %p81 = scmp.ne.s32.totalorder %s72, %s73
      %p82 = scmp.eq.s32.totalorder %s20, 0
      %p83 = por %p81, %p82
      %p84 = scmp.ne.s32.totalorder %s72, %s73
      %p85 = scmp.eq.s32.totalorder %s21, 1
      %p86 = por %p84, %p85
      %p88 = scmp.ne.s32.totalorder %s73, %s87
      %p89 = scmp.eq.s32.totalorder %s21, 0
      %p90 = por %p88, %p89
      %s92 = sadd.s32 %s91, 1
      %p95 = scmp.eq.s32.totalorder %s15, 1
      %p96 = scmp.ne.s32.totalorder %s91, %s93
      %p97 = scmp.eq.s32.totalorder %s15, 0
      %p98 = por %p96, %p97
      %p99 = scmp.ne.s32.totalorder %s91, %s93
      %p100 = scmp.eq.s32.totalorder %s20, 1
      %p101 = por %p99, %p100
      %p102 = scmp.ne.s32.totalorder %s93, %s94
      %p103 = scmp.eq.s32.totalorder %s20, 0
      %p104 = por %p102, %p103
      %p105 = scmp.ne.s32.totalorder %s93, %s94
      %p106 = scmp.eq.s32.totalorder %s21, 1
      %p107 = por %p105, %p106
      %p109 = scmp.ne.s32.totalorder %s94, %s108
      %p110 = scmp.eq.s32.totalorder %s21, 0
      %p111 = por %p109, %p110
      %s113 = sadd.s32 %s112, 1
      %p116 = scmp.eq.s32.totalorder %s15, 1
      %p117 = scmp.ne.s32.totalorder %s112, %s114
      %p118 = scmp.eq.s32.totalorder %s15, 0
      %p119 = por %p117, %p118
      %p120 = scmp.ne.s32.totalorder %s112, %s114
      %p121 = scmp.eq.s32.totalorder %s20, 1
      %p122 = por %p120, %p121
      %p123 = scmp.ne.s32.totalorder %s114, %s115
      %p124 = scmp.eq.s32.totalorder %s20, 0
      %p125 = por %p123, %p124
      %p126 = scmp.ne.s32.totalorder %s114, %s115
      %p127 = scmp.eq.s32.totalorder %s21, 1
      %p128 = por %p126, %p127
      %p130 = scmp.ne.s32.totalorder %s115, %s129
      %p131 = scmp.eq.s32.totalorder %s21, 0
      %p132 = por %p130, %p131
      %s134 = sadd.s32 %s133, 1
      %p137 = scmp.eq.s32.totalorder %s15, 1
      %p138 = scmp.ne.s32.totalorder %s133, %s135
      %p139 = scmp.eq.s32.totalorder %s15, 0
      %p140 = por %p138, %p139
      %p141 = scmp.ne.s32.totalorder %s133, %s135
      %p142 = scmp.eq.s32.totalorder %s20, 1
      %p143 = por %p141, %p142
      %p144 = scmp.ne.s32.totalorder %s135, %s136
      %p145 = scmp.eq.s32.totalorder %s20, 0
      %p146 = por %p144, %p145
      %p147 = scmp.ne.s32.totalorder %s135, %s136
      %p148 = scmp.eq.s32.totalorder %s21, 1
      %p149 = por %p147, %p148
      %p151 = scmp.ne.s32.totalorder %s136, %s150
      %p152 = scmp.eq.s32.totalorder %s21, 0
      %p153 = por %p151, %p152
      %s154 = ssub.s32 %s15, %s22
      %p155 = scmp.eq.s32.totalorder %s154, 0
      %s157 = sadd.s32 %s156, 1
      %s158 = scalar_select %p155, %s156, %s157
      %p161 = pneg %p155
      %p162 = scmp.eq.s32.totalorder %s15, 1
      %p163 = por %p161, %p162
      %p164 = scmp.ne.s32.totalorder %s156, %s159
      %p165 = scmp.eq.s32.totalorder %s15, 0
      %p166 = por %p164, %p165
      %p167 = scmp.ne.s32.totalorder %s156, %s159
      %p168 = scmp.eq.s32.totalorder %s20, 1
      %p169 = por %p167, %p168
      %p170 = scmp.ne.s32.totalorder %s159, %s160
      %p171 = scmp.eq.s32.totalorder %s20, 0
      %p172 = por %p170, %p171
      %p173 = scmp.ne.s32.totalorder %s159, %s160
      %p174 = scmp.eq.s32.totalorder %s21, 1
      %p175 = por %p173, %p174
      %p177 = scmp.ne.s32.totalorder %s160, %s176
      %p178 = scmp.eq.s32.totalorder %s21, 0
      %p179 = por %p177, %p178
      %p180 = scmp.le.s32.totalorder 1, %s15
      %p181 = scmp.lt.s32.totalorder %s15, 3
      %p182 = pnand %p180, %p181
      %p183 = pneg %p182
      // Predicated region
      $region9: #{tpu_custom_call.1} parent=5 // pred_check
        _
      $region10: #{tpu_custom_call.1} parent=5 // pred_check_branch
        %185 = sbr.rel (%p182) target = $region12
      $region11: #{tpu_custom_call.1} parent=5 // pred_region
        %s186 = ssub.s32 %s15, 1
        // Predicated region
        $region13: #{tpu_custom_call.1} parent=11 // pred_check
          %p187 = pneg %p62
        $region14: #{tpu_custom_call.1} parent=11 // pred_check_branch
          %189 = sbr.rel (%p187) target = $region16
        $region15: #{tpu_custom_call.1} parent=11 // pred_region
          _
        $region16: #{tpu_custom_call.1} parent=11 // pred_fallthru
          _
        // Predicated region
        $region17: #{tpu_custom_call.1} parent=11 // pred_check
          %p190 = pneg %p83
        $region18: #{tpu_custom_call.1} parent=11 // pred_check_branch
          %192 = sbr.rel (%p190) target = $region20
        $region19: #{tpu_custom_call.1} parent=11 // pred_region
          _
        $region20: #{tpu_custom_call.1} parent=11 // pred_fallthru
          _
        // Predicated region
        $region21: #{tpu_custom_call.1} parent=11 // pred_check
          %p193 = pneg %p104
        $region22: #{tpu_custom_call.1} parent=11 // pred_check_branch
          %195 = sbr.rel (%p193) target = $region24
        $region23: #{tpu_custom_call.1} parent=11 // pred_region
          _
        $region24: #{tpu_custom_call.1} parent=11 // pred_fallthru
          _
        // Predicated region
        $region25: #{tpu_custom_call.1} parent=11 // pred_check
          %p196 = pneg %p125
        $region26: #{tpu_custom_call.1} parent=11 // pred_check_branch
          %198 = sbr.rel (%p196) target = $region28
        $region27: #{tpu_custom_call.1} parent=11 // pred_region
          _
        $region28: #{tpu_custom_call.1} parent=11 // pred_fallthru
          _
        // Predicated region
        $region29: #{tpu_custom_call.1} parent=11 // pred_check
          %p199 = pneg %p146
        $region30: #{tpu_custom_call.1} parent=11 // pred_check_branch
          %201 = sbr.rel (%p199) target = $region32
        $region31: #{tpu_custom_call.1} parent=11 // pred_region
          _
        $region32: #{tpu_custom_call.1} parent=11 // pred_fallthru
          _
      $region12: #{tpu_custom_call.1} parent=5 // pred_fallthru
        _
      %p202 = scmp.lt.s32.totalorder %s15, 2
      // Predicated region
      $region33: #{tpu_custom_call.1} parent=5 // pred_check
        %p203 = pneg %p202
      $region34: #{tpu_custom_call.1} parent=5 // pred_check_branch
        %205 = sbr.rel (%p203) target = $region36
      $region35: #{tpu_custom_call.1} parent=5 // pred_region
        // Predicated region
        $region37: #{tpu_custom_call.1} parent=35 // pred_check
          %p206 = pneg %p35
        $region38: #{tpu_custom_call.1} parent=35 // pred_check_branch
          %208 = sbr.rel (%p206) target = $region40
        $region39: #{tpu_custom_call.1} parent=35 // pred_region
          %s209 = smul.u32 64, %s15
          %p210 = scmp.lt.s32.totalorder %s209, 127
          %s211 = scalar_select %p210, %s209, 127
          %s212 = smul.addr %s211, 4
          %s213 = scalar_lea.vmem %s0, %s212
          %s214 = smul.u32 64, %s15
        $region40: #{tpu_custom_call.1} parent=35 // pred_fallthru
          _
      $region36: #{tpu_custom_call.1} parent=5 // pred_fallthru
        _
      %p215 = scmp.le.s32.totalorder 1, %s15
      %p216 = scmp.lt.s32.totalorder %s15, 3
      %p217 = pnand %p215, %p216
      %p218 = pneg %p217
      // Predicated region
      $region41: #{tpu_custom_call.1} parent=5 // pred_check
        _
      $region42: #{tpu_custom_call.1} parent=5 // pred_check_branch
        %220 = sbr.rel (%p217) target = $region44
      $region43: #{tpu_custom_call.1} parent=5 // pred_region
        %s221 = ssub.s32 %s15, 1
        %s222 = smul.u32 64, %s20
        %p223 = scmp.lt.s32.totalorder %s222, 127
        %s224 = scalar_select %p223, %s222, 127
        %s225 = smul.addr %s224, 4
        %s226 = scalar_lea.vmem %s0, %s225
        %p227 = pneg %p41
        %p228 = pneg %p38
        %p229 = pneg %p62
        %p230 = pneg %p59
        %p231 = pneg %p83
        %p232 = pneg %p80
        %p233 = pneg %p104
        %p234 = pneg %p101
        %p235 = pneg %p125
        %p236 = pneg %p122
        %p237 = pneg %p146
        %p238 = pneg %p143
        %p239 = pneg %p172
        %p240 = pneg %p169
        %s241 = sand.u32 %s159, 1
        %s242 = scalar_lea.sflag [#allocation3], %s241
        %s243 = sand.u32 %s159, 1
        %s244 = smul.addr %s243, 512
        %s245 = scalar_lea.vmem [#allocation2], %s244
        %s246 = smul.u32 64, %s20
        %p247 = scmp.lt.s32.totalorder %s246, 127
        %s248 = scalar_select %p247, %s246, 127
        %s249 = smul.addr %s248, 4
        %s250 = scalar_lea.vmem %s0, %s249
        %s251 = smul.u32 64, %s20
        %s252 = smul.u32 64, %s20
        %v254 = vld [vmem:[%s250] sm:$0xf]
        %v255 = vld [vmem:[%s250 + $0x4] sm:$0xf]
        %v256 = vld [vmem:[%s250 + $0x8] sm:$0xf]
        %v257 = vld [vmem:[%s250 + $0xc] sm:$0xf]
        %v258 = vld [vmem:[%s250 + $0x10] sm:$0xf]
        %v259 = vld [vmem:[%s250 + $0x14] sm:$0xf]
        %v260 = vld [vmem:[%s250 + $0x18] sm:$0xf]
        %v261 = vld [vmem:[%s250 + $0x1c] sm:$0xf]
        %v262 = vld [vmem:[%s250 + $0x20] sm:$0xf]
        %v263 = vld [vmem:[%s250 + $0x24] sm:$0xf]
        %v264 = vld [vmem:[%s250 + $0x28] sm:$0xf]
        %v265 = vld [vmem:[%s250 + $0x2c] sm:$0xf]
        %v266 = vld [vmem:[%s250 + $0x30] sm:$0xf]
        %v267 = vld [vmem:[%s250 + $0x34] sm:$0xf]
        %v268 = vld [vmem:[%s250 + $0x38] sm:$0xf]
        %v269 = vld [vmem:[%s250 + $0x3c] sm:$0xf]
        %v270 = vld [vmem:[%s250 + $0x40] sm:$0xf]
        %v271 = vld [vmem:[%s250 + $0x44] sm:$0xf]
        %v272 = vld [vmem:[%s250 + $0x48] sm:$0xf]
        %v273 = vld [vmem:[%s250 + $0x4c] sm:$0xf]
        %v274 = vld [vmem:[%s250 + $0x50] sm:$0xf]
        %v275 = vld [vmem:[%s250 + $0x54] sm:$0xf]
        %v276 = vld [vmem:[%s250 + $0x58] sm:$0xf]
        %v277 = vld [vmem:[%s250 + $0x5c] sm:$0xf]
        %v278 = vld [vmem:[%s250 + $0x60] sm:$0xf]
        %v279 = vld [vmem:[%s250 + $0x64] sm:$0xf]
        %v280 = vld [vmem:[%s250 + $0x68] sm:$0xf]
        %v281 = vld [vmem:[%s250 + $0x6c] sm:$0xf]
        %v282 = vld [vmem:[%s250 + $0x70] sm:$0xf]
        %v283 = vld [vmem:[%s250 + $0x74] sm:$0xf]
        %v284 = vld [vmem:[%s250 + $0x78] sm:$0xf]
        %v285 = vld [vmem:[%s250 + $0x7c] sm:$0xf]
        %v286 = vld [vmem:[%s250 + $0x80] sm:$0xf]
        %v287 = vld [vmem:[%s250 + $0x84] sm:$0xf]
        %v288 = vld [vmem:[%s250 + $0x88] sm:$0xf]
        %v289 = vld [vmem:[%s250 + $0x8c] sm:$0xf]
        %v290 = vld [vmem:[%s250 + $0x90] sm:$0xf]
        %v291 = vld [vmem:[%s250 + $0x94] sm:$0xf]
        %v292 = vld [vmem:[%s250 + $0x98] sm:$0xf]
        %v293 = vld [vmem:[%s250 + $0x9c] sm:$0xf]
        %v294 = vld [vmem:[%s250 + $0xa0] sm:$0xf]
        %v295 = vld [vmem:[%s250 + $0xa4] sm:$0xf]
        %v296 = vld [vmem:[%s250 + $0xa8] sm:$0xf]
        %v297 = vld [vmem:[%s250 + $0xac] sm:$0xf]
        %v298 = vld [vmem:[%s250 + $0xb0] sm:$0xf]
        %v299 = vld [vmem:[%s250 + $0xb4] sm:$0xf]
        %v300 = vld [vmem:[%s250 + $0xb8] sm:$0xf]
        %v301 = vld [vmem:[%s250 + $0xbc] sm:$0xf]
        %v302 = vld [vmem:[%s250 + $0xc0] sm:$0xf]
        %v303 = vld [vmem:[%s250 + $0xc4] sm:$0xf]
        %v304 = vld [vmem:[%s250 + $0xc8] sm:$0xf]
        %v305 = vld [vmem:[%s250 + $0xcc] sm:$0xf]
        %v306 = vld [vmem:[%s250 + $0xd0] sm:$0xf]
        %v307 = vld [vmem:[%s250 + $0xd4] sm:$0xf]
        %v308 = vld [vmem:[%s250 + $0xd8] sm:$0xf]
        %v309 = vld [vmem:[%s250 + $0xdc] sm:$0xf]
        %v310 = vld [vmem:[%s250 + $0xe0] sm:$0xf]
        %v311 = vld [vmem:[%s250 + $0xe4] sm:$0xf]
        %v312 = vld [vmem:[%s250 + $0xe8] sm:$0xf]
        %v313 = vld [vmem:[%s250 + $0xec] sm:$0xf]
        %v314 = vld [vmem:[%s250 + $0xf0] sm:$0xf]
        %v315 = vld [vmem:[%s250 + $0xf4] sm:$0xf]
        %v316 = vld [vmem:[%s250 + $0xf8] sm:$0xf]
        %v317 = vld [vmem:[%s250 + $0xfc] sm:$0xf]
        %v318 = vld [vmem:[%s1] sm:$0xff]
        %v383 = vunpack.c.l.b16 %v254
        %v384 = vunpack.c.l.b16 %v255
        %v385 = vunpack.c.l.b16 %v256
        %v386 = vunpack.c.l.b16 %v257
        %v387 = vunpack.c.l.b16 %v258
        %v388 = vunpack.c.l.b16 %v259
        %v389 = vunpack.c.l.b16 %v260
        %v390 = vunpack.c.l.b16 %v261
        %v391 = vunpack.c.l.b16 %v262
        %v392 = vunpack.c.l.b16 %v263
        %v393 = vunpack.c.l.b16 %v264
        %v394 = vunpack.c.l.b16 %v265
        %v395 = vunpack.c.l.b16 %v266
        %v396 = vunpack.c.l.b16 %v267
        %v397 = vunpack.c.l.b16 %v268
        %v398 = vunpack.c.l.b16 %v269
        %v399 = vunpack.c.l.b16 %v270
        %v400 = vunpack.c.l.b16 %v271
        %v401 = vunpack.c.l.b16 %v272
        %v402 = vunpack.c.l.b16 %v273
        %v403 = vunpack.c.l.b16 %v274
        %v404 = vunpack.c.l.b16 %v275
        %v405 = vunpack.c.l.b16 %v276
        %v406 = vunpack.c.l.b16 %v277
        %v407 = vunpack.c.l.b16 %v278
        %v408 = vunpack.c.l.b16 %v279
        %v409 = vunpack.c.l.b16 %v280
        %v410 = vunpack.c.l.b16 %v281
        %v411 = vunpack.c.l.b16 %v282
        %v412 = vunpack.c.l.b16 %v283
        %v413 = vunpack.c.l.b16 %v284
        %v414 = vunpack.c.l.b16 %v285
        %v415 = vunpack.c.l.b16 %v286
        %v416 = vunpack.c.l.b16 %v287
        %v417 = vunpack.c.l.b16 %v288
        %v418 = vunpack.c.l.b16 %v289
        %v419 = vunpack.c.l.b16 %v290
        %v420 = vunpack.c.l.b16 %v291
        %v421 = vunpack.c.l.b16 %v292
        %v422 = vunpack.c.l.b16 %v293
        %v423 = vunpack.c.l.b16 %v294
        %v424 = vunpack.c.l.b16 %v295
        %v425 = vunpack.c.l.b16 %v296
        %v426 = vunpack.c.l.b16 %v297
        %v427 = vunpack.c.l.b16 %v298
        %v428 = vunpack.c.l.b16 %v299
        %v429 = vunpack.c.l.b16 %v300
        %v430 = vunpack.c.l.b16 %v301
        %v431 = vunpack.c.l.b16 %v302
        %v432 = vunpack.c.l.b16 %v303
        %v433 = vunpack.c.l.b16 %v304
        %v434 = vunpack.c.l.b16 %v305
        %v435 = vunpack.c.l.b16 %v306
        %v436 = vunpack.c.l.b16 %v307
        %v437 = vunpack.c.l.b16 %v308
        %v438 = vunpack.c.l.b16 %v309
        %v439 = vunpack.c.l.b16 %v310
        %v440 = vunpack.c.l.b16 %v311
        %v441 = vunpack.c.l.b16 %v312
        %v442 = vunpack.c.l.b16 %v313
        %v443 = vunpack.c.l.b16 %v314
        %v444 = vunpack.c.l.b16 %v315
        %v445 = vunpack.c.l.b16 %v316
        %v446 = vunpack.c.l.b16 %v317
        %v447 = vpack.c.b16 %v384, %v383
        %v448 = vpack.c.b16 %v386, %v385
        %v449 = vpack.c.b16 %v388, %v387
        %v450 = vpack.c.b16 %v390, %v389
        %v451 = vpack.c.b16 %v392, %v391
        %v452 = vpack.c.b16 %v394, %v393
        %v453 = vpack.c.b16 %v396, %v395
        %v454 = vpack.c.b16 %v398, %v397
        %v455 = vpack.c.b16 %v400, %v399
        %v456 = vpack.c.b16 %v402, %v401
        %v457 = vpack.c.b16 %v404, %v403
        %v458 = vpack.c.b16 %v406, %v405
        %v459 = vpack.c.b16 %v408, %v407
        %v460 = vpack.c.b16 %v410, %v409
        %v461 = vpack.c.b16 %v412, %v411
        %v462 = vpack.c.b16 %v414, %v413
        %v463 = vpack.c.b16 %v416, %v415
        %v464 = vpack.c.b16 %v418, %v417
        %v465 = vpack.c.b16 %v420, %v419
        %v466 = vpack.c.b16 %v422, %v421
        %v467 = vpack.c.b16 %v424, %v423
        %v468 = vpack.c.b16 %v426, %v425
        %v469 = vpack.c.b16 %v428, %v427
        %v470 = vpack.c.b16 %v430, %v429
        %v471 = vpack.c.b16 %v432, %v431
        %v472 = vpack.c.b16 %v434, %v433
        %v473 = vpack.c.b16 %v436, %v435
        %v474 = vpack.c.b16 %v438, %v437
        %v475 = vpack.c.b16 %v440, %v439
        %v476 = vpack.c.b16 %v442, %v441
        %v477 = vpack.c.b16 %v444, %v443
        %v478 = vpack.c.b16 %v446, %v445
        %v480 = vunpack.c.l.b16 %v318
        %v481 = vunpack.c.h.b16 %v318
        %v482 = vpack.c.b16 %v480, %v480
        %v483 = vpack.c.b16 %v481, %v481
        %vm484 = vcmask 64512
        %v486 = vsel %vm484, %v447, 0
        %v489 = vsel %vm484, %v448, 0
        %v492 = vsel %vm484, %v449, 0
        %v495 = vsel %vm484, %v450, 0
        %v498 = vsel %vm484, %v451, 0
        %v501 = vsel %vm484, %v452, 0
        %v504 = vsel %vm484, %v453, 0
        %v507 = vsel %vm484, %v454, 0
        %v510 = vsel %vm484, %v455, 0
        %v513 = vsel %vm484, %v456, 0
        %v516 = vsel %vm484, %v457, 0
        %v519 = vsel %vm484, %v458, 0
        %v522 = vsel %vm484, %v459, 0
        %v525 = vsel %vm484, %v460, 0
        %v528 = vsel %vm484, %v461, 0
        %v531 = vsel %vm484, %v462, 0
        %v534 = vsel %vm484, %v463, 0
        %v537 = vsel %vm484, %v464, 0
        %v540 = vsel %vm484, %v465, 0
        %v543 = vsel %vm484, %v466, 0
        %v546 = vsel %vm484, %v467, 0
        %v549 = vsel %vm484, %v468, 0
        %v552 = vsel %vm484, %v469, 0
        %v555 = vsel %vm484, %v470, 0
        %v558 = vsel %vm484, %v471, 0
        %v561 = vsel %vm484, %v472, 0
        %v564 = vsel %vm484, %v473, 0
        %v567 = vsel %vm484, %v474, 0
        %v570 = vsel %vm484, %v475, 0
        %v573 = vsel %vm484, %v476, 0
        %v576 = vsel %vm484, %v477, 0
        %v579 = vsel %vm484, %v478, 0
        %vm581 = vcmask 1043456
        %v583 = vsel %vm581, %v482, 0
        %v586 = vsel %vm581, %v483, 0
        %588 = vmatprep.subr.bf16.mxu0 %v586
        %589 = vmatpush1.bf16.msra.mxu0 %v583
        %590 = vmatprep.subr.bf16.mxu0 0
        %591 = vmatpush1.bf16.msra.mxu0 0
        %592 = vmatprep.subr.bf16.mxu0 0
        %593 = vmatpush1.bf16.msra.mxu0 0
        %594 = vmatprep.subr.bf16.mxu0 0
        %595 = vmatpush1.bf16.msra.mxu0 0
        %596 = vmatprep.subr.bf16.mxu0 0
        %597 = vmatpush1.bf16.msra.mxu0 0
        %598 = vmatprep.subr.bf16.mxu0 0
        %599 = vmatpush1.bf16.msra.mxu0 0
        %600 = vmatprep.subr.bf16.mxu0 0
        %601 = vmatpush1.bf16.msra.mxu0 0
        %602 = vmatprep.subr.bf16.mxu0 0
        %603 = vmatpush1.bf16.msra.mxu0 0
        %604 = vmatprep.subr.bf16.mxu0 0
        %605 = vmatpush1.bf16.msra.mxu0 0
        %606 = vmatprep.subr.bf16.mxu0 0
        %607 = vmatpush1.bf16.msra.mxu0 0
        %608 = vmatprep.subr.bf16.mxu0 0
        %609 = vmatpush1.bf16.msra.mxu0 0
        %610 = vmatprep.subr.bf16.mxu0 0
        %611 = vmatpush1.bf16.msra.mxu0 0
        %612 = vmatprep.subr.bf16.mxu0 0
        %613 = vmatpush1.bf16.msra.mxu0 0
        %614 = vmatprep.subr.bf16.mxu0 0
        %615 = vmatpush1.bf16.msra.mxu0 0
        %616 = vmatprep.subr.bf16.mxu0 0
        %617 = vmatpush1.bf16.msra.mxu0 0
        %618 = vmatprep.subr.bf16.mxu0 0
        %619 = vmatpush1.bf16.msra.mxu0 0
        %620 = vmatprep.mubr.bf16.mxu0 0
        %621 = vmatmul.mubr.bf16.gmra.mrb[0].mxu0 %v486
        %v622 = vpop.f32.mrb[0].mxu0
        %v623 = vadd.f32 0.0, %v622
        %v624 = vpop.f32.mrb[0].mxu0
        %v625 = vadd.f32 0.0, %v624
        %v626 = vpop.f32.mrb[0].mxu0
        %v627 = vadd.f32 0.0, %v626
        %v628 = vpop.f32.mrb[0].mxu0
        %v629 = vadd.f32 0.0, %v628
        %630 = vmatprep.mubr.bf16.mxu0 0
        %631 = vmatmul.mubr.bf16.gmra.mrb[0].mxu0 %v489
        %v632 = vpop.f32.mrb[0].mxu0
        %v633 = vadd.f32 0.0, %v632
        %v634 = vpop.f32.mrb[0].mxu0
        %v635 = vadd.f32 0.0, %v634
        %v636 = vpop.f32.mrb[0].mxu0
        %v637 = vadd.f32 0.0, %v636
        %v638 = vpop.f32.mrb[0].mxu0
        %v639 = vadd.f32 0.0, %v638
        %640 = vmatprep.mubr.bf16.mxu0 0
        %641 = vmatmul.mubr.bf16.gmra.mrb[0].mxu0 %v492
        %v642 = vpop.f32.mrb[0].mxu0
        %v643 = vadd.f32 0.0, %v642
        %v644 = vpop.f32.mrb[0].mxu0
        %v645 = vadd.f32 0.0, %v644
        %v646 = vpop.f32.mrb[0].mxu0
        %v647 = vadd.f32 0.0, %v646
        %v648 = vpop.f32.mrb[0].mxu0
        %v649 = vadd.f32 0.0, %v648
        %650 = vmatprep.mubr.bf16.mxu0 0
        %651 = vmatmul.mubr.bf16.gmra.mrb[0].mxu0 %v495
        %v652 = vpop.f32.mrb[0].mxu0
        %v653 = vadd.f32 0.0, %v652
        %v654 = vpop.f32.mrb[0].mxu0
        %v655 = vadd.f32 0.0, %v654
        %v656 = vpop.f32.mrb[0].mxu0
        %v657 = vadd.f32 0.0, %v656
        %v658 = vpop.f32.mrb[0].mxu0
        %v659 = vadd.f32 0.0, %v658
        %660 = vmatprep.mubr.bf16.mxu0 0
        %661 = vmatmul.mubr.bf16.gmra.mrb[0].mxu0 %v498
        %v662 = vpop.f32.mrb[0].mxu0
        %v663 = vadd.f32 0.0, %v662
        %v664 = vpop.f32.mrb[0].mxu0
        %v665 = vadd.f32 0.0, %v664
        %v666 = vpop.f32.mrb[0].mxu0
        %v667 = vadd.f32 0.0, %v666
        %v668 = vpop.f32.mrb[0].mxu0
        %v669 = vadd.f32 0.0, %v668
        %670 = vmatprep.mubr.bf16.mxu0 0
        %671 = vmatmul.mubr.bf16.gmra.mrb[0].mxu0 %v501
        %v672 = vpop.f32.mrb[0].mxu0
        %v673 = vadd.f32 0.0, %v672
        %v674 = vpop.f32.mrb[0].mxu0
        %v675 = vadd.f32 0.0, %v674
        %v676 = vpop.f32.mrb[0].mxu0
        %v677 = vadd.f32 0.0, %v676
        %v678 = vpop.f32.mrb[0].mxu0
        %v679 = vadd.f32 0.0, %v678
        %680 = vmatprep.mubr.bf16.mxu0 0
        %681 = vmatmul.mubr.bf16.gmra.mrb[0].mxu0 %v504
        %v682 = vpop.f32.mrb[0].mxu0
        %v683 = vadd.f32 0.0, %v682
        %v684 = vpop.f32.mrb[0].mxu0
        %v685 = vadd.f32 0.0, %v684
        %v686 = vpop.f32.mrb[0].mxu0
        %v687 = vadd.f32 0.0, %v686
        %v688 = vpop.f32.mrb[0].mxu0
        %v689 = vadd.f32 0.0, %v688
        %690 = vmatprep.mubr.bf16.mxu0 0
        %691 = vmatmul.mubr.bf16.gmra.mrb[0].mxu0 %v507
        %v692 = vpop.f32.mrb[0].mxu0
        %v693 = vadd.f32 0.0, %v692
        %v694 = vpop.f32.mrb[0].mxu0
        %v695 = vadd.f32 0.0, %v694
        %v696 = vpop.f32.mrb[0].mxu0
        %v697 = vadd.f32 0.0, %v696
        %v698 = vpop.f32.mrb[0].mxu0
        %v699 = vadd.f32 0.0, %v698
        %700 = vmatprep.mubr.bf16.mxu0 0
        %701 = vmatmul.mubr.bf16.gmra.mrb[0].mxu0 %v510
        %v702 = vpop.f32.mrb[0].mxu0
        %v703 = vadd.f32 0.0, %v702
        %v704 = vpop.f32.mrb[0].mxu0
        %v705 = vadd.f32 0.0, %v704
        %v706 = vpop.f32.mrb[0].mxu0
        %v707 = vadd.f32 0.0, %v706
        %v708 = vpop.f32.mrb[0].mxu0
        %v709 = vadd.f32 0.0, %v708
        %710 = vmatprep.mubr.bf16.mxu0 0
        %711 = vmatmul.mubr.bf16.gmra.mrb[0].mxu0 %v513
        %v712 = vpop.f32.mrb[0].mxu0
        %v713 = vadd.f32 0.0, %v712
        %v714 = vpop.f32.mrb[0].mxu0
        %v715 = vadd.f32 0.0, %v714
        %v716 = vpop.f32.mrb[0].mxu0
        %v717 = vadd.f32 0.0, %v716
        %v718 = vpop.f32.mrb[0].mxu0
        %v719 = vadd.f32 0.0, %v718
        %720 = vmatprep.mubr.bf16.mxu0 0
        %721 = vmatmul.mubr.bf16.gmra.mrb[0].mxu0 %v516
        %v722 = vpop.f32.mrb[0].mxu0
        %v723 = vadd.f32 0.0, %v722
        %v724 = vpop.f32.mrb[0].mxu0
        %v725 = vadd.f32 0.0, %v724
        %v726 = vpop.f32.mrb[0].mxu0
        %v727 = vadd.f32 0.0, %v726
        %v728 = vpop.f32.mrb[0].mxu0
        %v729 = vadd.f32 0.0, %v728
        %730 = vmatprep.mubr.bf16.mxu0 0
        %731 = vmatmul.mubr.bf16.gmra.mrb[0].mxu0 %v519
        %v732 = vpop.f32.mrb[0].mxu0
        %v733 = vadd.f32 0.0, %v732
        %v734 = vpop.f32.mrb[0].mxu0
        %v735 = vadd.f32 0.0, %v734
        %v736 = vpop.f32.mrb[0].mxu0
        %v737 = vadd.f32 0.0, %v736
        %v738 = vpop.f32.mrb[0].mxu0
        %v739 = vadd.f32 0.0, %v738
        %740 = vmatprep.mubr.bf16.mxu0 0
        %741 = vmatmul.mubr.bf16.gmra.mrb[0].mxu0 %v522
        %v742 = vpop.f32.mrb[0].mxu0
        %v743 = vadd.f32 0.0, %v742
        %v744 = vpop.f32.mrb[0].mxu0
        %v745 = vadd.f32 0.0, %v744
        %v746 = vpop.f32.mrb[0].mxu0
        %v747 = vadd.f32 0.0, %v746
        %v748 = vpop.f32.mrb[0].mxu0
        %v749 = vadd.f32 0.0, %v748
        %750 = vmatprep.mubr.bf16.mxu0 0
        %751 = vmatmul.mubr.bf16.gmra.mrb[0].mxu0 %v525
        %v752 = vpop.f32.mrb[0].mxu0
        %v753 = vadd.f32 0.0, %v752
        %v754 = vpop.f32.mrb[0].mxu0
        %v755 = vadd.f32 0.0, %v754
        %v756 = vpop.f32.mrb[0].mxu0
        %v757 = vadd.f32 0.0, %v756
        %v758 = vpop.f32.mrb[0].mxu0
        %v759 = vadd.f32 0.0, %v758
        %760 = vmatprep.mubr.bf16.mxu0 0
        %761 = vmatmul.mubr.bf16.gmra.mrb[0].mxu0 %v528
        %v762 = vpop.f32.mrb[0].mxu0
        %v763 = vadd.f32 0.0, %v762
        %v764 = vpop.f32.mrb[0].mxu0
        %v765 = vadd.f32 0.0, %v764
        %v766 = vpop.f32.mrb[0].mxu0
        %v767 = vadd.f32 0.0, %v766
        %v768 = vpop.f32.mrb[0].mxu0
        %v769 = vadd.f32 0.0, %v768
        %770 = vmatprep.mubr.bf16.mxu0 0
        %771 = vmatmul.mubr.bf16.gmra.mrb[0].mxu0 %v531
        %v772 = vpop.f32.mrb[0].mxu0
        %v773 = vadd.f32 0.0, %v772
        %v774 = vpop.f32.mrb[0].mxu0
        %v775 = vadd.f32 0.0, %v774
        %v776 = vpop.f32.mrb[0].mxu0
        %v777 = vadd.f32 0.0, %v776
        %v778 = vpop.f32.mrb[0].mxu0
        %v779 = vadd.f32 0.0, %v778
        %780 = vmatprep.mubr.bf16.mxu0 0
        %781 = vmatmul.mubr.bf16.gmra.mrb[0].mxu0 %v534
        %v782 = vpop.f32.mrb[0].mxu0
        %v783 = vadd.f32 0.0, %v782
        %v784 = vpop.f32.mrb[0].mxu0
        %v785 = vadd.f32 0.0, %v784
        %v786 = vpop.f32.mrb[0].mxu0
        %v787 = vadd.f32 0.0, %v786
        %v788 = vpop.f32.mrb[0].mxu0
        %v789 = vadd.f32 0.0, %v788
        %790 = vmatprep.mubr.bf16.mxu0 0
        %791 = vmatmul.mubr.bf16.gmra.mrb[0].mxu0 %v537
        %v792 = vpop.f32.mrb[0].mxu0
        %v793 = vadd.f32 0.0, %v792
        %v794 = vpop.f32.mrb[0].mxu0
        %v795 = vadd.f32 0.0, %v794
        %v796 = vpop.f32.mrb[0].mxu0
        %v797 = vadd.f32 0.0, %v796
        %v798 = vpop.f32.mrb[0].mxu0
        %v799 = vadd.f32 0.0, %v798
        %800 = vmatprep.mubr.bf16.mxu0 0
        %801 = vmatmul.mubr.bf16.gmra.mrb[0].mxu0 %v540
        %v802 = vpop.f32.mrb[0].mxu0
        %v803 = vadd.f32 0.0, %v802
        %v804 = vpop.f32.mrb[0].mxu0
        %v805 = vadd.f32 0.0, %v804
        %v806 = vpop.f32.mrb[0].mxu0
        %v807 = vadd.f32 0.0, %v806
        %v808 = vpop.f32.mrb[0].mxu0
        %v809 = vadd.f32 0.0, %v808
        %810 = vmatprep.mubr.bf16.mxu0 0
        %811 = vmatmul.mubr.bf16.gmra.mrb[0].mxu0 %v543
        %v812 = vpop.f32.mrb[0].mxu0
        %v813 = vadd.f32 0.0, %v812
        %v814 = vpop.f32.mrb[0].mxu0
        %v815 = vadd.f32 0.0, %v814
        %v816 = vpop.f32.mrb[0].mxu0
        %v817 = vadd.f32 0.0, %v816
        %v818 = vpop.f32.mrb[0].mxu0
        %v819 = vadd.f32 0.0, %v818
        %820 = vmatprep.mubr.bf16.mxu0 0
        %821 = vmatmul.mubr.bf16.gmra.mrb[0].mxu0 %v546
        %v822 = vpop.f32.mrb[0].mxu0
        %v823 = vadd.f32 0.0, %v822
        %v824 = vpop.f32.mrb[0].mxu0
        %v825 = vadd.f32 0.0, %v824
        %v826 = vpop.f32.mrb[0].mxu0
        %v827 = vadd.f32 0.0, %v826
        %v828 = vpop.f32.mrb[0].mxu0
        %v829 = vadd.f32 0.0, %v828
        %830 = vmatprep.mubr.bf16.mxu0 0
        %831 = vmatmul.mubr.bf16.gmra.mrb[0].mxu0 %v549
        %v832 = vpop.f32.mrb[0].mxu0
        %v833 = vadd.f32 0.0, %v832
        %v834 = vpop.f32.mrb[0].mxu0
        %v835 = vadd.f32 0.0, %v834
        %v836 = vpop.f32.mrb[0].mxu0
        %v837 = vadd.f32 0.0, %v836
        %v838 = vpop.f32.mrb[0].mxu0
        %v839 = vadd.f32 0.0, %v838
        %840 = vmatprep.mubr.bf16.mxu0 0
        %841 = vmatmul.mubr.bf16.gmra.mrb[0].mxu0 %v552
        %v842 = vpop.f32.mrb[0].mxu0
        %v843 = vadd.f32 0.0, %v842
        %v844 = vpop.f32.mrb[0].mxu0
        %v845 = vadd.f32 0.0, %v844
        %v846 = vpop.f32.mrb[0].mxu0
        %v847 = vadd.f32 0.0, %v846
        %v848 = vpop.f32.mrb[0].mxu0
        %v849 = vadd.f32 0.0, %v848
        %850 = vmatprep.mubr.bf16.mxu0 0
        %851 = vmatmul.mubr.bf16.gmra.mrb[0].mxu0 %v555
        %v852 = vpop.f32.mrb[0].mxu0
        %v853 = vadd.f32 0.0, %v852
        %v854 = vpop.f32.mrb[0].mxu0
        %v855 = vadd.f32 0.0, %v854
        %v856 = vpop.f32.mrb[0].mxu0
        %v857 = vadd.f32 0.0, %v856
        %v858 = vpop.f32.mrb[0].mxu0
        %v859 = vadd.f32 0.0, %v858
        %860 = vmatprep.mubr.bf16.mxu0 0
        %861 = vmatmul.mubr.bf16.gmra.mrb[0].mxu0 %v558
        %v862 = vpop.f32.mrb[0].mxu0
        %v863 = vadd.f32 0.0, %v862
        %v864 = vpop.f32.mrb[0].mxu0
        %v865 = vadd.f32 0.0, %v864
        %v866 = vpop.f32.mrb[0].mxu0
        %v867 = vadd.f32 0.0, %v866
        %v868 = vpop.f32.mrb[0].mxu0
        %v869 = vadd.f32 0.0, %v868
        %870 = vmatprep.mubr.bf16.mxu0 0
        %871 = vmatmul.mubr.bf16.gmra.mrb[0].mxu0 %v561
        %v872 = vpop.f32.mrb[0].mxu0
        %v873 = vadd.f32 0.0, %v872
        %v874 = vpop.f32.mrb[0].mxu0
        %v875 = vadd.f32 0.0, %v874
        %v876 = vpop.f32.mrb[0].mxu0
        %v877 = vadd.f32 0.0, %v876
        %v878 = vpop.f32.mrb[0].mxu0
        %v879 = vadd.f32 0.0, %v878
        %880 = vmatprep.mubr.bf16.mxu0 0
        %881 = vmatmul.mubr.bf16.gmra.mrb[0].mxu0 %v564
        %v882 = vpop.f32.mrb[0].mxu0
        %v883 = vadd.f32 0.0, %v882
        %v884 = vpop.f32.mrb[0].mxu0
        %v885 = vadd.f32 0.0, %v884
        %v886 = vpop.f32.mrb[0].mxu0
        %v887 = vadd.f32 0.0, %v886
        %v888 = vpop.f32.mrb[0].mxu0
        %v889 = vadd.f32 0.0, %v888
        %890 = vmatprep.mubr.bf16.mxu0 0
        %891 = vmatmul.mubr.bf16.gmra.mrb[0].mxu0 %v567
        %v892 = vpop.f32.mrb[0].mxu0
        %v893 = vadd.f32 0.0, %v892
        %v894 = vpop.f32.mrb[0].mxu0
        %v895 = vadd.f32 0.0, %v894
        %v896 = vpop.f32.mrb[0].mxu0
        %v897 = vadd.f32 0.0, %v896
        %v898 = vpop.f32.mrb[0].mxu0
        %v899 = vadd.f32 0.0, %v898
        %900 = vmatprep.mubr.bf16.mxu0 0
        %901 = vmatmul.mubr.bf16.gmra.mrb[0].mxu0 %v570
        %v902 = vpop.f32.mrb[0].mxu0
        %v903 = vadd.f32 0.0, %v902
        %v904 = vpop.f32.mrb[0].mxu0
        %v905 = vadd.f32 0.0, %v904
        %v906 = vpop.f32.mrb[0].mxu0
        %v907 = vadd.f32 0.0, %v906
        %v908 = vpop.f32.mrb[0].mxu0
        %v909 = vadd.f32 0.0, %v908
        %910 = vmatprep.mubr.bf16.mxu0 0
        %911 = vmatmul.mubr.bf16.gmra.mrb[0].mxu0 %v573
        %v912 = vpop.f32.mrb[0].mxu0
        %v913 = vadd.f32 0.0, %v912
        %v914 = vpop.f32.mrb[0].mxu0
        %v915 = vadd.f32 0.0, %v914
        %v916 = vpop.f32.mrb[0].mxu0
        %v917 = vadd.f32 0.0, %v916
        %v918 = vpop.f32.mrb[0].mxu0
        %v919 = vadd.f32 0.0, %v918
        %920 = vmatprep.mubr.bf16.mxu0 0
        %921 = vmatmul.mubr.bf16.gmra.mrb[0].mxu0 %v576
        %v922 = vpop.f32.mrb[0].mxu0
        %v923 = vadd.f32 0.0, %v922
        %v924 = vpop.f32.mrb[0].mxu0
        %v925 = vadd.f32 0.0, %v924
        %v926 = vpop.f32.mrb[0].mxu0
        %v927 = vadd.f32 0.0, %v926
        %v928 = vpop.f32.mrb[0].mxu0
        %v929 = vadd.f32 0.0, %v928
        %930 = vmatprep.mubr.bf16.mxu0 0
        %931 = vmatmul.mubr.bf16.gmra.mrb[0].mxu0 %v579
        %v932 = vpop.f32.mrb[0].mxu0
        %v933 = vadd.f32 0.0, %v932
        %v934 = vpop.f32.mrb[0].mxu0
        %v935 = vadd.f32 0.0, %v934
        %v936 = vpop.f32.mrb[0].mxu0
        %v937 = vadd.f32 0.0, %v936
        %v938 = vpop.f32.mrb[0].mxu0
        %v939 = vadd.f32 0.0, %v938
        %940 = vdwg.mxu0
        %v941 = vld [vmem:[%s3] sm:$0x1]
        %v942 = vlaneseq
        %v943 = vshrl.u32 %v942, 7
        %v944 = vsub.s32 0, %v943
        %v945 = vrot.slane %v941, %v944
        %v946 = vadd.f32 %v623, %v945
        %v947 = vadd.f32 %v627, %v945
        %v948 = vadd.f32 %v633, %v945
        %v949 = vadd.f32 %v637, %v945
        %v950 = vadd.f32 %v643, %v945
        %v951 = vadd.f32 %v647, %v945
        %v952 = vadd.f32 %v653, %v945
        %v953 = vadd.f32 %v657, %v945
        %v954 = vadd.f32 %v663, %v945
        %v955 = vadd.f32 %v667, %v945
        %v956 = vadd.f32 %v673, %v945
        %v957 = vadd.f32 %v677, %v945
        %v958 = vadd.f32 %v683, %v945
        %v959 = vadd.f32 %v687, %v945
        %v960 = vadd.f32 %v693, %v945
        %v961 = vadd.f32 %v697, %v945
        %v962 = vadd.f32 %v703, %v945
        %v963 = vadd.f32 %v707, %v945
        %v964 = vadd.f32 %v713, %v945
        %v965 = vadd.f32 %v717, %v945
        %v966 = vadd.f32 %v723, %v945
        %v967 = vadd.f32 %v727, %v945
        %v968 = vadd.f32 %v733, %v945
        %v969 = vadd.f32 %v737, %v945
        %v970 = vadd.f32 %v743, %v945
        %v971 = vadd.f32 %v747, %v945
        %v972 = vadd.f32 %v753, %v945
        %v973 = vadd.f32 %v757, %v945
        %v974 = vadd.f32 %v763, %v945
        %v975 = vadd.f32 %v767, %v945
        %v976 = vadd.f32 %v773, %v945
        %v977 = vadd.f32 %v777, %v945
        %v978 = vadd.f32 %v783, %v945
        %v979 = vadd.f32 %v787, %v945
        %v980 = vadd.f32 %v793, %v945
        %v981 = vadd.f32 %v797, %v945
        %v982 = vadd.f32 %v803, %v945
        %v983 = vadd.f32 %v807, %v945
        %v984 = vadd.f32 %v813, %v945
        %v985 = vadd.f32 %v817, %v945
        %v986 = vadd.f32 %v823, %v945
        %v987 = vadd.f32 %v827, %v945
        %v988 = vadd.f32 %v833, %v945
        %v989 = vadd.f32 %v837, %v945
        %v990 = vadd.f32 %v843, %v945
        %v991 = vadd.f32 %v847, %v945
        %v992 = vadd.f32 %v853, %v945
        %v993 = vadd.f32 %v857, %v945
        %v994 = vadd.f32 %v863, %v945
        %v995 = vadd.f32 %v867, %v945
        %v996 = vadd.f32 %v873, %v945
        %v997 = vadd.f32 %v877, %v945
        %v998 = vadd.f32 %v883, %v945
        %v999 = vadd.f32 %v887, %v945
        %v1000 = vadd.f32 %v893, %v945
        %v1001 = vadd.f32 %v897, %v945
        %v1002 = vadd.f32 %v903, %v945
        %v1003 = vadd.f32 %v907, %v945
        %v1004 = vadd.f32 %v913, %v945
        %v1005 = vadd.f32 %v917, %v945
        %v1006 = vadd.f32 %v923, %v945
        %v1007 = vadd.f32 %v927, %v945
        %v1008 = vadd.f32 %v933, %v945
        %v1009 = vadd.f32 %v937, %v945
        %v1010 = vmax.f32 %v946, 0.0
        %v1011 = vmax.f32 %v947, 0.0
        %v1012 = vmax.f32 %v948, 0.0
        %v1013 = vmax.f32 %v949, 0.0
        %v1014 = vmax.f32 %v950, 0.0
        %v1015 = vmax.f32 %v951, 0.0
        %v1016 = vmax.f32 %v952, 0.0
        %v1017 = vmax.f32 %v953, 0.0
        %v1018 = vmax.f32 %v954, 0.0
        %v1019 = vmax.f32 %v955, 0.0
        %v1020 = vmax.f32 %v956, 0.0
        %v1021 = vmax.f32 %v957, 0.0
        %v1022 = vmax.f32 %v958, 0.0
        %v1023 = vmax.f32 %v959, 0.0
        %v1024 = vmax.f32 %v960, 0.0
        %v1025 = vmax.f32 %v961, 0.0
        %v1026 = vmax.f32 %v962, 0.0
        %v1027 = vmax.f32 %v963, 0.0
        %v1028 = vmax.f32 %v964, 0.0
        %v1029 = vmax.f32 %v965, 0.0
        %v1030 = vmax.f32 %v966, 0.0
        %v1031 = vmax.f32 %v967, 0.0
        %v1032 = vmax.f32 %v968, 0.0
        %v1033 = vmax.f32 %v969, 0.0
        %v1034 = vmax.f32 %v970, 0.0
        %v1035 = vmax.f32 %v971, 0.0
        %v1036 = vmax.f32 %v972, 0.0
        %v1037 = vmax.f32 %v973, 0.0
        %v1038 = vmax.f32 %v974, 0.0
        %v1039 = vmax.f32 %v975, 0.0
        %v1040 = vmax.f32 %v976, 0.0
        %v1041 = vmax.f32 %v977, 0.0
        %v1042 = vmax.f32 %v978, 0.0
        %v1043 = vmax.f32 %v979, 0.0
        %v1044 = vmax.f32 %v980, 0.0
        %v1045 = vmax.f32 %v981, 0.0
        %v1046 = vmax.f32 %v982, 0.0
        %v1047 = vmax.f32 %v983, 0.0
        %v1048 = vmax.f32 %v984, 0.0
        %v1049 = vmax.f32 %v985, 0.0
        %v1050 = vmax.f32 %v986, 0.0
        %v1051 = vmax.f32 %v987, 0.0
        %v1052 = vmax.f32 %v988, 0.0
        %v1053 = vmax.f32 %v989, 0.0
        %v1054 = vmax.f32 %v990, 0.0
        %v1055 = vmax.f32 %v991, 0.0
        %v1056 = vmax.f32 %v992, 0.0
        %v1057 = vmax.f32 %v993, 0.0
        %v1058 = vmax.f32 %v994, 0.0
        %v1059 = vmax.f32 %v995, 0.0
        %v1060 = vmax.f32 %v996, 0.0
        %v1061 = vmax.f32 %v997, 0.0
        %v1062 = vmax.f32 %v998, 0.0
        %v1063 = vmax.f32 %v999, 0.0
        %v1064 = vmax.f32 %v1000, 0.0
        %v1065 = vmax.f32 %v1001, 0.0
        %v1066 = vmax.f32 %v1002, 0.0
        %v1067 = vmax.f32 %v1003, 0.0
        %v1068 = vmax.f32 %v1004, 0.0
        %v1069 = vmax.f32 %v1005, 0.0
        %v1070 = vmax.f32 %v1006, 0.0
        %v1071 = vmax.f32 %v1007, 0.0
        %v1072 = vmax.f32 %v1008, 0.0
        %v1073 = vmax.f32 %v1009, 0.0
        %v1074 = vpack.c.bf16 %v1011, %v1010
        %v1075 = vpack.c.bf16 %v1013, %v1012
        %v1076 = vpack.c.bf16 %v1015, %v1014
        %v1077 = vpack.c.bf16 %v1017, %v1016
        %v1078 = vpack.c.bf16 %v1019, %v1018
        %v1079 = vpack.c.bf16 %v1021, %v1020
        %v1080 = vpack.c.bf16 %v1023, %v1022
        %v1081 = vpack.c.bf16 %v1025, %v1024
        %v1082 = vpack.c.bf16 %v1027, %v1026
        %v1083 = vpack.c.bf16 %v1029, %v1028
        %v1084 = vpack.c.bf16 %v1031, %v1030
        %v1085 = vpack.c.bf16 %v1033, %v1032
        %v1086 = vpack.c.bf16 %v1035, %v1034
        %v1087 = vpack.c.bf16 %v1037, %v1036
        %v1088 = vpack.c.bf16 %v1039, %v1038
        %v1089 = vpack.c.bf16 %v1041, %v1040
        %v1090 = vpack.c.bf16 %v1043, %v1042
        %v1091 = vpack.c.bf16 %v1045, %v1044
        %v1092 = vpack.c.bf16 %v1047, %v1046
        %v1093 = vpack.c.bf16 %v1049, %v1048
        %v1094 = vpack.c.bf16 %v1051, %v1050
        %v1095 = vpack.c.bf16 %v1053, %v1052
        %v1096 = vpack.c.bf16 %v1055, %v1054
        %v1097 = vpack.c.bf16 %v1057, %v1056
        %v1098 = vpack.c.bf16 %v1059, %v1058
        %v1099 = vpack.c.bf16 %v1061, %v1060
        %v1100 = vpack.c.bf16 %v1063, %v1062
        %v1101 = vpack.c.bf16 %v1065, %v1064
        %v1102 = vpack.c.bf16 %v1067, %v1066
        %v1103 = vpack.c.bf16 %v1069, %v1068
        %v1104 = vpack.c.bf16 %v1071, %v1070
        %v1105 = vpack.c.bf16 %v1073, %v1072
        %v1106 = vld [vmem:[%s2] sm:$0xf]
        %v1107 = vld [vmem:[%s2 + $0x4] sm:$0xf]
        %v1108 = vld [vmem:[%s2 + $0x8] sm:$0xf]
        %v1109 = vld [vmem:[%s2 + $0xc] sm:$0xf]
        %v1110 = vld [vmem:[%s2 + $0x10] sm:$0xf]
        %v1111 = vld [vmem:[%s2 + $0x14] sm:$0xf]
        %v1112 = vld [vmem:[%s2 + $0x18] sm:$0xf]
        %v1113 = vld [vmem:[%s2 + $0x1c] sm:$0xf]
        %v1114 = vld [vmem:[%s2 + $0x20] sm:$0xf]
        %v1115 = vld [vmem:[%s2 + $0x24] sm:$0xf]
        %v1116 = vld [vmem:[%s2 + $0x28] sm:$0xf]
        %v1117 = vld [vmem:[%s2 + $0x2c] sm:$0xf]
        %v1118 = vld [vmem:[%s2 + $0x30] sm:$0xf]
        %v1119 = vld [vmem:[%s2 + $0x34] sm:$0xf]
        %v1120 = vld [vmem:[%s2 + $0x38] sm:$0xf]
        %v1121 = vld [vmem:[%s2 + $0x3c] sm:$0xf]
        %v1122 = vld [vmem:[%s3 + $0x1] sm:$0x1]
        %v1123 = vlaneseq
        %v1124 = vshrl.u32 %v1123, 7
        %v1125 = vsub.s32 0, %v1124
        %v1126 = vrot.slane %v1122, %v1125
        %v1143 = vunpack.c.l.b16 %v1106
        %v1144 = vunpack.c.l.b16 %v1107
        %v1145 = vunpack.c.l.b16 %v1108
        %v1146 = vunpack.c.l.b16 %v1109
        %v1147 = vunpack.c.l.b16 %v1110
        %v1148 = vunpack.c.l.b16 %v1111
        %v1149 = vunpack.c.l.b16 %v1112
        %v1150 = vunpack.c.l.b16 %v1113
        %v1151 = vunpack.c.l.b16 %v1114
        %v1152 = vunpack.c.l.b16 %v1115
        %v1153 = vunpack.c.l.b16 %v1116
        %v1154 = vunpack.c.l.b16 %v1117
        %v1155 = vunpack.c.l.b16 %v1118
        %v1156 = vunpack.c.l.b16 %v1119
        %v1157 = vunpack.c.l.b16 %v1120
        %v1158 = vunpack.c.l.b16 %v1121
        %v1159 = vpack.c.b16 %v1144, %v1143
        %v1160 = vpack.c.b16 %v1146, %v1145
        %v1161 = vpack.c.b16 %v1148, %v1147
        %v1162 = vpack.c.b16 %v1150, %v1149
        %v1163 = vpack.c.b16 %v1152, %v1151
        %v1164 = vpack.c.b16 %v1154, %v1153
        %v1165 = vpack.c.b16 %v1156, %v1155
        %v1166 = vpack.c.b16 %v1158, %v1157
        %1175 = vmatprep.subr.bf16.mxu0 0
        %1176 = vmatpush1.bf16.msra.mxu0 %v1159
        %1177 = vmatprep.subr.bf16.mxu0 0
        %1178 = vmatpush1.bf16.msra.mxu0 %v1160
        %1179 = vmatprep.subr.bf16.mxu0 0
        %1180 = vmatpush1.bf16.msra.mxu0 %v1161
        %1181 = vmatprep.subr.bf16.mxu0 0
        %1182 = vmatpush1.bf16.msra.mxu0 %v1162
        %1183 = vmatprep.subr.bf16.mxu0 0
        %1184 = vmatpush1.bf16.msra.mxu0 %v1163
        %1185 = vmatprep.subr.bf16.mxu0 0
        %1186 = vmatpush1.bf16.msra.mxu0 %v1164
        %1187 = vmatprep.subr.bf16.mxu0 0
        %1188 = vmatpush1.bf16.msra.mxu0 %v1165
        %1189 = vmatprep.subr.bf16.mxu0 0
        %1190 = vmatpush1.bf16.msra.mxu0 %v1166
        %1191 = vmatprep.subr.bf16.mxu0 0
        %1192 = vmatpush1.bf16.msra.mxu0 0
        %1193 = vmatprep.subr.bf16.mxu0 0
        %1194 = vmatpush1.bf16.msra.mxu0 0
        %1195 = vmatprep.subr.bf16.mxu0 0
        %1196 = vmatpush1.bf16.msra.mxu0 0
        %1197 = vmatprep.subr.bf16.mxu0 0
        %1198 = vmatpush1.bf16.msra.mxu0 0
        %1199 = vmatprep.subr.bf16.mxu0 0
        %1200 = vmatpush1.bf16.msra.mxu0 0
        %1201 = vmatprep.subr.bf16.mxu0 0
        %1202 = vmatpush1.bf16.msra.mxu0 0
        %1203 = vmatprep.subr.bf16.mxu0 0
        %1204 = vmatpush1.bf16.msra.mxu0 0
        %1205 = vmatprep.subr.bf16.mxu0 0
        %1206 = vmatpush1.bf16.msra.mxu0 0
        %1207 = vmatprep.mubr.bf16.mxu0 0
        %1208 = vmatmul.mubr.bf16.gmra.mrb[0].mxu0 %v1074
        %v1209 = vpop.f32.mrb[0].mxu0
        %v1210 = vadd.f32 %v1126, %v1209
        %v1211 = vpop.f32.mrb[0].mxu0
        %v1212 = vpop.f32.mrb[0].mxu0
        %v1213 = vadd.f32 %v1126, %v1212
        %v1214 = vpop.f32.mrb[0].mxu0
        %1215 = vmatprep.mubr.bf16.mxu0 0
        %1216 = vmatmul.mubr.bf16.gmra.mrb[0].mxu0 %v1075
        %v1217 = vpop.f32.mrb[0].mxu0
        %v1218 = vadd.f32 %v1126, %v1217
        %v1219 = vpop.f32.mrb[0].mxu0
        %v1220 = vpop.f32.mrb[0].mxu0
        %v1221 = vadd.f32 %v1126, %v1220
        %v1222 = vpop.f32.mrb[0].mxu0
        %1223 = vmatprep.mubr.bf16.mxu0 0
        %1224 = vmatmul.mubr.bf16.gmra.mrb[0].mxu0 %v1076
        %v1225 = vpop.f32.mrb[0].mxu0
        %v1226 = vadd.f32 %v1126, %v1225
        %v1227 = vpop.f32.mrb[0].mxu0
        %v1228 = vpop.f32.mrb[0].mxu0
        %v1229 = vadd.f32 %v1126, %v1228
        %v1230 = vpop.f32.mrb[0].mxu0
        %1231 = vmatprep.mubr.bf16.mxu0 0
        %1232 = vmatmul.mubr.bf16.gmra.mrb[0].mxu0 %v1077
        %v1233 = vpop.f32.mrb[0].mxu0
        %v1234 = vadd.f32 %v1126, %v1233
        %v1235 = vpop.f32.mrb[0].mxu0
        %v1236 = vpop.f32.mrb[0].mxu0
        %v1237 = vadd.f32 %v1126, %v1236
        %v1238 = vpop.f32.mrb[0].mxu0
        %1239 = vmatprep.mubr.bf16.mxu0 0
        %1240 = vmatmul.mubr.bf16.gmra.mrb[0].mxu0 %v1078
        %v1241 = vpop.f32.mrb[0].mxu0
        %v1242 = vadd.f32 %v1126, %v1241
        %v1243 = vpop.f32.mrb[0].mxu0
        %v1244 = vpop.f32.mrb[0].mxu0
        %v1245 = vadd.f32 %v1126, %v1244
        %v1246 = vpop.f32.mrb[0].mxu0
        %1247 = vmatprep.mubr.bf16.mxu0 0
        %1248 = vmatmul.mubr.bf16.gmra.mrb[0].mxu0 %v1079
        %v1249 = vpop.f32.mrb[0].mxu0
        %v1250 = vadd.f32 %v1126, %v1249
        %v1251 = vpop.f32.mrb[0].mxu0
        %v1252 = vpop.f32.mrb[0].mxu0
        %v1253 = vadd.f32 %v1126, %v1252
        %v1254 = vpop.f32.mrb[0].mxu0
        %1255 = vmatprep.mubr.bf16.mxu0 0
        %1256 = vmatmul.mubr.bf16.gmra.mrb[0].mxu0 %v1080
        %v1257 = vpop.f32.mrb[0].mxu0
        %v1258 = vadd.f32 %v1126, %v1257
        %v1259 = vpop.f32.mrb[0].mxu0
        %v1260 = vpop.f32.mrb[0].mxu0
        %v1261 = vadd.f32 %v1126, %v1260
        %v1262 = vpop.f32.mrb[0].mxu0
        %1263 = vmatprep.mubr.bf16.mxu0 0
        %1264 = vmatmul.mubr.bf16.gmra.mrb[0].mxu0 %v1081
        %v1265 = vpop.f32.mrb[0].mxu0
        %v1266 = vadd.f32 %v1126, %v1265
        %v1267 = vpop.f32.mrb[0].mxu0
        %v1268 = vpop.f32.mrb[0].mxu0
        %v1269 = vadd.f32 %v1126, %v1268
        %v1270 = vpop.f32.mrb[0].mxu0
        %1271 = vmatprep.mubr.bf16.mxu0 0
        %1272 = vmatmul.mubr.bf16.gmra.mrb[0].mxu0 %v1082
        %v1273 = vpop.f32.mrb[0].mxu0
        %v1274 = vadd.f32 %v1126, %v1273
        %v1275 = vpop.f32.mrb[0].mxu0
        %v1276 = vpop.f32.mrb[0].mxu0
        %v1277 = vadd.f32 %v1126, %v1276
        %v1278 = vpop.f32.mrb[0].mxu0
        %1279 = vmatprep.mubr.bf16.mxu0 0
        %1280 = vmatmul.mubr.bf16.gmra.mrb[0].mxu0 %v1083
        %v1281 = vpop.f32.mrb[0].mxu0
        %v1282 = vadd.f32 %v1126, %v1281
        %v1283 = vpop.f32.mrb[0].mxu0
        %v1284 = vpop.f32.mrb[0].mxu0
        %v1285 = vadd.f32 %v1126, %v1284
        %v1286 = vpop.f32.mrb[0].mxu0
        %1287 = vmatprep.mubr.bf16.mxu0 0
        %1288 = vmatmul.mubr.bf16.gmra.mrb[0].mxu0 %v1084
        %v1289 = vpop.f32.mrb[0].mxu0
        %v1290 = vadd.f32 %v1126, %v1289
        %v1291 = vpop.f32.mrb[0].mxu0
        %v1292 = vpop.f32.mrb[0].mxu0
        %v1293 = vadd.f32 %v1126, %v1292
        %v1294 = vpop.f32.mrb[0].mxu0
        %1295 = vmatprep.mubr.bf16.mxu0 0
        %1296 = vmatmul.mubr.bf16.gmra.mrb[0].mxu0 %v1085
        %v1297 = vpop.f32.mrb[0].mxu0
        %v1298 = vadd.f32 %v1126, %v1297
        %v1299 = vpop.f32.mrb[0].mxu0
        %v1300 = vpop.f32.mrb[0].mxu0
        %v1301 = vadd.f32 %v1126, %v1300
        %v1302 = vpop.f32.mrb[0].mxu0
        %1303 = vmatprep.mubr.bf16.mxu0 0
        %1304 = vmatmul.mubr.bf16.gmra.mrb[0].mxu0 %v1086
        %v1305 = vpop.f32.mrb[0].mxu0
        %v1306 = vadd.f32 %v1126, %v1305
        %v1307 = vpop.f32.mrb[0].mxu0
        %v1308 = vpop.f32.mrb[0].mxu0
        %v1309 = vadd.f32 %v1126, %v1308
        %v1310 = vpop.f32.mrb[0].mxu0
        %1311 = vmatprep.mubr.bf16.mxu0 0
        %1312 = vmatmul.mubr.bf16.gmra.mrb[0].mxu0 %v1087
        %v1313 = vpop.f32.mrb[0].mxu0
        %v1314 = vadd.f32 %v1126, %v1313
        %v1315 = vpop.f32.mrb[0].mxu0
        %v1316 = vpop.f32.mrb[0].mxu0
        %v1317 = vadd.f32 %v1126, %v1316
        %v1318 = vpop.f32.mrb[0].mxu0
        %1319 = vmatprep.mubr.bf16.mxu0 0
        %1320 = vmatmul.mubr.bf16.gmra.mrb[0].mxu0 %v1088
        %v1321 = vpop.f32.mrb[0].mxu0
        %v1322 = vadd.f32 %v1126, %v1321
        %v1323 = vpop.f32.mrb[0].mxu0
        %v1324 = vpop.f32.mrb[0].mxu0
        %v1325 = vadd.f32 %v1126, %v1324
        %v1326 = vpop.f32.mrb[0].mxu0
        %1327 = vmatprep.mubr.bf16.mxu0 0
        %1328 = vmatmul.mubr.bf16.gmra.mrb[0].mxu0 %v1089
        %v1329 = vpop.f32.mrb[0].mxu0
        %v1330 = vadd.f32 %v1126, %v1329
        %v1331 = vpop.f32.mrb[0].mxu0
        %v1332 = vpop.f32.mrb[0].mxu0
        %v1333 = vadd.f32 %v1126, %v1332
        %v1334 = vpop.f32.mrb[0].mxu0
        %1335 = vmatprep.mubr.bf16.mxu0 0
        %1336 = vmatmul.mubr.bf16.gmra.mrb[0].mxu0 %v1090
        %v1337 = vpop.f32.mrb[0].mxu0
        %v1338 = vadd.f32 %v1126, %v1337
        %v1339 = vpop.f32.mrb[0].mxu0
        %v1340 = vpop.f32.mrb[0].mxu0
        %v1341 = vadd.f32 %v1126, %v1340
        %v1342 = vpop.f32.mrb[0].mxu0
        %1343 = vmatprep.mubr.bf16.mxu0 0
        %1344 = vmatmul.mubr.bf16.gmra.mrb[0].mxu0 %v1091
        %v1345 = vpop.f32.mrb[0].mxu0
        %v1346 = vadd.f32 %v1126, %v1345
        %v1347 = vpop.f32.mrb[0].mxu0
        %v1348 = vpop.f32.mrb[0].mxu0
        %v1349 = vadd.f32 %v1126, %v1348
        %v1350 = vpop.f32.mrb[0].mxu0
        %1351 = vmatprep.mubr.bf16.mxu0 0
        %1352 = vmatmul.mubr.bf16.gmra.mrb[0].mxu0 %v1092
        %v1353 = vpop.f32.mrb[0].mxu0
        %v1354 = vadd.f32 %v1126, %v1353
        %v1355 = vpop.f32.mrb[0].mxu0
        %v1356 = vpop.f32.mrb[0].mxu0
        %v1357 = vadd.f32 %v1126, %v1356
        %v1358 = vpop.f32.mrb[0].mxu0
        %1359 = vmatprep.mubr.bf16.mxu0 0
        %1360 = vmatmul.mubr.bf16.gmra.mrb[0].mxu0 %v1093
        %v1361 = vpop.f32.mrb[0].mxu0
        %v1362 = vadd.f32 %v1126, %v1361
        %v1363 = vpop.f32.mrb[0].mxu0
        %v1364 = vpop.f32.mrb[0].mxu0
        %v1365 = vadd.f32 %v1126, %v1364
        %v1366 = vpop.f32.mrb[0].mxu0
        %1367 = vmatprep.mubr.bf16.mxu0 0
        %1368 = vmatmul.mubr.bf16.gmra.mrb[0].mxu0 %v1094
        %v1369 = vpop.f32.mrb[0].mxu0
        %v1370 = vadd.f32 %v1126, %v1369
        %v1371 = vpop.f32.mrb[0].mxu0
        %v1372 = vpop.f32.mrb[0].mxu0
        %v1373 = vadd.f32 %v1126, %v1372
        %v1374 = vpop.f32.mrb[0].mxu0
        %1375 = vmatprep.mubr.bf16.mxu0 0
        %1376 = vmatmul.mubr.bf16.gmra.mrb[0].mxu0 %v1095
        %v1377 = vpop.f32.mrb[0].mxu0
        %v1378 = vadd.f32 %v1126, %v1377
        %v1379 = vpop.f32.mrb[0].mxu0
        %v1380 = vpop.f32.mrb[0].mxu0
        %v1381 = vadd.f32 %v1126, %v1380
        %v1382 = vpop.f32.mrb[0].mxu0
        %1383 = vmatprep.mubr.bf16.mxu0 0
        %1384 = vmatmul.mubr.bf16.gmra.mrb[0].mxu0 %v1096
        %v1385 = vpop.f32.mrb[0].mxu0
        %v1386 = vadd.f32 %v1126, %v1385
        %v1387 = vpop.f32.mrb[0].mxu0
        %v1388 = vpop.f32.mrb[0].mxu0
        %v1389 = vadd.f32 %v1126, %v1388
        %v1390 = vpop.f32.mrb[0].mxu0
        %1391 = vmatprep.mubr.bf16.mxu0 0
        %1392 = vmatmul.mubr.bf16.gmra.mrb[0].mxu0 %v1097
        %v1393 = vpop.f32.mrb[0].mxu0
        %v1394 = vadd.f32 %v1126, %v1393
        %v1395 = vpop.f32.mrb[0].mxu0
        %v1396 = vpop.f32.mrb[0].mxu0
        %v1397 = vadd.f32 %v1126, %v1396
        %v1398 = vpop.f32.mrb[0].mxu0
        %1399 = vmatprep.mubr.bf16.mxu0 0
        %1400 = vmatmul.mubr.bf16.gmra.mrb[0].mxu0 %v1098
        %v1401 = vpop.f32.mrb[0].mxu0
        %v1402 = vadd.f32 %v1126, %v1401
        %v1403 = vpop.f32.mrb[0].mxu0
        %v1404 = vpop.f32.mrb[0].mxu0
        %v1405 = vadd.f32 %v1126, %v1404
        %v1406 = vpop.f32.mrb[0].mxu0
        %1407 = vmatprep.mubr.bf16.mxu0 0
        %1408 = vmatmul.mubr.bf16.gmra.mrb[0].mxu0 %v1099
        %v1409 = vpop.f32.mrb[0].mxu0
        %v1410 = vadd.f32 %v1126, %v1409
        %v1411 = vpop.f32.mrb[0].mxu0
        %v1412 = vpop.f32.mrb[0].mxu0
        %v1413 = vadd.f32 %v1126, %v1412
        %v1414 = vpop.f32.mrb[0].mxu0
        %1415 = vmatprep.mubr.bf16.mxu0 0
        %1416 = vmatmul.mubr.bf16.gmra.mrb[0].mxu0 %v1100
        %v1417 = vpop.f32.mrb[0].mxu0
        %v1418 = vadd.f32 %v1126, %v1417
        %v1419 = vpop.f32.mrb[0].mxu0
        %v1420 = vpop.f32.mrb[0].mxu0
        %v1421 = vadd.f32 %v1126, %v1420
        %v1422 = vpop.f32.mrb[0].mxu0
        %1423 = vmatprep.mubr.bf16.mxu0 0
        %1424 = vmatmul.mubr.bf16.gmra.mrb[0].mxu0 %v1101
        %v1425 = vpop.f32.mrb[0].mxu0
        %v1426 = vadd.f32 %v1126, %v1425
        %v1427 = vpop.f32.mrb[0].mxu0
        %v1428 = vpop.f32.mrb[0].mxu0
        %v1429 = vadd.f32 %v1126, %v1428
        %v1430 = vpop.f32.mrb[0].mxu0
        %1431 = vmatprep.mubr.bf16.mxu0 0
        %1432 = vmatmul.mubr.bf16.gmra.mrb[0].mxu0 %v1102
        %v1433 = vpop.f32.mrb[0].mxu0
        %v1434 = vadd.f32 %v1126, %v1433
        %v1435 = vpop.f32.mrb[0].mxu0
        %v1436 = vpop.f32.mrb[0].mxu0
        %v1437 = vadd.f32 %v1126, %v1436
        %v1438 = vpop.f32.mrb[0].mxu0
        %1439 = vmatprep.mubr.bf16.mxu0 0
        %1440 = vmatmul.mubr.bf16.gmra.mrb[0].mxu0 %v1103
        %v1441 = vpop.f32.mrb[0].mxu0
        %v1442 = vadd.f32 %v1126, %v1441
        %v1443 = vpop.f32.mrb[0].mxu0
        %v1444 = vpop.f32.mrb[0].mxu0
        %v1445 = vadd.f32 %v1126, %v1444
        %v1446 = vpop.f32.mrb[0].mxu0
        %1447 = vmatprep.mubr.bf16.mxu0 0
        %1448 = vmatmul.mubr.bf16.gmra.mrb[0].mxu0 %v1104
        %v1449 = vpop.f32.mrb[0].mxu0
        %v1450 = vadd.f32 %v1126, %v1449
        %v1451 = vpop.f32.mrb[0].mxu0
        %v1452 = vpop.f32.mrb[0].mxu0
        %v1453 = vadd.f32 %v1126, %v1452
        %v1454 = vpop.f32.mrb[0].mxu0
        %1455 = vmatprep.mubr.bf16.mxu0 0
        %1456 = vmatmul.mubr.bf16.gmra.mrb[0].mxu0 %v1105
        %v1457 = vpop.f32.mrb[0].mxu0
        %v1458 = vadd.f32 %v1126, %v1457
        %v1459 = vpop.f32.mrb[0].mxu0
        %v1460 = vpop.f32.mrb[0].mxu0
        %v1461 = vadd.f32 %v1126, %v1460
        %v1462 = vpop.f32.mrb[0].mxu0
        %1463 = vdwg.mxu0
        %v1464 = vmax.f32 %v1210, 0.0
        %v1465 = vmax.f32 %v1213, 0.0
        %v1466 = vmax.f32 %v1218, 0.0
        %v1467 = vmax.f32 %v1221, 0.0
        %v1468 = vmax.f32 %v1226, 0.0
        %v1469 = vmax.f32 %v1229, 0.0
        %v1470 = vmax.f32 %v1234, 0.0
        %v1471 = vmax.f32 %v1237, 0.0
        %v1472 = vmax.f32 %v1242, 0.0
        %v1473 = vmax.f32 %v1245, 0.0
        %v1474 = vmax.f32 %v1250, 0.0
        %v1475 = vmax.f32 %v1253, 0.0
        %v1476 = vmax.f32 %v1258, 0.0
        %v1477 = vmax.f32 %v1261, 0.0
        %v1478 = vmax.f32 %v1266, 0.0
        %v1479 = vmax.f32 %v1269, 0.0
        %v1480 = vmax.f32 %v1274, 0.0
        %v1481 = vmax.f32 %v1277, 0.0
        %v1482 = vmax.f32 %v1282, 0.0
        %v1483 = vmax.f32 %v1285, 0.0
        %v1484 = vmax.f32 %v1290, 0.0
        %v1485 = vmax.f32 %v1293, 0.0
        %v1486 = vmax.f32 %v1298, 0.0
        %v1487 = vmax.f32 %v1301, 0.0
        %v1488 = vmax.f32 %v1306, 0.0
        %v1489 = vmax.f32 %v1309, 0.0
        %v1490 = vmax.f32 %v1314, 0.0
        %v1491 = vmax.f32 %v1317, 0.0
        %v1492 = vmax.f32 %v1322, 0.0
        %v1493 = vmax.f32 %v1325, 0.0
        %v1494 = vmax.f32 %v1330, 0.0
        %v1495 = vmax.f32 %v1333, 0.0
        %v1496 = vmax.f32 %v1338, 0.0
        %v1497 = vmax.f32 %v1341, 0.0
        %v1498 = vmax.f32 %v1346, 0.0
        %v1499 = vmax.f32 %v1349, 0.0
        %v1500 = vmax.f32 %v1354, 0.0
        %v1501 = vmax.f32 %v1357, 0.0
        %v1502 = vmax.f32 %v1362, 0.0
        %v1503 = vmax.f32 %v1365, 0.0
        %v1504 = vmax.f32 %v1370, 0.0
        %v1505 = vmax.f32 %v1373, 0.0
        %v1506 = vmax.f32 %v1378, 0.0
        %v1507 = vmax.f32 %v1381, 0.0
        %v1508 = vmax.f32 %v1386, 0.0
        %v1509 = vmax.f32 %v1389, 0.0
        %v1510 = vmax.f32 %v1394, 0.0
        %v1511 = vmax.f32 %v1397, 0.0
        %v1512 = vmax.f32 %v1402, 0.0
        %v1513 = vmax.f32 %v1405, 0.0
        %v1514 = vmax.f32 %v1410, 0.0
        %v1515 = vmax.f32 %v1413, 0.0
        %v1516 = vmax.f32 %v1418, 0.0
        %v1517 = vmax.f32 %v1421, 0.0
        %v1518 = vmax.f32 %v1426, 0.0
        %v1519 = vmax.f32 %v1429, 0.0
        %v1520 = vmax.f32 %v1434, 0.0
        %v1521 = vmax.f32 %v1437, 0.0
        %v1522 = vmax.f32 %v1442, 0.0
        %v1523 = vmax.f32 %v1445, 0.0
        %v1524 = vmax.f32 %v1450, 0.0
        %v1525 = vmax.f32 %v1453, 0.0
        %v1526 = vmax.f32 %v1458, 0.0
        %v1527 = vmax.f32 %v1461, 0.0
        %v1528 = vpack.c.bf16 %v1465, %v1464
        %v1529 = vpack.c.bf16 %v1467, %v1466
        %v1530 = vpack.c.bf16 %v1469, %v1468
        %v1531 = vpack.c.bf16 %v1471, %v1470
        %v1532 = vpack.c.bf16 %v1473, %v1472
        %v1533 = vpack.c.bf16 %v1475, %v1474
        %v1534 = vpack.c.bf16 %v1477, %v1476
        %v1535 = vpack.c.bf16 %v1479, %v1478
        %v1536 = vpack.c.bf16 %v1481, %v1480
        %v1537 = vpack.c.bf16 %v1483, %v1482
        %v1538 = vpack.c.bf16 %v1485, %v1484
        %v1539 = vpack.c.bf16 %v1487, %v1486
        %v1540 = vpack.c.bf16 %v1489, %v1488
        %v1541 = vpack.c.bf16 %v1491, %v1490
        %v1542 = vpack.c.bf16 %v1493, %v1492
        %v1543 = vpack.c.bf16 %v1495, %v1494
        %v1544 = vpack.c.bf16 %v1497, %v1496
        %v1545 = vpack.c.bf16 %v1499, %v1498
        %v1546 = vpack.c.bf16 %v1501, %v1500
        %v1547 = vpack.c.bf16 %v1503, %v1502
        %v1548 = vpack.c.bf16 %v1505, %v1504
        %v1549 = vpack.c.bf16 %v1507, %v1506
        %v1550 = vpack.c.bf16 %v1509, %v1508
        %v1551 = vpack.c.bf16 %v1511, %v1510
        %v1552 = vpack.c.bf16 %v1513, %v1512
        %v1553 = vpack.c.bf16 %v1515, %v1514
        %v1554 = vpack.c.bf16 %v1517, %v1516
        %v1555 = vpack.c.bf16 %v1519, %v1518
        %v1556 = vpack.c.bf16 %v1521, %v1520
        %v1557 = vpack.c.bf16 %v1523, %v1522
        %v1558 = vpack.c.bf16 %v1525, %v1524
        %v1559 = vpack.c.bf16 %v1527, %v1526
        %s1560 = scalar_lea.vmem %s2, 64
        %v1561 = vld [vmem:[%s1560] sm:$0xf]
        %v1562 = vld [vmem:[%s1560 + $0x4] sm:$0xf]
        %v1563 = vld [vmem:[%s1560 + $0x8] sm:$0xf]
        %v1564 = vld [vmem:[%s1560 + $0xc] sm:$0xf]
        %v1565 = vld [vmem:[%s1560 + $0x10] sm:$0xf]
        %v1566 = vld [vmem:[%s1560 + $0x14] sm:$0xf]
        %v1567 = vld [vmem:[%s1560 + $0x18] sm:$0xf]
        %v1568 = vld [vmem:[%s1560 + $0x1c] sm:$0xf]
        %v1569 = vld [vmem:[%s1560 + $0x20] sm:$0xf]
        %v1570 = vld [vmem:[%s1560 + $0x24] sm:$0xf]
        %v1571 = vld [vmem:[%s1560 + $0x28] sm:$0xf]
        %v1572 = vld [vmem:[%s1560 + $0x2c] sm:$0xf]
        %v1573 = vld [vmem:[%s1560 + $0x30] sm:$0xf]
        %v1574 = vld [vmem:[%s1560 + $0x34] sm:$0xf]
        %v1575 = vld [vmem:[%s1560 + $0x38] sm:$0xf]
        %v1576 = vld [vmem:[%s1560 + $0x3c] sm:$0xf]
        %v1577 = vld [vmem:[%s3 + $0x2] sm:$0x1]
        %v1578 = vlaneseq
        %v1579 = vshrl.u32 %v1578, 7
        %v1580 = vsub.s32 0, %v1579
        %v1581 = vrot.slane %v1577, %v1580
        %v1598 = vunpack.c.l.b16 %v1561
        %v1599 = vunpack.c.l.b16 %v1562
        %v1600 = vunpack.c.l.b16 %v1563
        %v1601 = vunpack.c.l.b16 %v1564
        %v1602 = vunpack.c.l.b16 %v1565
        %v1603 = vunpack.c.l.b16 %v1566
        %v1604 = vunpack.c.l.b16 %v1567
        %v1605 = vunpack.c.l.b16 %v1568
        %v1606 = vunpack.c.l.b16 %v1569
        %v1607 = vunpack.c.l.b16 %v1570
        %v1608 = vunpack.c.l.b16 %v1571
        %v1609 = vunpack.c.l.b16 %v1572
        %v1610 = vunpack.c.l.b16 %v1573
        %v1611 = vunpack.c.l.b16 %v1574
        %v1612 = vunpack.c.l.b16 %v1575
        %v1613 = vunpack.c.l.b16 %v1576
        %v1614 = vpack.c.b16 %v1599, %v1598
        %v1615 = vpack.c.b16 %v1601, %v1600
        %v1616 = vpack.c.b16 %v1603, %v1602
        %v1617 = vpack.c.b16 %v1605, %v1604
        %v1618 = vpack.c.b16 %v1607, %v1606
        %v1619 = vpack.c.b16 %v1609, %v1608
        %v1620 = vpack.c.b16 %v1611, %v1610
        %v1621 = vpack.c.b16 %v1613, %v1612
        %1630 = vmatprep.subr.bf16.mxu0 0
        %1631 = vmatpush1.bf16.msra.mxu0 %v1614
        %1632 = vmatprep.subr.bf16.mxu0 0
        %1633 = vmatpush1.bf16.msra.mxu0 %v1615
        %1634 = vmatprep.subr.bf16.mxu0 0
        %1635 = vmatpush1.bf16.msra.mxu0 %v1616
        %1636 = vmatprep.subr.bf16.mxu0 0
        %1637 = vmatpush1.bf16.msra.mxu0 %v1617
        %1638 = vmatprep.subr.bf16.mxu0 0
        %1639 = vmatpush1.bf16.msra.mxu0 %v1618
        %1640 = vmatprep.subr.bf16.mxu0 0
        %1641 = vmatpush1.bf16.msra.mxu0 %v1619
        %1642 = vmatprep.subr.bf16.mxu0 0
        %1643 = vmatpush1.bf16.msra.mxu0 %v1620
        %1644 = vmatprep.subr.bf16.mxu0 0
        %1645 = vmatpush1.bf16.msra.mxu0 %v1621
        %1646 = vmatprep.subr.bf16.mxu0 0
        %1647 = vmatpush1.bf16.msra.mxu0 0
        %1648 = vmatprep.subr.bf16.mxu0 0
        %1649 = vmatpush1.bf16.msra.mxu0 0
        %1650 = vmatprep.subr.bf16.mxu0 0
        %1651 = vmatpush1.bf16.msra.mxu0 0
        %1652 = vmatprep.subr.bf16.mxu0 0
        %1653 = vmatpush1.bf16.msra.mxu0 0
        %1654 = vmatprep.subr.bf16.mxu0 0
        %1655 = vmatpush1.bf16.msra.mxu0 0
        %1656 = vmatprep.subr.bf16.mxu0 0
        %1657 = vmatpush1.bf16.msra.mxu0 0
        %1658 = vmatprep.subr.bf16.mxu0 0
        %1659 = vmatpush1.bf16.msra.mxu0 0
        %1660 = vmatprep.subr.bf16.mxu0 0
        %1661 = vmatpush1.bf16.msra.mxu0 0
        %1662 = vmatprep.mubr.bf16.mxu0 0
        %1663 = vmatmul.mubr.bf16.gmra.mrb[0].mxu0 %v1528
        %v1664 = vpop.f32.mrb[0].mxu0
        %v1665 = vadd.f32 %v1581, %v1664
        %v1666 = vpop.f32.mrb[0].mxu0
        %v1667 = vpop.f32.mrb[0].mxu0
        %v1668 = vadd.f32 %v1581, %v1667
        %v1669 = vpop.f32.mrb[0].mxu0
        %1670 = vmatprep.mubr.bf16.mxu0 0
        %1671 = vmatmul.mubr.bf16.gmra.mrb[0].mxu0 %v1529
        %v1672 = vpop.f32.mrb[0].mxu0
        %v1673 = vadd.f32 %v1581, %v1672
        %v1674 = vpop.f32.mrb[0].mxu0
        %v1675 = vpop.f32.mrb[0].mxu0
        %v1676 = vadd.f32 %v1581, %v1675
        %v1677 = vpop.f32.mrb[0].mxu0
        %1678 = vmatprep.mubr.bf16.mxu0 0
        %1679 = vmatmul.mubr.bf16.gmra.mrb[0].mxu0 %v1530
        %v1680 = vpop.f32.mrb[0].mxu0
        %v1681 = vadd.f32 %v1581, %v1680
        %v1682 = vpop.f32.mrb[0].mxu0
        %v1683 = vpop.f32.mrb[0].mxu0
        %v1684 = vadd.f32 %v1581, %v1683
        %v1685 = vpop.f32.mrb[0].mxu0
        %1686 = vmatprep.mubr.bf16.mxu0 0
        %1687 = vmatmul.mubr.bf16.gmra.mrb[0].mxu0 %v1531
        %v1688 = vpop.f32.mrb[0].mxu0
        %v1689 = vadd.f32 %v1581, %v1688
        %v1690 = vpop.f32.mrb[0].mxu0
        %v1691 = vpop.f32.mrb[0].mxu0
        %v1692 = vadd.f32 %v1581, %v1691
        %v1693 = vpop.f32.mrb[0].mxu0
        %1694 = vmatprep.mubr.bf16.mxu0 0
        %1695 = vmatmul.mubr.bf16.gmra.mrb[0].mxu0 %v1532
        %v1696 = vpop.f32.mrb[0].mxu0
        %v1697 = vadd.f32 %v1581, %v1696
        %v1698 = vpop.f32.mrb[0].mxu0
        %v1699 = vpop.f32.mrb[0].mxu0
        %v1700 = vadd.f32 %v1581, %v1699
        %v1701 = vpop.f32.mrb[0].mxu0
        %1702 = vmatprep.mubr.bf16.mxu0 0
        %1703 = vmatmul.mubr.bf16.gmra.mrb[0].mxu0 %v1533
        %v1704 = vpop.f32.mrb[0].mxu0
        %v1705 = vadd.f32 %v1581, %v1704
        %v1706 = vpop.f32.mrb[0].mxu0
        %v1707 = vpop.f32.mrb[0].mxu0
        %v1708 = vadd.f32 %v1581, %v1707
        %v1709 = vpop.f32.mrb[0].mxu0
        %1710 = vmatprep.mubr.bf16.mxu0 0
        %1711 = vmatmul.mubr.bf16.gmra.mrb[0].mxu0 %v1534
        %v1712 = vpop.f32.mrb[0].mxu0
        %v1713 = vadd.f32 %v1581, %v1712
        %v1714 = vpop.f32.mrb[0].mxu0
        %v1715 = vpop.f32.mrb[0].mxu0
        %v1716 = vadd.f32 %v1581, %v1715
        %v1717 = vpop.f32.mrb[0].mxu0
        %1718 = vmatprep.mubr.bf16.mxu0 0
        %1719 = vmatmul.mubr.bf16.gmra.mrb[0].mxu0 %v1535
        %v1720 = vpop.f32.mrb[0].mxu0
        %v1721 = vadd.f32 %v1581, %v1720
        %v1722 = vpop.f32.mrb[0].mxu0
        %v1723 = vpop.f32.mrb[0].mxu0
        %v1724 = vadd.f32 %v1581, %v1723
        %v1725 = vpop.f32.mrb[0].mxu0
        %1726 = vmatprep.mubr.bf16.mxu0 0
        %1727 = vmatmul.mubr.bf16.gmra.mrb[0].mxu0 %v1536
        %v1728 = vpop.f32.mrb[0].mxu0
        %v1729 = vadd.f32 %v1581, %v1728
        %v1730 = vpop.f32.mrb[0].mxu0
        %v1731 = vpop.f32.mrb[0].mxu0
        %v1732 = vadd.f32 %v1581, %v1731
        %v1733 = vpop.f32.mrb[0].mxu0
        %1734 = vmatprep.mubr.bf16.mxu0 0
        %1735 = vmatmul.mubr.bf16.gmra.mrb[0].mxu0 %v1537
        %v1736 = vpop.f32.mrb[0].mxu0
        %v1737 = vadd.f32 %v1581, %v1736
        %v1738 = vpop.f32.mrb[0].mxu0
        %v1739 = vpop.f32.mrb[0].mxu0
        %v1740 = vadd.f32 %v1581, %v1739
        %v1741 = vpop.f32.mrb[0].mxu0
        %1742 = vmatprep.mubr.bf16.mxu0 0
        %1743 = vmatmul.mubr.bf16.gmra.mrb[0].mxu0 %v1538
        %v1744 = vpop.f32.mrb[0].mxu0
        %v1745 = vadd.f32 %v1581, %v1744
        %v1746 = vpop.f32.mrb[0].mxu0
        %v1747 = vpop.f32.mrb[0].mxu0
        %v1748 = vadd.f32 %v1581, %v1747
        %v1749 = vpop.f32.mrb[0].mxu0
        %1750 = vmatprep.mubr.bf16.mxu0 0
        %1751 = vmatmul.mubr.bf16.gmra.mrb[0].mxu0 %v1539
        %v1752 = vpop.f32.mrb[0].mxu0
        %v1753 = vadd.f32 %v1581, %v1752
        %v1754 = vpop.f32.mrb[0].mxu0
        %v1755 = vpop.f32.mrb[0].mxu0
        %v1756 = vadd.f32 %v1581, %v1755
        %v1757 = vpop.f32.mrb[0].mxu0
        %1758 = vmatprep.mubr.bf16.mxu0 0
        %1759 = vmatmul.mubr.bf16.gmra.mrb[0].mxu0 %v1540
        %v1760 = vpop.f32.mrb[0].mxu0
        %v1761 = vadd.f32 %v1581, %v1760
        %v1762 = vpop.f32.mrb[0].mxu0
        %v1763 = vpop.f32.mrb[0].mxu0
        %v1764 = vadd.f32 %v1581, %v1763
        %v1765 = vpop.f32.mrb[0].mxu0
        %1766 = vmatprep.mubr.bf16.mxu0 0
        %1767 = vmatmul.mubr.bf16.gmra.mrb[0].mxu0 %v1541
        %v1768 = vpop.f32.mrb[0].mxu0
        %v1769 = vadd.f32 %v1581, %v1768
        %v1770 = vpop.f32.mrb[0].mxu0
        %v1771 = vpop.f32.mrb[0].mxu0
        %v1772 = vadd.f32 %v1581, %v1771
        %v1773 = vpop.f32.mrb[0].mxu0
        %1774 = vmatprep.mubr.bf16.mxu0 0
        %1775 = vmatmul.mubr.bf16.gmra.mrb[0].mxu0 %v1542
        %v1776 = vpop.f32.mrb[0].mxu0
        %v1777 = vadd.f32 %v1581, %v1776
        %v1778 = vpop.f32.mrb[0].mxu0
        %v1779 = vpop.f32.mrb[0].mxu0
        %v1780 = vadd.f32 %v1581, %v1779
        %v1781 = vpop.f32.mrb[0].mxu0
        %1782 = vmatprep.mubr.bf16.mxu0 0
        %1783 = vmatmul.mubr.bf16.gmra.mrb[0].mxu0 %v1543
        %v1784 = vpop.f32.mrb[0].mxu0
        %v1785 = vadd.f32 %v1581, %v1784
        %v1786 = vpop.f32.mrb[0].mxu0
        %v1787 = vpop.f32.mrb[0].mxu0
        %v1788 = vadd.f32 %v1581, %v1787
        %v1789 = vpop.f32.mrb[0].mxu0
        %1790 = vmatprep.mubr.bf16.mxu0 0
        %1791 = vmatmul.mubr.bf16.gmra.mrb[0].mxu0 %v1544
        %v1792 = vpop.f32.mrb[0].mxu0
        %v1793 = vadd.f32 %v1581, %v1792
        %v1794 = vpop.f32.mrb[0].mxu0
        %v1795 = vpop.f32.mrb[0].mxu0
        %v1796 = vadd.f32 %v1581, %v1795
        %v1797 = vpop.f32.mrb[0].mxu0
        %1798 = vmatprep.mubr.bf16.mxu0 0
        %1799 = vmatmul.mubr.bf16.gmra.mrb[0].mxu0 %v1545
        %v1800 = vpop.f32.mrb[0].mxu0
        %v1801 = vadd.f32 %v1581, %v1800
        %v1802 = vpop.f32.mrb[0].mxu0
        %v1803 = vpop.f32.mrb[0].mxu0
        %v1804 = vadd.f32 %v1581, %v1803
        %v1805 = vpop.f32.mrb[0].mxu0
        %1806 = vmatprep.mubr.bf16.mxu0 0
        %1807 = vmatmul.mubr.bf16.gmra.mrb[0].mxu0 %v1546
        %v1808 = vpop.f32.mrb[0].mxu0
        %v1809 = vadd.f32 %v1581, %v1808
        %v1810 = vpop.f32.mrb[0].mxu0
        %v1811 = vpop.f32.mrb[0].mxu0
        %v1812 = vadd.f32 %v1581, %v1811
        %v1813 = vpop.f32.mrb[0].mxu0
        %1814 = vmatprep.mubr.bf16.mxu0 0
        %1815 = vmatmul.mubr.bf16.gmra.mrb[0].mxu0 %v1547
        %v1816 = vpop.f32.mrb[0].mxu0
        %v1817 = vadd.f32 %v1581, %v1816
        %v1818 = vpop.f32.mrb[0].mxu0
        %v1819 = vpop.f32.mrb[0].mxu0
        %v1820 = vadd.f32 %v1581, %v1819
        %v1821 = vpop.f32.mrb[0].mxu0
        %1822 = vmatprep.mubr.bf16.mxu0 0
        %1823 = vmatmul.mubr.bf16.gmra.mrb[0].mxu0 %v1548
        %v1824 = vpop.f32.mrb[0].mxu0
        %v1825 = vadd.f32 %v1581, %v1824
        %v1826 = vpop.f32.mrb[0].mxu0
        %v1827 = vpop.f32.mrb[0].mxu0
        %v1828 = vadd.f32 %v1581, %v1827
        %v1829 = vpop.f32.mrb[0].mxu0
        %1830 = vmatprep.mubr.bf16.mxu0 0
        %1831 = vmatmul.mubr.bf16.gmra.mrb[0].mxu0 %v1549
        %v1832 = vpop.f32.mrb[0].mxu0
        %v1833 = vadd.f32 %v1581, %v1832
        %v1834 = vpop.f32.mrb[0].mxu0
        %v1835 = vpop.f32.mrb[0].mxu0
        %v1836 = vadd.f32 %v1581, %v1835
        %v1837 = vpop.f32.mrb[0].mxu0
        %1838 = vmatprep.mubr.bf16.mxu0 0
        %1839 = vmatmul.mubr.bf16.gmra.mrb[0].mxu0 %v1550
        %v1840 = vpop.f32.mrb[0].mxu0
        %v1841 = vadd.f32 %v1581, %v1840
        %v1842 = vpop.f32.mrb[0].mxu0
        %v1843 = vpop.f32.mrb[0].mxu0
        %v1844 = vadd.f32 %v1581, %v1843
        %v1845 = vpop.f32.mrb[0].mxu0
        %1846 = vmatprep.mubr.bf16.mxu0 0
        %1847 = vmatmul.mubr.bf16.gmra.mrb[0].mxu0 %v1551
        %v1848 = vpop.f32.mrb[0].mxu0
        %v1849 = vadd.f32 %v1581, %v1848
        %v1850 = vpop.f32.mrb[0].mxu0
        %v1851 = vpop.f32.mrb[0].mxu0
        %v1852 = vadd.f32 %v1581, %v1851
        %v1853 = vpop.f32.mrb[0].mxu0
        %1854 = vmatprep.mubr.bf16.mxu0 0
        %1855 = vmatmul.mubr.bf16.gmra.mrb[0].mxu0 %v1552
        %v1856 = vpop.f32.mrb[0].mxu0
        %v1857 = vadd.f32 %v1581, %v1856
        %v1858 = vpop.f32.mrb[0].mxu0
        %v1859 = vpop.f32.mrb[0].mxu0
        %v1860 = vadd.f32 %v1581, %v1859
        %v1861 = vpop.f32.mrb[0].mxu0
        %1862 = vmatprep.mubr.bf16.mxu0 0
        %1863 = vmatmul.mubr.bf16.gmra.mrb[0].mxu0 %v1553
        %v1864 = vpop.f32.mrb[0].mxu0
        %v1865 = vadd.f32 %v1581, %v1864
        %v1866 = vpop.f32.mrb[0].mxu0
        %v1867 = vpop.f32.mrb[0].mxu0
        %v1868 = vadd.f32 %v1581, %v1867
        %v1869 = vpop.f32.mrb[0].mxu0
        %1870 = vmatprep.mubr.bf16.mxu0 0
        %1871 = vmatmul.mubr.bf16.gmra.mrb[0].mxu0 %v1554
        %v1872 = vpop.f32.mrb[0].mxu0
        %v1873 = vadd.f32 %v1581, %v1872
        %v1874 = vpop.f32.mrb[0].mxu0
        %v1875 = vpop.f32.mrb[0].mxu0
        %v1876 = vadd.f32 %v1581, %v1875
        %v1877 = vpop.f32.mrb[0].mxu0
        %1878 = vmatprep.mubr.bf16.mxu0 0
        %1879 = vmatmul.mubr.bf16.gmra.mrb[0].mxu0 %v1555
        %v1880 = vpop.f32.mrb[0].mxu0
        %v1881 = vadd.f32 %v1581, %v1880
        %v1882 = vpop.f32.mrb[0].mxu0
        %v1883 = vpop.f32.mrb[0].mxu0
        %v1884 = vadd.f32 %v1581, %v1883
        %v1885 = vpop.f32.mrb[0].mxu0
        %1886 = vmatprep.mubr.bf16.mxu0 0
        %1887 = vmatmul.mubr.bf16.gmra.mrb[0].mxu0 %v1556
        %v1888 = vpop.f32.mrb[0].mxu0
        %v1889 = vadd.f32 %v1581, %v1888
        %v1890 = vpop.f32.mrb[0].mxu0
        %v1891 = vpop.f32.mrb[0].mxu0
        %v1892 = vadd.f32 %v1581, %v1891
        %v1893 = vpop.f32.mrb[0].mxu0
        %1894 = vmatprep.mubr.bf16.mxu0 0
        %1895 = vmatmul.mubr.bf16.gmra.mrb[0].mxu0 %v1557
        %v1896 = vpop.f32.mrb[0].mxu0
        %v1897 = vadd.f32 %v1581, %v1896
        %v1898 = vpop.f32.mrb[0].mxu0
        %v1899 = vpop.f32.mrb[0].mxu0
        %v1900 = vadd.f32 %v1581, %v1899
        %v1901 = vpop.f32.mrb[0].mxu0
        %1902 = vmatprep.mubr.bf16.mxu0 0
        %1903 = vmatmul.mubr.bf16.gmra.mrb[0].mxu0 %v1558
        %v1904 = vpop.f32.mrb[0].mxu0
        %v1905 = vadd.f32 %v1581, %v1904
        %v1906 = vpop.f32.mrb[0].mxu0
        %v1907 = vpop.f32.mrb[0].mxu0
        %v1908 = vadd.f32 %v1581, %v1907
        %v1909 = vpop.f32.mrb[0].mxu0
        %1910 = vmatprep.mubr.bf16.mxu0 0
        %1911 = vmatmul.mubr.bf16.gmra.mrb[0].mxu0 %v1559
        %v1912 = vpop.f32.mrb[0].mxu0
        %v1913 = vadd.f32 %v1581, %v1912
        %v1914 = vpop.f32.mrb[0].mxu0
        %v1915 = vpop.f32.mrb[0].mxu0
        %v1916 = vadd.f32 %v1581, %v1915
        %v1917 = vpop.f32.mrb[0].mxu0
        %1918 = vdwg.mxu0
        %v1919 = vmax.f32 %v1665, 0.0
        %v1920 = vmax.f32 %v1668, 0.0
        %v1921 = vmax.f32 %v1673, 0.0
        %v1922 = vmax.f32 %v1676, 0.0
        %v1923 = vmax.f32 %v1681, 0.0
        %v1924 = vmax.f32 %v1684, 0.0
        %v1925 = vmax.f32 %v1689, 0.0
        %v1926 = vmax.f32 %v1692, 0.0
        %v1927 = vmax.f32 %v1697, 0.0
        %v1928 = vmax.f32 %v1700, 0.0
        %v1929 = vmax.f32 %v1705, 0.0
        %v1930 = vmax.f32 %v1708, 0.0
        %v1931 = vmax.f32 %v1713, 0.0
        %v1932 = vmax.f32 %v1716, 0.0
        %v1933 = vmax.f32 %v1721, 0.0
        %v1934 = vmax.f32 %v1724, 0.0
        %v1935 = vmax.f32 %v1729, 0.0
        %v1936 = vmax.f32 %v1732, 0.0
        %v1937 = vmax.f32 %v1737, 0.0
        %v1938 = vmax.f32 %v1740, 0.0
        %v1939 = vmax.f32 %v1745, 0.0
        %v1940 = vmax.f32 %v1748, 0.0
        %v1941 = vmax.f32 %v1753, 0.0
        %v1942 = vmax.f32 %v1756, 0.0
        %v1943 = vmax.f32 %v1761, 0.0
        %v1944 = vmax.f32 %v1764, 0.0
        %v1945 = vmax.f32 %v1769, 0.0
        %v1946 = vmax.f32 %v1772, 0.0
        %v1947 = vmax.f32 %v1777, 0.0
        %v1948 = vmax.f32 %v1780, 0.0
        %v1949 = vmax.f32 %v1785, 0.0
        %v1950 = vmax.f32 %v1788, 0.0
        %v1951 = vmax.f32 %v1793, 0.0
        %v1952 = vmax.f32 %v1796, 0.0
        %v1953 = vmax.f32 %v1801, 0.0
        %v1954 = vmax.f32 %v1804, 0.0
        %v1955 = vmax.f32 %v1809, 0.0
        %v1956 = vmax.f32 %v1812, 0.0
        %v1957 = vmax.f32 %v1817, 0.0
        %v1958 = vmax.f32 %v1820, 0.0
        %v1959 = vmax.f32 %v1825, 0.0
        %v1960 = vmax.f32 %v1828, 0.0
        %v1961 = vmax.f32 %v1833, 0.0
        %v1962 = vmax.f32 %v1836, 0.0
        %v1963 = vmax.f32 %v1841, 0.0
        %v1964 = vmax.f32 %v1844, 0.0
        %v1965 = vmax.f32 %v1849, 0.0
        %v1966 = vmax.f32 %v1852, 0.0
        %v1967 = vmax.f32 %v1857, 0.0
        %v1968 = vmax.f32 %v1860, 0.0
        %v1969 = vmax.f32 %v1865, 0.0
        %v1970 = vmax.f32 %v1868, 0.0
        %v1971 = vmax.f32 %v1873, 0.0
        %v1972 = vmax.f32 %v1876, 0.0
        %v1973 = vmax.f32 %v1881, 0.0
        %v1974 = vmax.f32 %v1884, 0.0
        %v1975 = vmax.f32 %v1889, 0.0
        %v1976 = vmax.f32 %v1892, 0.0
        %v1977 = vmax.f32 %v1897, 0.0
        %v1978 = vmax.f32 %v1900, 0.0
        %v1979 = vmax.f32 %v1905, 0.0
        %v1980 = vmax.f32 %v1908, 0.0
        %v1981 = vmax.f32 %v1913, 0.0
        %v1982 = vmax.f32 %v1916, 0.0
        %v1983 = vpack.c.bf16 %v1920, %v1919
        %v1984 = vpack.c.bf16 %v1922, %v1921
        %v1985 = vpack.c.bf16 %v1924, %v1923
        %v1986 = vpack.c.bf16 %v1926, %v1925
        %v1987 = vpack.c.bf16 %v1928, %v1927
        %v1988 = vpack.c.bf16 %v1930, %v1929
        %v1989 = vpack.c.bf16 %v1932, %v1931
        %v1990 = vpack.c.bf16 %v1934, %v1933
        %v1991 = vpack.c.bf16 %v1936, %v1935
        %v1992 = vpack.c.bf16 %v1938, %v1937
        %v1993 = vpack.c.bf16 %v1940, %v1939
        %v1994 = vpack.c.bf16 %v1942, %v1941
        %v1995 = vpack.c.bf16 %v1944, %v1943
        %v1996 = vpack.c.bf16 %v1946, %v1945
        %v1997 = vpack.c.bf16 %v1948, %v1947
        %v1998 = vpack.c.bf16 %v1950, %v1949
        %v1999 = vpack.c.bf16 %v1952, %v1951
        %v2000 = vpack.c.bf16 %v1954, %v1953
        %v2001 = vpack.c.bf16 %v1956, %v1955
        %v2002 = vpack.c.bf16 %v1958, %v1957
        %v2003 = vpack.c.bf16 %v1960, %v1959
        %v2004 = vpack.c.bf16 %v1962, %v1961
        %v2005 = vpack.c.bf16 %v1964, %v1963
        %v2006 = vpack.c.bf16 %v1966, %v1965
        %v2007 = vpack.c.bf16 %v1968, %v1967
        %v2008 = vpack.c.bf16 %v1970, %v1969
        %v2009 = vpack.c.bf16 %v1972, %v1971
        %v2010 = vpack.c.bf16 %v1974, %v1973
        %v2011 = vpack.c.bf16 %v1976, %v1975
        %v2012 = vpack.c.bf16 %v1978, %v1977
        %v2013 = vpack.c.bf16 %v1980, %v1979
        %v2014 = vpack.c.bf16 %v1982, %v1981
        %s2015 = scalar_lea.vmem %s2, 128
        %v2016 = vld [vmem:[%s2015] sm:$0xf]
        %v2017 = vld [vmem:[%s2015 + $0x4] sm:$0xf]
        %v2018 = vld [vmem:[%s2015 + $0x8] sm:$0xf]
        %v2019 = vld [vmem:[%s2015 + $0xc] sm:$0xf]
        %v2020 = vld [vmem:[%s2015 + $0x10] sm:$0xf]
        %v2021 = vld [vmem:[%s2015 + $0x14] sm:$0xf]
        %v2022 = vld [vmem:[%s2015 + $0x18] sm:$0xf]
        %v2023 = vld [vmem:[%s2015 + $0x1c] sm:$0xf]
        %v2024 = vld [vmem:[%s2015 + $0x20] sm:$0xf]
        %v2025 = vld [vmem:[%s2015 + $0x24] sm:$0xf]
        %v2026 = vld [vmem:[%s2015 + $0x28] sm:$0xf]
        %v2027 = vld [vmem:[%s2015 + $0x2c] sm:$0xf]
        %v2028 = vld [vmem:[%s2015 + $0x30] sm:$0xf]
        %v2029 = vld [vmem:[%s2015 + $0x34] sm:$0xf]
        %v2030 = vld [vmem:[%s2015 + $0x38] sm:$0xf]
        %v2031 = vld [vmem:[%s2015 + $0x3c] sm:$0xf]
        %v2032 = vld [vmem:[%s3 + $0x3] sm:$0x1]
        %v2033 = vlaneseq
        %v2034 = vshrl.u32 %v2033, 7
        %v2035 = vsub.s32 0, %v2034
        %v2036 = vrot.slane %v2032, %v2035
        %v2053 = vunpack.c.l.b16 %v2016
        %v2054 = vunpack.c.l.b16 %v2017
        %v2055 = vunpack.c.l.b16 %v2018
        %v2056 = vunpack.c.l.b16 %v2019
        %v2057 = vunpack.c.l.b16 %v2020
        %v2058 = vunpack.c.l.b16 %v2021
        %v2059 = vunpack.c.l.b16 %v2022
        %v2060 = vunpack.c.l.b16 %v2023
        %v2061 = vunpack.c.l.b16 %v2024
        %v2062 = vunpack.c.l.b16 %v2025
        %v2063 = vunpack.c.l.b16 %v2026
        %v2064 = vunpack.c.l.b16 %v2027
        %v2065 = vunpack.c.l.b16 %v2028
        %v2066 = vunpack.c.l.b16 %v2029
        %v2067 = vunpack.c.l.b16 %v2030
        %v2068 = vunpack.c.l.b16 %v2031
        %v2069 = vpack.c.b16 %v2054, %v2053
        %v2070 = vpack.c.b16 %v2056, %v2055
        %v2071 = vpack.c.b16 %v2058, %v2057
        %v2072 = vpack.c.b16 %v2060, %v2059
        %v2073 = vpack.c.b16 %v2062, %v2061
        %v2074 = vpack.c.b16 %v2064, %v2063
        %v2075 = vpack.c.b16 %v2066, %v2065
        %v2076 = vpack.c.b16 %v2068, %v2067
        %2085 = vmatprep.subr.bf16.mxu0 0
        %2086 = vmatpush1.bf16.msra.mxu0 %v2069
        %2087 = vmatprep.subr.bf16.mxu0 0
        %2088 = vmatpush1.bf16.msra.mxu0 %v2070
        %2089 = vmatprep.subr.bf16.mxu0 0
        %2090 = vmatpush1.bf16.msra.mxu0 %v2071
        %2091 = vmatprep.subr.bf16.mxu0 0
        %2092 = vmatpush1.bf16.msra.mxu0 %v2072
        %2093 = vmatprep.subr.bf16.mxu0 0
        %2094 = vmatpush1.bf16.msra.mxu0 %v2073
        %2095 = vmatprep.subr.bf16.mxu0 0
        %2096 = vmatpush1.bf16.msra.mxu0 %v2074
        %2097 = vmatprep.subr.bf16.mxu0 0
        %2098 = vmatpush1.bf16.msra.mxu0 %v2075
        %2099 = vmatprep.subr.bf16.mxu0 0
        %2100 = vmatpush1.bf16.msra.mxu0 %v2076
        %2101 = vmatprep.subr.bf16.mxu0 0
        %2102 = vmatpush1.bf16.msra.mxu0 0
        %2103 = vmatprep.subr.bf16.mxu0 0
        %2104 = vmatpush1.bf16.msra.mxu0 0
        %2105 = vmatprep.subr.bf16.mxu0 0
        %2106 = vmatpush1.bf16.msra.mxu0 0
        %2107 = vmatprep.subr.bf16.mxu0 0
        %2108 = vmatpush1.bf16.msra.mxu0 0
        %2109 = vmatprep.subr.bf16.mxu0 0
        %2110 = vmatpush1.bf16.msra.mxu0 0
        %2111 = vmatprep.subr.bf16.mxu0 0
        %2112 = vmatpush1.bf16.msra.mxu0 0
        %2113 = vmatprep.subr.bf16.mxu0 0
        %2114 = vmatpush1.bf16.msra.mxu0 0
        %2115 = vmatprep.subr.bf16.mxu0 0
        %2116 = vmatpush1.bf16.msra.mxu0 0
        %2117 = vmatprep.mubr.bf16.mxu0 0
        %2118 = vmatmul.mubr.bf16.gmra.mrb[0].mxu0 %v1983
        %v2119 = vpop.f32.mrb[0].mxu0
        %v2120 = vadd.f32 %v2036, %v2119
        %v2121 = vpop.f32.mrb[0].mxu0
        %v2122 = vpop.f32.mrb[0].mxu0
        %v2123 = vadd.f32 %v2036, %v2122
        %v2124 = vpop.f32.mrb[0].mxu0
        %2125 = vmatprep.mubr.bf16.mxu0 0
        %2126 = vmatmul.mubr.bf16.gmra.mrb[0].mxu0 %v1984
        %v2127 = vpop.f32.mrb[0].mxu0
        %v2128 = vadd.f32 %v2036, %v2127
        %v2129 = vpop.f32.mrb[0].mxu0
        %v2130 = vpop.f32.mrb[0].mxu0
        %v2131 = vadd.f32 %v2036, %v2130
        %v2132 = vpop.f32.mrb[0].mxu0
        %2133 = vmatprep.mubr.bf16.mxu0 0
        %2134 = vmatmul.mubr.bf16.gmra.mrb[0].mxu0 %v1985
        %v2135 = vpop.f32.mrb[0].mxu0
        %v2136 = vadd.f32 %v2036, %v2135
        %v2137 = vpop.f32.mrb[0].mxu0
        %v2138 = vpop.f32.mrb[0].mxu0
        %v2139 = vadd.f32 %v2036, %v2138
        %v2140 = vpop.f32.mrb[0].mxu0
        %2141 = vmatprep.mubr.bf16.mxu0 0
        %2142 = vmatmul.mubr.bf16.gmra.mrb[0].mxu0 %v1986
        %v2143 = vpop.f32.mrb[0].mxu0
        %v2144 = vadd.f32 %v2036, %v2143
        %v2145 = vpop.f32.mrb[0].mxu0
        %v2146 = vpop.f32.mrb[0].mxu0
        %v2147 = vadd.f32 %v2036, %v2146
        %v2148 = vpop.f32.mrb[0].mxu0
        %2149 = vmatprep.mubr.bf16.mxu0 0
        %2150 = vmatmul.mubr.bf16.gmra.mrb[0].mxu0 %v1987
        %v2151 = vpop.f32.mrb[0].mxu0
        %v2152 = vadd.f32 %v2036, %v2151
        %v2153 = vpop.f32.mrb[0].mxu0
        %v2154 = vpop.f32.mrb[0].mxu0
        %v2155 = vadd.f32 %v2036, %v2154
        %v2156 = vpop.f32.mrb[0].mxu0
        %2157 = vmatprep.mubr.bf16.mxu0 0
        %2158 = vmatmul.mubr.bf16.gmra.mrb[0].mxu0 %v1988
        %v2159 = vpop.f32.mrb[0].mxu0
        %v2160 = vadd.f32 %v2036, %v2159
        %v2161 = vpop.f32.mrb[0].mxu0
        %v2162 = vpop.f32.mrb[0].mxu0
        %v2163 = vadd.f32 %v2036, %v2162
        %v2164 = vpop.f32.mrb[0].mxu0
        %2165 = vmatprep.mubr.bf16.mxu0 0
        %2166 = vmatmul.mubr.bf16.gmra.mrb[0].mxu0 %v1989
        %v2167 = vpop.f32.mrb[0].mxu0
        %v2168 = vadd.f32 %v2036, %v2167
        %v2169 = vpop.f32.mrb[0].mxu0
        %v2170 = vpop.f32.mrb[0].mxu0
        %v2171 = vadd.f32 %v2036, %v2170
        %v2172 = vpop.f32.mrb[0].mxu0
        %2173 = vmatprep.mubr.bf16.mxu0 0
        %2174 = vmatmul.mubr.bf16.gmra.mrb[0].mxu0 %v1990
        %v2175 = vpop.f32.mrb[0].mxu0
        %v2176 = vadd.f32 %v2036, %v2175
        %v2177 = vpop.f32.mrb[0].mxu0
        %v2178 = vpop.f32.mrb[0].mxu0
        %v2179 = vadd.f32 %v2036, %v2178
        %v2180 = vpop.f32.mrb[0].mxu0
        %2181 = vmatprep.mubr.bf16.mxu0 0
        %2182 = vmatmul.mubr.bf16.gmra.mrb[0].mxu0 %v1991
        %v2183 = vpop.f32.mrb[0].mxu0
        %v2184 = vadd.f32 %v2036, %v2183
        %v2185 = vpop.f32.mrb[0].mxu0
        %v2186 = vpop.f32.mrb[0].mxu0
        %v2187 = vadd.f32 %v2036, %v2186
        %v2188 = vpop.f32.mrb[0].mxu0
        %2189 = vmatprep.mubr.bf16.mxu0 0
        %2190 = vmatmul.mubr.bf16.gmra.mrb[0].mxu0 %v1992
        %v2191 = vpop.f32.mrb[0].mxu0
        %v2192 = vadd.f32 %v2036, %v2191
        %v2193 = vpop.f32.mrb[0].mxu0
        %v2194 = vpop.f32.mrb[0].mxu0
        %v2195 = vadd.f32 %v2036, %v2194
        %v2196 = vpop.f32.mrb[0].mxu0
        %2197 = vmatprep.mubr.bf16.mxu0 0
        %2198 = vmatmul.mubr.bf16.gmra.mrb[0].mxu0 %v1993
        %v2199 = vpop.f32.mrb[0].mxu0
        %v2200 = vadd.f32 %v2036, %v2199
        %v2201 = vpop.f32.mrb[0].mxu0
        %v2202 = vpop.f32.mrb[0].mxu0
        %v2203 = vadd.f32 %v2036, %v2202
        %v2204 = vpop.f32.mrb[0].mxu0
        %2205 = vmatprep.mubr.bf16.mxu0 0
        %2206 = vmatmul.mubr.bf16.gmra.mrb[0].mxu0 %v1994
        %v2207 = vpop.f32.mrb[0].mxu0
        %v2208 = vadd.f32 %v2036, %v2207
        %v2209 = vpop.f32.mrb[0].mxu0
        %v2210 = vpop.f32.mrb[0].mxu0
        %v2211 = vadd.f32 %v2036, %v2210
        %v2212 = vpop.f32.mrb[0].mxu0
        %2213 = vmatprep.mubr.bf16.mxu0 0
        %2214 = vmatmul.mubr.bf16.gmra.mrb[0].mxu0 %v1995
        %v2215 = vpop.f32.mrb[0].mxu0
        %v2216 = vadd.f32 %v2036, %v2215
        %v2217 = vpop.f32.mrb[0].mxu0
        %v2218 = vpop.f32.mrb[0].mxu0
        %v2219 = vadd.f32 %v2036, %v2218
        %v2220 = vpop.f32.mrb[0].mxu0
        %2221 = vmatprep.mubr.bf16.mxu0 0
        %2222 = vmatmul.mubr.bf16.gmra.mrb[0].mxu0 %v1996
        %v2223 = vpop.f32.mrb[0].mxu0
        %v2224 = vadd.f32 %v2036, %v2223
        %v2225 = vpop.f32.mrb[0].mxu0
        %v2226 = vpop.f32.mrb[0].mxu0
        %v2227 = vadd.f32 %v2036, %v2226
        %v2228 = vpop.f32.mrb[0].mxu0
        %2229 = vmatprep.mubr.bf16.mxu0 0
        %2230 = vmatmul.mubr.bf16.gmra.mrb[0].mxu0 %v1997
        %v2231 = vpop.f32.mrb[0].mxu0
        %v2232 = vadd.f32 %v2036, %v2231
        %v2233 = vpop.f32.mrb[0].mxu0
        %v2234 = vpop.f32.mrb[0].mxu0
        %v2235 = vadd.f32 %v2036, %v2234
        %v2236 = vpop.f32.mrb[0].mxu0
        %2237 = vmatprep.mubr.bf16.mxu0 0
        %2238 = vmatmul.mubr.bf16.gmra.mrb[0].mxu0 %v1998
        %v2239 = vpop.f32.mrb[0].mxu0
        %v2240 = vadd.f32 %v2036, %v2239
        %v2241 = vpop.f32.mrb[0].mxu0
        %v2242 = vpop.f32.mrb[0].mxu0
        %v2243 = vadd.f32 %v2036, %v2242
        %v2244 = vpop.f32.mrb[0].mxu0
        %2245 = vmatprep.mubr.bf16.mxu0 0
        %2246 = vmatmul.mubr.bf16.gmra.mrb[0].mxu0 %v1999
        %v2247 = vpop.f32.mrb[0].mxu0
        %v2248 = vadd.f32 %v2036, %v2247
        %v2249 = vpop.f32.mrb[0].mxu0
        %v2250 = vpop.f32.mrb[0].mxu0
        %v2251 = vadd.f32 %v2036, %v2250
        %v2252 = vpop.f32.mrb[0].mxu0
        %2253 = vmatprep.mubr.bf16.mxu0 0
        %2254 = vmatmul.mubr.bf16.gmra.mrb[0].mxu0 %v2000
        %v2255 = vpop.f32.mrb[0].mxu0
        %v2256 = vadd.f32 %v2036, %v2255
        %v2257 = vpop.f32.mrb[0].mxu0
        %v2258 = vpop.f32.mrb[0].mxu0
        %v2259 = vadd.f32 %v2036, %v2258
        %v2260 = vpop.f32.mrb[0].mxu0
        %2261 = vmatprep.mubr.bf16.mxu0 0
        %2262 = vmatmul.mubr.bf16.gmra.mrb[0].mxu0 %v2001
        %v2263 = vpop.f32.mrb[0].mxu0
        %v2264 = vadd.f32 %v2036, %v2263
        %v2265 = vpop.f32.mrb[0].mxu0
        %v2266 = vpop.f32.mrb[0].mxu0
        %v2267 = vadd.f32 %v2036, %v2266
        %v2268 = vpop.f32.mrb[0].mxu0
        %2269 = vmatprep.mubr.bf16.mxu0 0
        %2270 = vmatmul.mubr.bf16.gmra.mrb[0].mxu0 %v2002
        %v2271 = vpop.f32.mrb[0].mxu0
        %v2272 = vadd.f32 %v2036, %v2271
        %v2273 = vpop.f32.mrb[0].mxu0
        %v2274 = vpop.f32.mrb[0].mxu0
        %v2275 = vadd.f32 %v2036, %v2274
        %v2276 = vpop.f32.mrb[0].mxu0
        %2277 = vmatprep.mubr.bf16.mxu0 0
        %2278 = vmatmul.mubr.bf16.gmra.mrb[0].mxu0 %v2003
        %v2279 = vpop.f32.mrb[0].mxu0
        %v2280 = vadd.f32 %v2036, %v2279
        %v2281 = vpop.f32.mrb[0].mxu0
        %v2282 = vpop.f32.mrb[0].mxu0
        %v2283 = vadd.f32 %v2036, %v2282
        %v2284 = vpop.f32.mrb[0].mxu0
        %2285 = vmatprep.mubr.bf16.mxu0 0
        %2286 = vmatmul.mubr.bf16.gmra.mrb[0].mxu0 %v2004
        %v2287 = vpop.f32.mrb[0].mxu0
        %v2288 = vadd.f32 %v2036, %v2287
        %v2289 = vpop.f32.mrb[0].mxu0
        %v2290 = vpop.f32.mrb[0].mxu0
        %v2291 = vadd.f32 %v2036, %v2290
        %v2292 = vpop.f32.mrb[0].mxu0
        %2293 = vmatprep.mubr.bf16.mxu0 0
        %2294 = vmatmul.mubr.bf16.gmra.mrb[0].mxu0 %v2005
        %v2295 = vpop.f32.mrb[0].mxu0
        %v2296 = vadd.f32 %v2036, %v2295
        %v2297 = vpop.f32.mrb[0].mxu0
        %v2298 = vpop.f32.mrb[0].mxu0
        %v2299 = vadd.f32 %v2036, %v2298
        %v2300 = vpop.f32.mrb[0].mxu0
        %2301 = vmatprep.mubr.bf16.mxu0 0
        %2302 = vmatmul.mubr.bf16.gmra.mrb[0].mxu0 %v2006
        %v2303 = vpop.f32.mrb[0].mxu0
        %v2304 = vadd.f32 %v2036, %v2303
        %v2305 = vpop.f32.mrb[0].mxu0
        %v2306 = vpop.f32.mrb[0].mxu0
        %v2307 = vadd.f32 %v2036, %v2306
        %v2308 = vpop.f32.mrb[0].mxu0
        %2309 = vmatprep.mubr.bf16.mxu0 0
        %2310 = vmatmul.mubr.bf16.gmra.mrb[0].mxu0 %v2007
        %v2311 = vpop.f32.mrb[0].mxu0
        %v2312 = vadd.f32 %v2036, %v2311
        %v2313 = vpop.f32.mrb[0].mxu0
        %v2314 = vpop.f32.mrb[0].mxu0
        %v2315 = vadd.f32 %v2036, %v2314
        %v2316 = vpop.f32.mrb[0].mxu0
        %2317 = vmatprep.mubr.bf16.mxu0 0
        %2318 = vmatmul.mubr.bf16.gmra.mrb[0].mxu0 %v2008
        %v2319 = vpop.f32.mrb[0].mxu0
        %v2320 = vadd.f32 %v2036, %v2319
        %v2321 = vpop.f32.mrb[0].mxu0
        %v2322 = vpop.f32.mrb[0].mxu0
        %v2323 = vadd.f32 %v2036, %v2322
        %v2324 = vpop.f32.mrb[0].mxu0
        %2325 = vmatprep.mubr.bf16.mxu0 0
        %2326 = vmatmul.mubr.bf16.gmra.mrb[0].mxu0 %v2009
        %v2327 = vpop.f32.mrb[0].mxu0
        %v2328 = vadd.f32 %v2036, %v2327
        %v2329 = vpop.f32.mrb[0].mxu0
        %v2330 = vpop.f32.mrb[0].mxu0
        %v2331 = vadd.f32 %v2036, %v2330
        %v2332 = vpop.f32.mrb[0].mxu0
        %2333 = vmatprep.mubr.bf16.mxu0 0
        %2334 = vmatmul.mubr.bf16.gmra.mrb[0].mxu0 %v2010
        %v2335 = vpop.f32.mrb[0].mxu0
        %v2336 = vadd.f32 %v2036, %v2335
        %v2337 = vpop.f32.mrb[0].mxu0
        %v2338 = vpop.f32.mrb[0].mxu0
        %v2339 = vadd.f32 %v2036, %v2338
        %v2340 = vpop.f32.mrb[0].mxu0
        %2341 = vmatprep.mubr.bf16.mxu0 0
        %2342 = vmatmul.mubr.bf16.gmra.mrb[0].mxu0 %v2011
        %v2343 = vpop.f32.mrb[0].mxu0
        %v2344 = vadd.f32 %v2036, %v2343
        %v2345 = vpop.f32.mrb[0].mxu0
        %v2346 = vpop.f32.mrb[0].mxu0
        %v2347 = vadd.f32 %v2036, %v2346
        %v2348 = vpop.f32.mrb[0].mxu0
        %2349 = vmatprep.mubr.bf16.mxu0 0
        %2350 = vmatmul.mubr.bf16.gmra.mrb[0].mxu0 %v2012
        %v2351 = vpop.f32.mrb[0].mxu0
        %v2352 = vadd.f32 %v2036, %v2351
        %v2353 = vpop.f32.mrb[0].mxu0
        %v2354 = vpop.f32.mrb[0].mxu0
        %v2355 = vadd.f32 %v2036, %v2354
        %v2356 = vpop.f32.mrb[0].mxu0
        %2357 = vmatprep.mubr.bf16.mxu0 0
        %2358 = vmatmul.mubr.bf16.gmra.mrb[0].mxu0 %v2013
        %v2359 = vpop.f32.mrb[0].mxu0
        %v2360 = vadd.f32 %v2036, %v2359
        %v2361 = vpop.f32.mrb[0].mxu0
        %v2362 = vpop.f32.mrb[0].mxu0
        %v2363 = vadd.f32 %v2036, %v2362
        %v2364 = vpop.f32.mrb[0].mxu0
        %2365 = vmatprep.mubr.bf16.mxu0 0
        %2366 = vmatmul.mubr.bf16.gmra.mrb[0].mxu0 %v2014
        %v2367 = vpop.f32.mrb[0].mxu0
        %v2368 = vadd.f32 %v2036, %v2367
        %v2369 = vpop.f32.mrb[0].mxu0
        %v2370 = vpop.f32.mrb[0].mxu0
        %v2371 = vadd.f32 %v2036, %v2370
        %v2372 = vpop.f32.mrb[0].mxu0
        %2373 = vdwg.mxu0
        %v2374 = vmax.f32 %v2120, 0.0
        %v2375 = vmax.f32 %v2123, 0.0
        %v2376 = vmax.f32 %v2128, 0.0
        %v2377 = vmax.f32 %v2131, 0.0
        %v2378 = vmax.f32 %v2136, 0.0
        %v2379 = vmax.f32 %v2139, 0.0
        %v2380 = vmax.f32 %v2144, 0.0
        %v2381 = vmax.f32 %v2147, 0.0
        %v2382 = vmax.f32 %v2152, 0.0
        %v2383 = vmax.f32 %v2155, 0.0
        %v2384 = vmax.f32 %v2160, 0.0
        %v2385 = vmax.f32 %v2163, 0.0
        %v2386 = vmax.f32 %v2168, 0.0
        %v2387 = vmax.f32 %v2171, 0.0
        %v2388 = vmax.f32 %v2176, 0.0
        %v2389 = vmax.f32 %v2179, 0.0
        %v2390 = vmax.f32 %v2184, 0.0
        %v2391 = vmax.f32 %v2187, 0.0
        %v2392 = vmax.f32 %v2192, 0.0
        %v2393 = vmax.f32 %v2195, 0.0
        %v2394 = vmax.f32 %v2200, 0.0
        %v2395 = vmax.f32 %v2203, 0.0
        %v2396 = vmax.f32 %v2208, 0.0
        %v2397 = vmax.f32 %v2211, 0.0
        %v2398 = vmax.f32 %v2216, 0.0
        %v2399 = vmax.f32 %v2219, 0.0
        %v2400 = vmax.f32 %v2224, 0.0
        %v2401 = vmax.f32 %v2227, 0.0
        %v2402 = vmax.f32 %v2232, 0.0
        %v2403 = vmax.f32 %v2235, 0.0
        %v2404 = vmax.f32 %v2240, 0.0
        %v2405 = vmax.f32 %v2243, 0.0
        %v2406 = vmax.f32 %v2248, 0.0
        %v2407 = vmax.f32 %v2251, 0.0
        %v2408 = vmax.f32 %v2256, 0.0
        %v2409 = vmax.f32 %v2259, 0.0
        %v2410 = vmax.f32 %v2264, 0.0
        %v2411 = vmax.f32 %v2267, 0.0
        %v2412 = vmax.f32 %v2272, 0.0
        %v2413 = vmax.f32 %v2275, 0.0
        %v2414 = vmax.f32 %v2280, 0.0
        %v2415 = vmax.f32 %v2283, 0.0
        %v2416 = vmax.f32 %v2288, 0.0
        %v2417 = vmax.f32 %v2291, 0.0
        %v2418 = vmax.f32 %v2296, 0.0
        %v2419 = vmax.f32 %v2299, 0.0
        %v2420 = vmax.f32 %v2304, 0.0
        %v2421 = vmax.f32 %v2307, 0.0
        %v2422 = vmax.f32 %v2312, 0.0
        %v2423 = vmax.f32 %v2315, 0.0
        %v2424 = vmax.f32 %v2320, 0.0
        %v2425 = vmax.f32 %v2323, 0.0
        %v2426 = vmax.f32 %v2328, 0.0
        %v2427 = vmax.f32 %v2331, 0.0
        %v2428 = vmax.f32 %v2336, 0.0
        %v2429 = vmax.f32 %v2339, 0.0
        %v2430 = vmax.f32 %v2344, 0.0
        %v2431 = vmax.f32 %v2347, 0.0
        %v2432 = vmax.f32 %v2352, 0.0
        %v2433 = vmax.f32 %v2355, 0.0
        %v2434 = vmax.f32 %v2360, 0.0
        %v2435 = vmax.f32 %v2363, 0.0
        %v2436 = vmax.f32 %v2368, 0.0
        %v2437 = vmax.f32 %v2371, 0.0
        %v2438 = vpack.c.bf16 %v2375, %v2374
        %v2439 = vpack.c.bf16 %v2377, %v2376
        %v2440 = vpack.c.bf16 %v2379, %v2378
        %v2441 = vpack.c.bf16 %v2381, %v2380
        %v2442 = vpack.c.bf16 %v2383, %v2382
        %v2443 = vpack.c.bf16 %v2385, %v2384
        %v2444 = vpack.c.bf16 %v2387, %v2386
        %v2445 = vpack.c.bf16 %v2389, %v2388
        %v2446 = vpack.c.bf16 %v2391, %v2390
        %v2447 = vpack.c.bf16 %v2393, %v2392
        %v2448 = vpack.c.bf16 %v2395, %v2394
        %v2449 = vpack.c.bf16 %v2397, %v2396
        %v2450 = vpack.c.bf16 %v2399, %v2398
        %v2451 = vpack.c.bf16 %v2401, %v2400
        %v2452 = vpack.c.bf16 %v2403, %v2402
        %v2453 = vpack.c.bf16 %v2405, %v2404
        %v2454 = vpack.c.bf16 %v2407, %v2406
        %v2455 = vpack.c.bf16 %v2409, %v2408
        %v2456 = vpack.c.bf16 %v2411, %v2410
        %v2457 = vpack.c.bf16 %v2413, %v2412
        %v2458 = vpack.c.bf16 %v2415, %v2414
        %v2459 = vpack.c.bf16 %v2417, %v2416
        %v2460 = vpack.c.bf16 %v2419, %v2418
        %v2461 = vpack.c.bf16 %v2421, %v2420
        %v2462 = vpack.c.bf16 %v2423, %v2422
        %v2463 = vpack.c.bf16 %v2425, %v2424
        %v2464 = vpack.c.bf16 %v2427, %v2426
        %v2465 = vpack.c.bf16 %v2429, %v2428
        %v2466 = vpack.c.bf16 %v2431, %v2430
        %v2467 = vpack.c.bf16 %v2433, %v2432
        %v2468 = vpack.c.bf16 %v2435, %v2434
        %v2469 = vpack.c.bf16 %v2437, %v2436
        %s2470 = scalar_lea.vmem %s2, 192
        %v2471 = vld [vmem:[%s2470] sm:$0xf]
        %v2472 = vld [vmem:[%s2470 + $0x4] sm:$0xf]
        %v2473 = vld [vmem:[%s2470 + $0x8] sm:$0xf]
        %v2474 = vld [vmem:[%s2470 + $0xc] sm:$0xf]
        %v2475 = vld [vmem:[%s2470 + $0x10] sm:$0xf]
        %v2476 = vld [vmem:[%s2470 + $0x14] sm:$0xf]
        %v2477 = vld [vmem:[%s2470 + $0x18] sm:$0xf]
        %v2478 = vld [vmem:[%s2470 + $0x1c] sm:$0xf]
        %v2479 = vld [vmem:[%s2470 + $0x20] sm:$0xf]
        %v2480 = vld [vmem:[%s2470 + $0x24] sm:$0xf]
        %v2481 = vld [vmem:[%s2470 + $0x28] sm:$0xf]
        %v2482 = vld [vmem:[%s2470 + $0x2c] sm:$0xf]
        %v2483 = vld [vmem:[%s2470 + $0x30] sm:$0xf]
        %v2484 = vld [vmem:[%s2470 + $0x34] sm:$0xf]
        %v2485 = vld [vmem:[%s2470 + $0x38] sm:$0xf]
        %v2486 = vld [vmem:[%s2470 + $0x3c] sm:$0xf]
        %v2487 = vld [vmem:[%s3 + $0x4] sm:$0x1]
        %v2488 = vlaneseq
        %v2489 = vshrl.u32 %v2488, 7
        %v2490 = vsub.s32 0, %v2489
        %v2491 = vrot.slane %v2487, %v2490
        %v2508 = vunpack.c.l.b16 %v2471
        %v2509 = vunpack.c.l.b16 %v2472
        %v2510 = vunpack.c.l.b16 %v2473
        %v2511 = vunpack.c.l.b16 %v2474
        %v2512 = vunpack.c.l.b16 %v2475
        %v2513 = vunpack.c.l.b16 %v2476
        %v2514 = vunpack.c.l.b16 %v2477
        %v2515 = vunpack.c.l.b16 %v2478
        %v2516 = vunpack.c.l.b16 %v2479
        %v2517 = vunpack.c.l.b16 %v2480
        %v2518 = vunpack.c.l.b16 %v2481
        %v2519 = vunpack.c.l.b16 %v2482
        %v2520 = vunpack.c.l.b16 %v2483
        %v2521 = vunpack.c.l.b16 %v2484
        %v2522 = vunpack.c.l.b16 %v2485
        %v2523 = vunpack.c.l.b16 %v2486
        %v2524 = vpack.c.b16 %v2509, %v2508
        %v2525 = vpack.c.b16 %v2511, %v2510
        %v2526 = vpack.c.b16 %v2513, %v2512
        %v2527 = vpack.c.b16 %v2515, %v2514
        %v2528 = vpack.c.b16 %v2517, %v2516
        %v2529 = vpack.c.b16 %v2519, %v2518
        %v2530 = vpack.c.b16 %v2521, %v2520
        %v2531 = vpack.c.b16 %v2523, %v2522
        %2540 = vmatprep.subr.bf16.mxu0 0
        %2541 = vmatpush1.bf16.msra.mxu0 %v2524
        %2542 = vmatprep.subr.bf16.mxu0 0
        %2543 = vmatpush1.bf16.msra.mxu0 %v2525
        %2544 = vmatprep.subr.bf16.mxu0 0
        %2545 = vmatpush1.bf16.msra.mxu0 %v2526
        %2546 = vmatprep.subr.bf16.mxu0 0
        %2547 = vmatpush1.bf16.msra.mxu0 %v2527
        %2548 = vmatprep.subr.bf16.mxu0 0
        %2549 = vmatpush1.bf16.msra.mxu0 %v2528
        %2550 = vmatprep.subr.bf16.mxu0 0
        %2551 = vmatpush1.bf16.msra.mxu0 %v2529
        %2552 = vmatprep.subr.bf16.mxu0 0
        %2553 = vmatpush1.bf16.msra.mxu0 %v2530
        %2554 = vmatprep.subr.bf16.mxu0 0
        %2555 = vmatpush1.bf16.msra.mxu0 %v2531
        %2556 = vmatprep.subr.bf16.mxu0 0
        %2557 = vmatpush1.bf16.msra.mxu0 0
        %2558 = vmatprep.subr.bf16.mxu0 0
        %2559 = vmatpush1.bf16.msra.mxu0 0
        %2560 = vmatprep.subr.bf16.mxu0 0
        %2561 = vmatpush1.bf16.msra.mxu0 0
        %2562 = vmatprep.subr.bf16.mxu0 0
        %2563 = vmatpush1.bf16.msra.mxu0 0
        %2564 = vmatprep.subr.bf16.mxu0 0
        %2565 = vmatpush1.bf16.msra.mxu0 0
        %2566 = vmatprep.subr.bf16.mxu0 0
        %2567 = vmatpush1.bf16.msra.mxu0 0
        %2568 = vmatprep.subr.bf16.mxu0 0
        %2569 = vmatpush1.bf16.msra.mxu0 0
        %2570 = vmatprep.subr.bf16.mxu0 0
        %2571 = vmatpush1.bf16.msra.mxu0 0
        %2572 = vmatprep.mubr.bf16.mxu0 0
        %2573 = vmatmul.mubr.bf16.gmra.mrb[0].mxu0 %v2438
        %v2574 = vpop.f32.mrb[0].mxu0
        %v2575 = vadd.f32 %v2491, %v2574
        %v2576 = vpop.f32.mrb[0].mxu0
        %v2577 = vpop.f32.mrb[0].mxu0
        %v2578 = vadd.f32 %v2491, %v2577
        %v2579 = vpop.f32.mrb[0].mxu0
        %2580 = vmatprep.mubr.bf16.mxu0 0
        %2581 = vmatmul.mubr.bf16.gmra.mrb[0].mxu0 %v2439
        %v2582 = vpop.f32.mrb[0].mxu0
        %v2583 = vadd.f32 %v2491, %v2582
        %v2584 = vpop.f32.mrb[0].mxu0
        %v2585 = vpop.f32.mrb[0].mxu0
        %v2586 = vadd.f32 %v2491, %v2585
        %v2587 = vpop.f32.mrb[0].mxu0
        %2588 = vmatprep.mubr.bf16.mxu0 0
        %2589 = vmatmul.mubr.bf16.gmra.mrb[0].mxu0 %v2440
        %v2590 = vpop.f32.mrb[0].mxu0
        %v2591 = vadd.f32 %v2491, %v2590
        %v2592 = vpop.f32.mrb[0].mxu0
        %v2593 = vpop.f32.mrb[0].mxu0
        %v2594 = vadd.f32 %v2491, %v2593
        %v2595 = vpop.f32.mrb[0].mxu0
        %2596 = vmatprep.mubr.bf16.mxu0 0
        %2597 = vmatmul.mubr.bf16.gmra.mrb[0].mxu0 %v2441
        %v2598 = vpop.f32.mrb[0].mxu0
        %v2599 = vadd.f32 %v2491, %v2598
        %v2600 = vpop.f32.mrb[0].mxu0
        %v2601 = vpop.f32.mrb[0].mxu0
        %v2602 = vadd.f32 %v2491, %v2601
        %v2603 = vpop.f32.mrb[0].mxu0
        %2604 = vmatprep.mubr.bf16.mxu0 0
        %2605 = vmatmul.mubr.bf16.gmra.mrb[0].mxu0 %v2442
        %v2606 = vpop.f32.mrb[0].mxu0
        %v2607 = vadd.f32 %v2491, %v2606
        %v2608 = vpop.f32.mrb[0].mxu0
        %v2609 = vpop.f32.mrb[0].mxu0
        %v2610 = vadd.f32 %v2491, %v2609
        %v2611 = vpop.f32.mrb[0].mxu0
        %2612 = vmatprep.mubr.bf16.mxu0 0
        %2613 = vmatmul.mubr.bf16.gmra.mrb[0].mxu0 %v2443
        %v2614 = vpop.f32.mrb[0].mxu0
        %v2615 = vadd.f32 %v2491, %v2614
        %v2616 = vpop.f32.mrb[0].mxu0
        %v2617 = vpop.f32.mrb[0].mxu0
        %v2618 = vadd.f32 %v2491, %v2617
        %v2619 = vpop.f32.mrb[0].mxu0
        %2620 = vmatprep.mubr.bf16.mxu0 0
        %2621 = vmatmul.mubr.bf16.gmra.mrb[0].mxu0 %v2444
        %v2622 = vpop.f32.mrb[0].mxu0
        %v2623 = vadd.f32 %v2491, %v2622
        %v2624 = vpop.f32.mrb[0].mxu0
        %v2625 = vpop.f32.mrb[0].mxu0
        %v2626 = vadd.f32 %v2491, %v2625
        %v2627 = vpop.f32.mrb[0].mxu0
        %2628 = vmatprep.mubr.bf16.mxu0 0
        %2629 = vmatmul.mubr.bf16.gmra.mrb[0].mxu0 %v2445
        %v2630 = vpop.f32.mrb[0].mxu0
        %v2631 = vadd.f32 %v2491, %v2630
        %v2632 = vpop.f32.mrb[0].mxu0
        %v2633 = vpop.f32.mrb[0].mxu0
        %v2634 = vadd.f32 %v2491, %v2633
        %v2635 = vpop.f32.mrb[0].mxu0
        %2636 = vmatprep.mubr.bf16.mxu0 0
        %2637 = vmatmul.mubr.bf16.gmra.mrb[0].mxu0 %v2446
        %v2638 = vpop.f32.mrb[0].mxu0
        %v2639 = vadd.f32 %v2491, %v2638
        %v2640 = vpop.f32.mrb[0].mxu0
        %v2641 = vpop.f32.mrb[0].mxu0
        %v2642 = vadd.f32 %v2491, %v2641
        %v2643 = vpop.f32.mrb[0].mxu0
        %2644 = vmatprep.mubr.bf16.mxu0 0
        %2645 = vmatmul.mubr.bf16.gmra.mrb[0].mxu0 %v2447
        %v2646 = vpop.f32.mrb[0].mxu0
        %v2647 = vadd.f32 %v2491, %v2646
        %v2648 = vpop.f32.mrb[0].mxu0
        %v2649 = vpop.f32.mrb[0].mxu0
        %v2650 = vadd.f32 %v2491, %v2649
        %v2651 = vpop.f32.mrb[0].mxu0
        %2652 = vmatprep.mubr.bf16.mxu0 0
        %2653 = vmatmul.mubr.bf16.gmra.mrb[0].mxu0 %v2448
        %v2654 = vpop.f32.mrb[0].mxu0
        %v2655 = vadd.f32 %v2491, %v2654
        %v2656 = vpop.f32.mrb[0].mxu0
        %v2657 = vpop.f32.mrb[0].mxu0
        %v2658 = vadd.f32 %v2491, %v2657
        %v2659 = vpop.f32.mrb[0].mxu0
        %2660 = vmatprep.mubr.bf16.mxu0 0
        %2661 = vmatmul.mubr.bf16.gmra.mrb[0].mxu0 %v2449
        %v2662 = vpop.f32.mrb[0].mxu0
        %v2663 = vadd.f32 %v2491, %v2662
        %v2664 = vpop.f32.mrb[0].mxu0
        %v2665 = vpop.f32.mrb[0].mxu0
        %v2666 = vadd.f32 %v2491, %v2665
        %v2667 = vpop.f32.mrb[0].mxu0
        %2668 = vmatprep.mubr.bf16.mxu0 0
        %2669 = vmatmul.mubr.bf16.gmra.mrb[0].mxu0 %v2450
        %v2670 = vpop.f32.mrb[0].mxu0
        %v2671 = vadd.f32 %v2491, %v2670
        %v2672 = vpop.f32.mrb[0].mxu0
        %v2673 = vpop.f32.mrb[0].mxu0
        %v2674 = vadd.f32 %v2491, %v2673
        %v2675 = vpop.f32.mrb[0].mxu0
        %2676 = vmatprep.mubr.bf16.mxu0 0
        %2677 = vmatmul.mubr.bf16.gmra.mrb[0].mxu0 %v2451
        %v2678 = vpop.f32.mrb[0].mxu0
        %v2679 = vadd.f32 %v2491, %v2678
        %v2680 = vpop.f32.mrb[0].mxu0
        %v2681 = vpop.f32.mrb[0].mxu0
        %v2682 = vadd.f32 %v2491, %v2681
        %v2683 = vpop.f32.mrb[0].mxu0
        %2684 = vmatprep.mubr.bf16.mxu0 0
        %2685 = vmatmul.mubr.bf16.gmra.mrb[0].mxu0 %v2452
        %v2686 = vpop.f32.mrb[0].mxu0
        %v2687 = vadd.f32 %v2491, %v2686
        %v2688 = vpop.f32.mrb[0].mxu0
        %v2689 = vpop.f32.mrb[0].mxu0
        %v2690 = vadd.f32 %v2491, %v2689
        %v2691 = vpop.f32.mrb[0].mxu0
        %2692 = vmatprep.mubr.bf16.mxu0 0
        %2693 = vmatmul.mubr.bf16.gmra.mrb[0].mxu0 %v2453
        %v2694 = vpop.f32.mrb[0].mxu0
        %v2695 = vadd.f32 %v2491, %v2694
        %v2696 = vpop.f32.mrb[0].mxu0
        %v2697 = vpop.f32.mrb[0].mxu0
        %v2698 = vadd.f32 %v2491, %v2697
        %v2699 = vpop.f32.mrb[0].mxu0
        %2700 = vmatprep.mubr.bf16.mxu0 0
        %2701 = vmatmul.mubr.bf16.gmra.mrb[0].mxu0 %v2454
        %v2702 = vpop.f32.mrb[0].mxu0
        %v2703 = vadd.f32 %v2491, %v2702
        %v2704 = vpop.f32.mrb[0].mxu0
        %v2705 = vpop.f32.mrb[0].mxu0
        %v2706 = vadd.f32 %v2491, %v2705
        %v2707 = vpop.f32.mrb[0].mxu0
        %2708 = vmatprep.mubr.bf16.mxu0 0
        %2709 = vmatmul.mubr.bf16.gmra.mrb[0].mxu0 %v2455
        %v2710 = vpop.f32.mrb[0].mxu0
        %v2711 = vadd.f32 %v2491, %v2710
        %v2712 = vpop.f32.mrb[0].mxu0
        %v2713 = vpop.f32.mrb[0].mxu0
        %v2714 = vadd.f32 %v2491, %v2713
        %v2715 = vpop.f32.mrb[0].mxu0
        %2716 = vmatprep.mubr.bf16.mxu0 0
        %2717 = vmatmul.mubr.bf16.gmra.mrb[0].mxu0 %v2456
        %v2718 = vpop.f32.mrb[0].mxu0
        %v2719 = vadd.f32 %v2491, %v2718
        %v2720 = vpop.f32.mrb[0].mxu0
        %v2721 = vpop.f32.mrb[0].mxu0
        %v2722 = vadd.f32 %v2491, %v2721
        %v2723 = vpop.f32.mrb[0].mxu0
        %2724 = vmatprep.mubr.bf16.mxu0 0
        %2725 = vmatmul.mubr.bf16.gmra.mrb[0].mxu0 %v2457
        %v2726 = vpop.f32.mrb[0].mxu0
        %v2727 = vadd.f32 %v2491, %v2726
        %v2728 = vpop.f32.mrb[0].mxu0
        %v2729 = vpop.f32.mrb[0].mxu0
        %v2730 = vadd.f32 %v2491, %v2729
        %v2731 = vpop.f32.mrb[0].mxu0
        %2732 = vmatprep.mubr.bf16.mxu0 0
        %2733 = vmatmul.mubr.bf16.gmra.mrb[0].mxu0 %v2458
        %v2734 = vpop.f32.mrb[0].mxu0
        %v2735 = vadd.f32 %v2491, %v2734
        %v2736 = vpop.f32.mrb[0].mxu0
        %v2737 = vpop.f32.mrb[0].mxu0
        %v2738 = vadd.f32 %v2491, %v2737
        %v2739 = vpop.f32.mrb[0].mxu0
        %2740 = vmatprep.mubr.bf16.mxu0 0
        %2741 = vmatmul.mubr.bf16.gmra.mrb[0].mxu0 %v2459
        %v2742 = vpop.f32.mrb[0].mxu0
        %v2743 = vadd.f32 %v2491, %v2742
        %v2744 = vpop.f32.mrb[0].mxu0
        %v2745 = vpop.f32.mrb[0].mxu0
        %v2746 = vadd.f32 %v2491, %v2745
        %v2747 = vpop.f32.mrb[0].mxu0
        %2748 = vmatprep.mubr.bf16.mxu0 0
        %2749 = vmatmul.mubr.bf16.gmra.mrb[0].mxu0 %v2460
        %v2750 = vpop.f32.mrb[0].mxu0
        %v2751 = vadd.f32 %v2491, %v2750
        %v2752 = vpop.f32.mrb[0].mxu0
        %v2753 = vpop.f32.mrb[0].mxu0
        %v2754 = vadd.f32 %v2491, %v2753
        %v2755 = vpop.f32.mrb[0].mxu0
        %2756 = vmatprep.mubr.bf16.mxu0 0
        %2757 = vmatmul.mubr.bf16.gmra.mrb[0].mxu0 %v2461
        %v2758 = vpop.f32.mrb[0].mxu0
        %v2759 = vadd.f32 %v2491, %v2758
        %v2760 = vpop.f32.mrb[0].mxu0
        %v2761 = vpop.f32.mrb[0].mxu0
        %v2762 = vadd.f32 %v2491, %v2761
        %v2763 = vpop.f32.mrb[0].mxu0
        %2764 = vmatprep.mubr.bf16.mxu0 0
        %2765 = vmatmul.mubr.bf16.gmra.mrb[0].mxu0 %v2462
        %v2766 = vpop.f32.mrb[0].mxu0
        %v2767 = vadd.f32 %v2491, %v2766
        %v2768 = vpop.f32.mrb[0].mxu0
        %v2769 = vpop.f32.mrb[0].mxu0
        %v2770 = vadd.f32 %v2491, %v2769
        %v2771 = vpop.f32.mrb[0].mxu0
        %2772 = vmatprep.mubr.bf16.mxu0 0
        %2773 = vmatmul.mubr.bf16.gmra.mrb[0].mxu0 %v2463
        %v2774 = vpop.f32.mrb[0].mxu0
        %v2775 = vadd.f32 %v2491, %v2774
        %v2776 = vpop.f32.mrb[0].mxu0
        %v2777 = vpop.f32.mrb[0].mxu0
        %v2778 = vadd.f32 %v2491, %v2777
        %v2779 = vpop.f32.mrb[0].mxu0
        %2780 = vmatprep.mubr.bf16.mxu0 0
        %2781 = vmatmul.mubr.bf16.gmra.mrb[0].mxu0 %v2464
        %v2782 = vpop.f32.mrb[0].mxu0
        %v2783 = vadd.f32 %v2491, %v2782
        %v2784 = vpop.f32.mrb[0].mxu0
        %v2785 = vpop.f32.mrb[0].mxu0
        %v2786 = vadd.f32 %v2491, %v2785
        %v2787 = vpop.f32.mrb[0].mxu0
        %2788 = vmatprep.mubr.bf16.mxu0 0
        %2789 = vmatmul.mubr.bf16.gmra.mrb[0].mxu0 %v2465
        %v2790 = vpop.f32.mrb[0].mxu0
        %v2791 = vadd.f32 %v2491, %v2790
        %v2792 = vpop.f32.mrb[0].mxu0
        %v2793 = vpop.f32.mrb[0].mxu0
        %v2794 = vadd.f32 %v2491, %v2793
        %v2795 = vpop.f32.mrb[0].mxu0
        %2796 = vmatprep.mubr.bf16.mxu0 0
        %2797 = vmatmul.mubr.bf16.gmra.mrb[0].mxu0 %v2466
        %v2798 = vpop.f32.mrb[0].mxu0
        %v2799 = vadd.f32 %v2491, %v2798
        %v2800 = vpop.f32.mrb[0].mxu0
        %v2801 = vpop.f32.mrb[0].mxu0
        %v2802 = vadd.f32 %v2491, %v2801
        %v2803 = vpop.f32.mrb[0].mxu0
        %2804 = vmatprep.mubr.bf16.mxu0 0
        %2805 = vmatmul.mubr.bf16.gmra.mrb[0].mxu0 %v2467
        %v2806 = vpop.f32.mrb[0].mxu0
        %v2807 = vadd.f32 %v2491, %v2806
        %v2808 = vpop.f32.mrb[0].mxu0
        %v2809 = vpop.f32.mrb[0].mxu0
        %v2810 = vadd.f32 %v2491, %v2809
        %v2811 = vpop.f32.mrb[0].mxu0
        %2812 = vmatprep.mubr.bf16.mxu0 0
        %2813 = vmatmul.mubr.bf16.gmra.mrb[0].mxu0 %v2468
        %v2814 = vpop.f32.mrb[0].mxu0
        %v2815 = vadd.f32 %v2491, %v2814
        %v2816 = vpop.f32.mrb[0].mxu0
        %v2817 = vpop.f32.mrb[0].mxu0
        %v2818 = vadd.f32 %v2491, %v2817
        %v2819 = vpop.f32.mrb[0].mxu0
        %2820 = vmatprep.mubr.bf16.mxu0 0
        %2821 = vmatmul.mubr.bf16.gmra.mrb[0].mxu0 %v2469
        %v2822 = vpop.f32.mrb[0].mxu0
        %v2823 = vadd.f32 %v2491, %v2822
        %v2824 = vpop.f32.mrb[0].mxu0
        %v2825 = vpop.f32.mrb[0].mxu0
        %v2826 = vadd.f32 %v2491, %v2825
        %v2827 = vpop.f32.mrb[0].mxu0
        %2828 = vdwg.mxu0
        %v2829 = vmax.f32 %v2575, 0.0
        %v2830 = vmax.f32 %v2578, 0.0
        %v2831 = vmax.f32 %v2583, 0.0
        %v2832 = vmax.f32 %v2586, 0.0
        %v2833 = vmax.f32 %v2591, 0.0
        %v2834 = vmax.f32 %v2594, 0.0
        %v2835 = vmax.f32 %v2599, 0.0
        %v2836 = vmax.f32 %v2602, 0.0
        %v2837 = vmax.f32 %v2607, 0.0
        %v2838 = vmax.f32 %v2610, 0.0
        %v2839 = vmax.f32 %v2615, 0.0
        %v2840 = vmax.f32 %v2618, 0.0
        %v2841 = vmax.f32 %v2623, 0.0
        %v2842 = vmax.f32 %v2626, 0.0
        %v2843 = vmax.f32 %v2631, 0.0
        %v2844 = vmax.f32 %v2634, 0.0
        %v2845 = vmax.f32 %v2639, 0.0
        %v2846 = vmax.f32 %v2642, 0.0
        %v2847 = vmax.f32 %v2647, 0.0
        %v2848 = vmax.f32 %v2650, 0.0
        %v2849 = vmax.f32 %v2655, 0.0
        %v2850 = vmax.f32 %v2658, 0.0
        %v2851 = vmax.f32 %v2663, 0.0
        %v2852 = vmax.f32 %v2666, 0.0
        %v2853 = vmax.f32 %v2671, 0.0
        %v2854 = vmax.f32 %v2674, 0.0
        %v2855 = vmax.f32 %v2679, 0.0
        %v2856 = vmax.f32 %v2682, 0.0
        %v2857 = vmax.f32 %v2687, 0.0
        %v2858 = vmax.f32 %v2690, 0.0
        %v2859 = vmax.f32 %v2695, 0.0
        %v2860 = vmax.f32 %v2698, 0.0
        %v2861 = vmax.f32 %v2703, 0.0
        %v2862 = vmax.f32 %v2706, 0.0
        %v2863 = vmax.f32 %v2711, 0.0
        %v2864 = vmax.f32 %v2714, 0.0
        %v2865 = vmax.f32 %v2719, 0.0
        %v2866 = vmax.f32 %v2722, 0.0
        %v2867 = vmax.f32 %v2727, 0.0
        %v2868 = vmax.f32 %v2730, 0.0
        %v2869 = vmax.f32 %v2735, 0.0
        %v2870 = vmax.f32 %v2738, 0.0
        %v2871 = vmax.f32 %v2743, 0.0
        %v2872 = vmax.f32 %v2746, 0.0
        %v2873 = vmax.f32 %v2751, 0.0
        %v2874 = vmax.f32 %v2754, 0.0
        %v2875 = vmax.f32 %v2759, 0.0
        %v2876 = vmax.f32 %v2762, 0.0
        %v2877 = vmax.f32 %v2767, 0.0
        %v2878 = vmax.f32 %v2770, 0.0
        %v2879 = vmax.f32 %v2775, 0.0
        %v2880 = vmax.f32 %v2778, 0.0
        %v2881 = vmax.f32 %v2783, 0.0
        %v2882 = vmax.f32 %v2786, 0.0
        %v2883 = vmax.f32 %v2791, 0.0
        %v2884 = vmax.f32 %v2794, 0.0
        %v2885 = vmax.f32 %v2799, 0.0
        %v2886 = vmax.f32 %v2802, 0.0
        %v2887 = vmax.f32 %v2807, 0.0
        %v2888 = vmax.f32 %v2810, 0.0
        %v2889 = vmax.f32 %v2815, 0.0
        %v2890 = vmax.f32 %v2818, 0.0
        %v2891 = vmax.f32 %v2823, 0.0
        %v2892 = vmax.f32 %v2826, 0.0
        %v2893 = vpack.c.bf16 %v2830, %v2829
        %v2894 = vpack.c.bf16 %v2832, %v2831
        %v2895 = vpack.c.bf16 %v2834, %v2833
        %v2896 = vpack.c.bf16 %v2836, %v2835
        %v2897 = vpack.c.bf16 %v2838, %v2837
        %v2898 = vpack.c.bf16 %v2840, %v2839
        %v2899 = vpack.c.bf16 %v2842, %v2841
        %v2900 = vpack.c.bf16 %v2844, %v2843
        %v2901 = vpack.c.bf16 %v2846, %v2845
        %v2902 = vpack.c.bf16 %v2848, %v2847
        %v2903 = vpack.c.bf16 %v2850, %v2849
        %v2904 = vpack.c.bf16 %v2852, %v2851
        %v2905 = vpack.c.bf16 %v2854, %v2853
        %v2906 = vpack.c.bf16 %v2856, %v2855
        %v2907 = vpack.c.bf16 %v2858, %v2857
        %v2908 = vpack.c.bf16 %v2860, %v2859
        %v2909 = vpack.c.bf16 %v2862, %v2861
        %v2910 = vpack.c.bf16 %v2864, %v2863
        %v2911 = vpack.c.bf16 %v2866, %v2865
        %v2912 = vpack.c.bf16 %v2868, %v2867
        %v2913 = vpack.c.bf16 %v2870, %v2869
        %v2914 = vpack.c.bf16 %v2872, %v2871
        %v2915 = vpack.c.bf16 %v2874, %v2873
        %v2916 = vpack.c.bf16 %v2876, %v2875
        %v2917 = vpack.c.bf16 %v2878, %v2877
        %v2918 = vpack.c.bf16 %v2880, %v2879
        %v2919 = vpack.c.bf16 %v2882, %v2881
        %v2920 = vpack.c.bf16 %v2884, %v2883
        %v2921 = vpack.c.bf16 %v2886, %v2885
        %v2922 = vpack.c.bf16 %v2888, %v2887
        %v2923 = vpack.c.bf16 %v2890, %v2889
        %v2924 = vpack.c.bf16 %v2892, %v2891
        %s2925 = scalar_lea.vmem %s2, 256
        %v2926 = vld [vmem:[%s2925] sm:$0xf]
        %v2927 = vld [vmem:[%s2925 + $0x4] sm:$0xf]
        %v2928 = vld [vmem:[%s2925 + $0x8] sm:$0xf]
        %v2929 = vld [vmem:[%s2925 + $0xc] sm:$0xf]
        %v2930 = vld [vmem:[%s2925 + $0x10] sm:$0xf]
        %v2931 = vld [vmem:[%s2925 + $0x14] sm:$0xf]
        %v2932 = vld [vmem:[%s2925 + $0x18] sm:$0xf]
        %v2933 = vld [vmem:[%s2925 + $0x1c] sm:$0xf]
        %v2934 = vld [vmem:[%s2925 + $0x20] sm:$0xf]
        %v2935 = vld [vmem:[%s2925 + $0x24] sm:$0xf]
        %v2936 = vld [vmem:[%s2925 + $0x28] sm:$0xf]
        %v2937 = vld [vmem:[%s2925 + $0x2c] sm:$0xf]
        %v2938 = vld [vmem:[%s2925 + $0x30] sm:$0xf]
        %v2939 = vld [vmem:[%s2925 + $0x34] sm:$0xf]
        %v2940 = vld [vmem:[%s2925 + $0x38] sm:$0xf]
        %v2941 = vld [vmem:[%s2925 + $0x3c] sm:$0xf]
        %v2958 = vunpack.c.l.b16 %v2926
        %v2959 = vunpack.c.l.b16 %v2927
        %v2960 = vunpack.c.l.b16 %v2928
        %v2961 = vunpack.c.l.b16 %v2929
        %v2962 = vunpack.c.l.b16 %v2930
        %v2963 = vunpack.c.l.b16 %v2931
        %v2964 = vunpack.c.l.b16 %v2932
        %v2965 = vunpack.c.l.b16 %v2933
        %v2966 = vunpack.c.l.b16 %v2934
        %v2967 = vunpack.c.l.b16 %v2935
        %v2968 = vunpack.c.l.b16 %v2936
        %v2969 = vunpack.c.l.b16 %v2937
        %v2970 = vunpack.c.l.b16 %v2938
        %v2971 = vunpack.c.l.b16 %v2939
        %v2972 = vunpack.c.l.b16 %v2940
        %v2973 = vunpack.c.l.b16 %v2941
        %v2974 = vpack.c.b16 %v2959, %v2958
        %v2975 = vpack.c.b16 %v2961, %v2960
        %v2976 = vpack.c.b16 %v2963, %v2962
        %v2977 = vpack.c.b16 %v2965, %v2964
        %v2978 = vpack.c.b16 %v2967, %v2966
        %v2979 = vpack.c.b16 %v2969, %v2968
        %v2980 = vpack.c.b16 %v2971, %v2970
        %v2981 = vpack.c.b16 %v2973, %v2972
        %2990 = vmatprep.subr.bf16.mxu0 0
        %2991 = vmatpush1.bf16.msra.mxu0 %v2974
        %2992 = vmatprep.subr.bf16.mxu0 0
        %2993 = vmatpush1.bf16.msra.mxu0 %v2975
        %2994 = vmatprep.subr.bf16.mxu0 0
        %2995 = vmatpush1.bf16.msra.mxu0 %v2976
        %2996 = vmatprep.subr.bf16.mxu0 0
        %2997 = vmatpush1.bf16.msra.mxu0 %v2977
        %2998 = vmatprep.subr.bf16.mxu0 0
        %2999 = vmatpush1.bf16.msra.mxu0 %v2978
        %3000 = vmatprep.subr.bf16.mxu0 0
        %3001 = vmatpush1.bf16.msra.mxu0 %v2979
        %3002 = vmatprep.subr.bf16.mxu0 0
        %3003 = vmatpush1.bf16.msra.mxu0 %v2980
        %3004 = vmatprep.subr.bf16.mxu0 0
        %3005 = vmatpush1.bf16.msra.mxu0 %v2981
        %3006 = vmatprep.subr.bf16.mxu0 0
        %3007 = vmatpush1.bf16.msra.mxu0 0
        %3008 = vmatprep.subr.bf16.mxu0 0
        %3009 = vmatpush1.bf16.msra.mxu0 0
        %3010 = vmatprep.subr.bf16.mxu0 0
        %3011 = vmatpush1.bf16.msra.mxu0 0
        %3012 = vmatprep.subr.bf16.mxu0 0
        %3013 = vmatpush1.bf16.msra.mxu0 0
        %3014 = vmatprep.subr.bf16.mxu0 0
        %3015 = vmatpush1.bf16.msra.mxu0 0
        %3016 = vmatprep.subr.bf16.mxu0 0
        %3017 = vmatpush1.bf16.msra.mxu0 0
        %3018 = vmatprep.subr.bf16.mxu0 0
        %3019 = vmatpush1.bf16.msra.mxu0 0
        %3020 = vmatprep.subr.bf16.mxu0 0
        %3021 = vmatpush1.bf16.msra.mxu0 0
        %3022 = vmatprep.mubr.bf16.mxu0 0
        %3023 = vmatmul.mubr.bf16.gmra.mrb[0].mxu0 %v2893
        %v3024 = vpop.f32.mrb[0].mxu0
        %v3025 = vadd.f32 %v625, %v3024
        %v3026 = vpop.f32.mrb[0].mxu0
        %v3027 = vpop.f32.mrb[0].mxu0
        %v3028 = vadd.f32 %v629, %v3027
        %v3029 = vpop.f32.mrb[0].mxu0
        %3030 = vmatprep.mubr.bf16.mxu0 0
        %3031 = vmatmul.mubr.bf16.gmra.mrb[0].mxu0 %v2894
        %v3032 = vpop.f32.mrb[0].mxu0
        %v3033 = vadd.f32 %v635, %v3032
        %v3034 = vpop.f32.mrb[0].mxu0
        %v3035 = vpop.f32.mrb[0].mxu0
        %v3036 = vadd.f32 %v639, %v3035
        %v3037 = vpop.f32.mrb[0].mxu0
        %3038 = vmatprep.mubr.bf16.mxu0 0
        %3039 = vmatmul.mubr.bf16.gmra.mrb[0].mxu0 %v2895
        %v3040 = vpop.f32.mrb[0].mxu0
        %v3041 = vadd.f32 %v645, %v3040
        %v3042 = vpop.f32.mrb[0].mxu0
        %v3043 = vpop.f32.mrb[0].mxu0
        %v3044 = vadd.f32 %v649, %v3043
        %v3045 = vpop.f32.mrb[0].mxu0
        %3046 = vmatprep.mubr.bf16.mxu0 0
        %3047 = vmatmul.mubr.bf16.gmra.mrb[0].mxu0 %v2896
        %v3048 = vpop.f32.mrb[0].mxu0
        %v3049 = vadd.f32 %v655, %v3048
        %v3050 = vpop.f32.mrb[0].mxu0
        %v3051 = vpop.f32.mrb[0].mxu0
        %v3052 = vadd.f32 %v659, %v3051
        %v3053 = vpop.f32.mrb[0].mxu0
        %3054 = vmatprep.mubr.bf16.mxu0 0
        %3055 = vmatmul.mubr.bf16.gmra.mrb[0].mxu0 %v2897
        %v3056 = vpop.f32.mrb[0].mxu0
        %v3057 = vadd.f32 %v665, %v3056
        %v3058 = vpop.f32.mrb[0].mxu0
        %v3059 = vpop.f32.mrb[0].mxu0
        %v3060 = vadd.f32 %v669, %v3059
        %v3061 = vpop.f32.mrb[0].mxu0
        %3062 = vmatprep.mubr.bf16.mxu0 0
        %3063 = vmatmul.mubr.bf16.gmra.mrb[0].mxu0 %v2898
        %v3064 = vpop.f32.mrb[0].mxu0
        %v3065 = vadd.f32 %v675, %v3064
        %v3066 = vpop.f32.mrb[0].mxu0
        %v3067 = vpop.f32.mrb[0].mxu0
        %v3068 = vadd.f32 %v679, %v3067
        %v3069 = vpop.f32.mrb[0].mxu0
        %3070 = vmatprep.mubr.bf16.mxu0 0
        %3071 = vmatmul.mubr.bf16.gmra.mrb[0].mxu0 %v2899
        %v3072 = vpop.f32.mrb[0].mxu0
        %v3073 = vadd.f32 %v685, %v3072
        %v3074 = vpop.f32.mrb[0].mxu0
        %v3075 = vpop.f32.mrb[0].mxu0
        %v3076 = vadd.f32 %v689, %v3075
        %v3077 = vpop.f32.mrb[0].mxu0
        %3078 = vmatprep.mubr.bf16.mxu0 0
        %3079 = vmatmul.mubr.bf16.gmra.mrb[0].mxu0 %v2900
        %v3080 = vpop.f32.mrb[0].mxu0
        %v3081 = vadd.f32 %v695, %v3080
        %v3082 = vpop.f32.mrb[0].mxu0
        %v3083 = vpop.f32.mrb[0].mxu0
        %v3084 = vadd.f32 %v699, %v3083
        %v3085 = vpop.f32.mrb[0].mxu0
        %3086 = vmatprep.mubr.bf16.mxu0 0
        %3087 = vmatmul.mubr.bf16.gmra.mrb[0].mxu0 %v2901
        %v3088 = vpop.f32.mrb[0].mxu0
        %v3089 = vadd.f32 %v705, %v3088
        %v3090 = vpop.f32.mrb[0].mxu0
        %v3091 = vpop.f32.mrb[0].mxu0
        %v3092 = vadd.f32 %v709, %v3091
        %v3093 = vpop.f32.mrb[0].mxu0
        %3094 = vmatprep.mubr.bf16.mxu0 0
        %3095 = vmatmul.mubr.bf16.gmra.mrb[0].mxu0 %v2902
        %v3096 = vpop.f32.mrb[0].mxu0
        %v3097 = vadd.f32 %v715, %v3096
        %v3098 = vpop.f32.mrb[0].mxu0
        %v3099 = vpop.f32.mrb[0].mxu0
        %v3100 = vadd.f32 %v719, %v3099
        %v3101 = vpop.f32.mrb[0].mxu0
        %3102 = vmatprep.mubr.bf16.mxu0 0
        %3103 = vmatmul.mubr.bf16.gmra.mrb[0].mxu0 %v2903
        %v3104 = vpop.f32.mrb[0].mxu0
        %v3105 = vadd.f32 %v725, %v3104
        %v3106 = vpop.f32.mrb[0].mxu0
        %v3107 = vpop.f32.mrb[0].mxu0
        %v3108 = vadd.f32 %v729, %v3107
        %v3109 = vpop.f32.mrb[0].mxu0
        %3110 = vmatprep.mubr.bf16.mxu0 0
        %3111 = vmatmul.mubr.bf16.gmra.mrb[0].mxu0 %v2904
        %v3112 = vpop.f32.mrb[0].mxu0
        %v3113 = vadd.f32 %v735, %v3112
        %v3114 = vpop.f32.mrb[0].mxu0
        %v3115 = vpop.f32.mrb[0].mxu0
        %v3116 = vadd.f32 %v739, %v3115
        %v3117 = vpop.f32.mrb[0].mxu0
        %3118 = vmatprep.mubr.bf16.mxu0 0
        %3119 = vmatmul.mubr.bf16.gmra.mrb[0].mxu0 %v2905
        %v3120 = vpop.f32.mrb[0].mxu0
        %v3121 = vadd.f32 %v745, %v3120
        %v3122 = vpop.f32.mrb[0].mxu0
        %v3123 = vpop.f32.mrb[0].mxu0
        %v3124 = vadd.f32 %v749, %v3123
        %v3125 = vpop.f32.mrb[0].mxu0
        %3126 = vmatprep.mubr.bf16.mxu0 0
        %3127 = vmatmul.mubr.bf16.gmra.mrb[0].mxu0 %v2906
        %v3128 = vpop.f32.mrb[0].mxu0
        %v3129 = vadd.f32 %v755, %v3128
        %v3130 = vpop.f32.mrb[0].mxu0
        %v3131 = vpop.f32.mrb[0].mxu0
        %v3132 = vadd.f32 %v759, %v3131
        %v3133 = vpop.f32.mrb[0].mxu0
        %3134 = vmatprep.mubr.bf16.mxu0 0
        %3135 = vmatmul.mubr.bf16.gmra.mrb[0].mxu0 %v2907
        %v3136 = vpop.f32.mrb[0].mxu0
        %v3137 = vadd.f32 %v765, %v3136
        %v3138 = vpop.f32.mrb[0].mxu0
        %v3139 = vpop.f32.mrb[0].mxu0
        %v3140 = vadd.f32 %v769, %v3139
        %v3141 = vpop.f32.mrb[0].mxu0
        %3142 = vmatprep.mubr.bf16.mxu0 0
        %3143 = vmatmul.mubr.bf16.gmra.mrb[0].mxu0 %v2908
        %v3144 = vpop.f32.mrb[0].mxu0
        %v3145 = vadd.f32 %v775, %v3144
        %v3146 = vpop.f32.mrb[0].mxu0
        %v3147 = vpop.f32.mrb[0].mxu0
        %v3148 = vadd.f32 %v779, %v3147
        %v3149 = vpop.f32.mrb[0].mxu0
        %3150 = vmatprep.mubr.bf16.mxu0 0
        %3151 = vmatmul.mubr.bf16.gmra.mrb[0].mxu0 %v2909
        %v3152 = vpop.f32.mrb[0].mxu0
        %v3153 = vadd.f32 %v785, %v3152
        %v3154 = vpop.f32.mrb[0].mxu0
        %v3155 = vpop.f32.mrb[0].mxu0
        %v3156 = vadd.f32 %v789, %v3155
        %v3157 = vpop.f32.mrb[0].mxu0
        %3158 = vmatprep.mubr.bf16.mxu0 0
        %3159 = vmatmul.mubr.bf16.gmra.mrb[0].mxu0 %v2910
        %v3160 = vpop.f32.mrb[0].mxu0
        %v3161 = vadd.f32 %v795, %v3160
        %v3162 = vpop.f32.mrb[0].mxu0
        %v3163 = vpop.f32.mrb[0].mxu0
        %v3164 = vadd.f32 %v799, %v3163
        %v3165 = vpop.f32.mrb[0].mxu0
        %3166 = vmatprep.mubr.bf16.mxu0 0
        %3167 = vmatmul.mubr.bf16.gmra.mrb[0].mxu0 %v2911
        %v3168 = vpop.f32.mrb[0].mxu0
        %v3169 = vadd.f32 %v805, %v3168
        %v3170 = vpop.f32.mrb[0].mxu0
        %v3171 = vpop.f32.mrb[0].mxu0
        %v3172 = vadd.f32 %v809, %v3171
        %v3173 = vpop.f32.mrb[0].mxu0
        %3174 = vmatprep.mubr.bf16.mxu0 0
        %3175 = vmatmul.mubr.bf16.gmra.mrb[0].mxu0 %v2912
        %v3176 = vpop.f32.mrb[0].mxu0
        %v3177 = vadd.f32 %v815, %v3176
        %v3178 = vpop.f32.mrb[0].mxu0
        %v3179 = vpop.f32.mrb[0].mxu0
        %v3180 = vadd.f32 %v819, %v3179
        %v3181 = vpop.f32.mrb[0].mxu0
        %3182 = vmatprep.mubr.bf16.mxu0 0
        %3183 = vmatmul.mubr.bf16.gmra.mrb[0].mxu0 %v2913
        %v3184 = vpop.f32.mrb[0].mxu0
        %v3185 = vadd.f32 %v825, %v3184
        %v3186 = vpop.f32.mrb[0].mxu0
        %v3187 = vpop.f32.mrb[0].mxu0
        %v3188 = vadd.f32 %v829, %v3187
        %v3189 = vpop.f32.mrb[0].mxu0
        %3190 = vmatprep.mubr.bf16.mxu0 0
        %3191 = vmatmul.mubr.bf16.gmra.mrb[0].mxu0 %v2914
        %v3192 = vpop.f32.mrb[0].mxu0
        %v3193 = vadd.f32 %v835, %v3192
        %v3194 = vpop.f32.mrb[0].mxu0
        %v3195 = vpop.f32.mrb[0].mxu0
        %v3196 = vadd.f32 %v839, %v3195
        %v3197 = vpop.f32.mrb[0].mxu0
        %3198 = vmatprep.mubr.bf16.mxu0 0
        %3199 = vmatmul.mubr.bf16.gmra.mrb[0].mxu0 %v2915
        %v3200 = vpop.f32.mrb[0].mxu0
        %v3201 = vadd.f32 %v845, %v3200
        %v3202 = vpop.f32.mrb[0].mxu0
        %v3203 = vpop.f32.mrb[0].mxu0
        %v3204 = vadd.f32 %v849, %v3203
        %v3205 = vpop.f32.mrb[0].mxu0
        %3206 = vmatprep.mubr.bf16.mxu0 0
        %3207 = vmatmul.mubr.bf16.gmra.mrb[0].mxu0 %v2916
        %v3208 = vpop.f32.mrb[0].mxu0
        %v3209 = vadd.f32 %v855, %v3208
        %v3210 = vpop.f32.mrb[0].mxu0
        %v3211 = vpop.f32.mrb[0].mxu0
        %v3212 = vadd.f32 %v859, %v3211
        %v3213 = vpop.f32.mrb[0].mxu0
        %3214 = vmatprep.mubr.bf16.mxu0 0
        %3215 = vmatmul.mubr.bf16.gmra.mrb[0].mxu0 %v2917
        %v3216 = vpop.f32.mrb[0].mxu0
        %v3217 = vadd.f32 %v865, %v3216
        %v3218 = vpop.f32.mrb[0].mxu0
        %v3219 = vpop.f32.mrb[0].mxu0
        %v3220 = vadd.f32 %v869, %v3219
        %v3221 = vpop.f32.mrb[0].mxu0
        %3222 = vmatprep.mubr.bf16.mxu0 0
        %3223 = vmatmul.mubr.bf16.gmra.mrb[0].mxu0 %v2918
        %v3224 = vpop.f32.mrb[0].mxu0
        %v3225 = vadd.f32 %v875, %v3224
        %v3226 = vpop.f32.mrb[0].mxu0
        %v3227 = vpop.f32.mrb[0].mxu0
        %v3228 = vadd.f32 %v879, %v3227
        %v3229 = vpop.f32.mrb[0].mxu0
        %3230 = vmatprep.mubr.bf16.mxu0 0
        %3231 = vmatmul.mubr.bf16.gmra.mrb[0].mxu0 %v2919
        %v3232 = vpop.f32.mrb[0].mxu0
        %v3233 = vadd.f32 %v885, %v3232
        %v3234 = vpop.f32.mrb[0].mxu0
        %v3235 = vpop.f32.mrb[0].mxu0
        %v3236 = vadd.f32 %v889, %v3235
        %v3237 = vpop.f32.mrb[0].mxu0
        %3238 = vmatprep.mubr.bf16.mxu0 0
        %3239 = vmatmul.mubr.bf16.gmra.mrb[0].mxu0 %v2920
        %v3240 = vpop.f32.mrb[0].mxu0
        %v3241 = vadd.f32 %v895, %v3240
        %v3242 = vpop.f32.mrb[0].mxu0
        %v3243 = vpop.f32.mrb[0].mxu0
        %v3244 = vadd.f32 %v899, %v3243
        %v3245 = vpop.f32.mrb[0].mxu0
        %3246 = vmatprep.mubr.bf16.mxu0 0
        %3247 = vmatmul.mubr.bf16.gmra.mrb[0].mxu0 %v2921
        %v3248 = vpop.f32.mrb[0].mxu0
        %v3249 = vadd.f32 %v905, %v3248
        %v3250 = vpop.f32.mrb[0].mxu0
        %v3251 = vpop.f32.mrb[0].mxu0
        %v3252 = vadd.f32 %v909, %v3251
        %v3253 = vpop.f32.mrb[0].mxu0
        %3254 = vmatprep.mubr.bf16.mxu0 0
        %3255 = vmatmul.mubr.bf16.gmra.mrb[0].mxu0 %v2922
        %v3256 = vpop.f32.mrb[0].mxu0
        %v3257 = vadd.f32 %v915, %v3256
        %v3258 = vpop.f32.mrb[0].mxu0
        %v3259 = vpop.f32.mrb[0].mxu0
        %v3260 = vadd.f32 %v919, %v3259
        %v3261 = vpop.f32.mrb[0].mxu0
        %3262 = vmatprep.mubr.bf16.mxu0 0
        %3263 = vmatmul.mubr.bf16.gmra.mrb[0].mxu0 %v2923
        %v3264 = vpop.f32.mrb[0].mxu0
        %v3265 = vadd.f32 %v925, %v3264
        %v3266 = vpop.f32.mrb[0].mxu0
        %v3267 = vpop.f32.mrb[0].mxu0
        %v3268 = vadd.f32 %v929, %v3267
        %v3269 = vpop.f32.mrb[0].mxu0
        %3270 = vmatprep.mubr.bf16.mxu0 0
        %3271 = vmatmul.mubr.bf16.gmra.mrb[0].mxu0 %v2924
        %v3272 = vpop.f32.mrb[0].mxu0
        %v3273 = vadd.f32 %v935, %v3272
        %v3274 = vpop.f32.mrb[0].mxu0
        %v3275 = vpop.f32.mrb[0].mxu0
        %v3276 = vadd.f32 %v939, %v3275
        %v3277 = vpop.f32.mrb[0].mxu0
        %3278 = vdwg.mxu0
        %v3279 = vld [vmem:[%s3 + $0x5] sm:$0x1]
        %v3280 = vlaneseq
        %v3281 = vshrl.u32 %v3280, 7
        %v3282 = vsub.s32 0, %v3281
        %v3283 = vrot.slane %v3279, %v3282
        %v3284 = vadd.f32 %v3025, %v3283
        %v3285 = vadd.f32 %v3028, %v3283
        %v3286 = vadd.f32 %v3033, %v3283
        %v3287 = vadd.f32 %v3036, %v3283
        %v3288 = vadd.f32 %v3041, %v3283
        %v3289 = vadd.f32 %v3044, %v3283
        %v3290 = vadd.f32 %v3049, %v3283
        %v3291 = vadd.f32 %v3052, %v3283
        %v3292 = vadd.f32 %v3057, %v3283
        %v3293 = vadd.f32 %v3060, %v3283
        %v3294 = vadd.f32 %v3065, %v3283
        %v3295 = vadd.f32 %v3068, %v3283
        %v3296 = vadd.f32 %v3073, %v3283
        %v3297 = vadd.f32 %v3076, %v3283
        %v3298 = vadd.f32 %v3081, %v3283
        %v3299 = vadd.f32 %v3084, %v3283
        %v3300 = vadd.f32 %v3089, %v3283
        %v3301 = vadd.f32 %v3092, %v3283
        %v3302 = vadd.f32 %v3097, %v3283
        %v3303 = vadd.f32 %v3100, %v3283
        %v3304 = vadd.f32 %v3105, %v3283
        %v3305 = vadd.f32 %v3108, %v3283
        %v3306 = vadd.f32 %v3113, %v3283
        %v3307 = vadd.f32 %v3116, %v3283
        %v3308 = vadd.f32 %v3121, %v3283
        %v3309 = vadd.f32 %v3124, %v3283
        %v3310 = vadd.f32 %v3129, %v3283
        %v3311 = vadd.f32 %v3132, %v3283
        %v3312 = vadd.f32 %v3137, %v3283
        %v3313 = vadd.f32 %v3140, %v3283
        %v3314 = vadd.f32 %v3145, %v3283
        %v3315 = vadd.f32 %v3148, %v3283
        %v3316 = vadd.f32 %v3153, %v3283
        %v3317 = vadd.f32 %v3156, %v3283
        %v3318 = vadd.f32 %v3161, %v3283
        %v3319 = vadd.f32 %v3164, %v3283
        %v3320 = vadd.f32 %v3169, %v3283
        %v3321 = vadd.f32 %v3172, %v3283
        %v3322 = vadd.f32 %v3177, %v3283
        %v3323 = vadd.f32 %v3180, %v3283
        %v3324 = vadd.f32 %v3185, %v3283
        %v3325 = vadd.f32 %v3188, %v3283
        %v3326 = vadd.f32 %v3193, %v3283
        %v3327 = vadd.f32 %v3196, %v3283
        %v3328 = vadd.f32 %v3201, %v3283
        %v3329 = vadd.f32 %v3204, %v3283
        %v3330 = vadd.f32 %v3209, %v3283
        %v3331 = vadd.f32 %v3212, %v3283
        %v3332 = vadd.f32 %v3217, %v3283
        %v3333 = vadd.f32 %v3220, %v3283
        %v3334 = vadd.f32 %v3225, %v3283
        %v3335 = vadd.f32 %v3228, %v3283
        %v3336 = vadd.f32 %v3233, %v3283
        %v3337 = vadd.f32 %v3236, %v3283
        %v3338 = vadd.f32 %v3241, %v3283
        %v3339 = vadd.f32 %v3244, %v3283
        %v3340 = vadd.f32 %v3249, %v3283
        %v3341 = vadd.f32 %v3252, %v3283
        %v3342 = vadd.f32 %v3257, %v3283
        %v3343 = vadd.f32 %v3260, %v3283
        %v3344 = vadd.f32 %v3265, %v3283
        %v3345 = vadd.f32 %v3268, %v3283
        %v3346 = vadd.f32 %v3273, %v3283
        %v3347 = vadd.f32 %v3276, %v3283
        %v3348 = vmax.f32 %v3284, 0.0
        %v3349 = vmax.f32 %v3285, 0.0
        %v3350 = vmax.f32 %v3286, 0.0
        %v3351 = vmax.f32 %v3287, 0.0
        %v3352 = vmax.f32 %v3288, 0.0
        %v3353 = vmax.f32 %v3289, 0.0
        %v3354 = vmax.f32 %v3290, 0.0
        %v3355 = vmax.f32 %v3291, 0.0
        %v3356 = vmax.f32 %v3292, 0.0
        %v3357 = vmax.f32 %v3293, 0.0
        %v3358 = vmax.f32 %v3294, 0.0
        %v3359 = vmax.f32 %v3295, 0.0
        %v3360 = vmax.f32 %v3296, 0.0
        %v3361 = vmax.f32 %v3297, 0.0
        %v3362 = vmax.f32 %v3298, 0.0
        %v3363 = vmax.f32 %v3299, 0.0
        %v3364 = vmax.f32 %v3300, 0.0
        %v3365 = vmax.f32 %v3301, 0.0
        %v3366 = vmax.f32 %v3302, 0.0
        %v3367 = vmax.f32 %v3303, 0.0
        %v3368 = vmax.f32 %v3304, 0.0
        %v3369 = vmax.f32 %v3305, 0.0
        %v3370 = vmax.f32 %v3306, 0.0
        %v3371 = vmax.f32 %v3307, 0.0
        %v3372 = vmax.f32 %v3308, 0.0
        %v3373 = vmax.f32 %v3309, 0.0
        %v3374 = vmax.f32 %v3310, 0.0
        %v3375 = vmax.f32 %v3311, 0.0
        %v3376 = vmax.f32 %v3312, 0.0
        %v3377 = vmax.f32 %v3313, 0.0
        %v3378 = vmax.f32 %v3314, 0.0
        %v3379 = vmax.f32 %v3315, 0.0
        %v3380 = vmax.f32 %v3316, 0.0
        %v3381 = vmax.f32 %v3317, 0.0
        %v3382 = vmax.f32 %v3318, 0.0
        %v3383 = vmax.f32 %v3319, 0.0
        %v3384 = vmax.f32 %v3320, 0.0
        %v3385 = vmax.f32 %v3321, 0.0
        %v3386 = vmax.f32 %v3322, 0.0
        %v3387 = vmax.f32 %v3323, 0.0
        %v3388 = vmax.f32 %v3324, 0.0
        %v3389 = vmax.f32 %v3325, 0.0
        %v3390 = vmax.f32 %v3326, 0.0
        %v3391 = vmax.f32 %v3327, 0.0
        %v3392 = vmax.f32 %v3328, 0.0
        %v3393 = vmax.f32 %v3329, 0.0
        %v3394 = vmax.f32 %v3330, 0.0
        %v3395 = vmax.f32 %v3331, 0.0
        %v3396 = vmax.f32 %v3332, 0.0
        %v3397 = vmax.f32 %v3333, 0.0
        %v3398 = vmax.f32 %v3334, 0.0
        %v3399 = vmax.f32 %v3335, 0.0
        %v3400 = vmax.f32 %v3336, 0.0
        %v3401 = vmax.f32 %v3337, 0.0
        %v3402 = vmax.f32 %v3338, 0.0
        %v3403 = vmax.f32 %v3339, 0.0
        %v3404 = vmax.f32 %v3340, 0.0
        %v3405 = vmax.f32 %v3341, 0.0
        %v3406 = vmax.f32 %v3342, 0.0
        %v3407 = vmax.f32 %v3343, 0.0
        %v3408 = vmax.f32 %v3344, 0.0
        %v3409 = vmax.f32 %v3345, 0.0
        %v3410 = vmax.f32 %v3346, 0.0
        %v3411 = vmax.f32 %v3347, 0.0
        %v3412 = vpack.c.bf16 %v3349, %v3348
        %v3413 = vpack.c.bf16 %v3351, %v3350
        %v3414 = vpack.c.bf16 %v3353, %v3352
        %v3415 = vpack.c.bf16 %v3355, %v3354
        %v3416 = vpack.c.bf16 %v3357, %v3356
        %v3417 = vpack.c.bf16 %v3359, %v3358
        %v3418 = vpack.c.bf16 %v3361, %v3360
        %v3419 = vpack.c.bf16 %v3363, %v3362
        %v3420 = vpack.c.bf16 %v3365, %v3364
        %v3421 = vpack.c.bf16 %v3367, %v3366
        %v3422 = vpack.c.bf16 %v3369, %v3368
        %v3423 = vpack.c.bf16 %v3371, %v3370
        %v3424 = vpack.c.bf16 %v3373, %v3372
        %v3425 = vpack.c.bf16 %v3375, %v3374
        %v3426 = vpack.c.bf16 %v3377, %v3376
        %v3427 = vpack.c.bf16 %v3379, %v3378
        %v3428 = vpack.c.bf16 %v3381, %v3380
        %v3429 = vpack.c.bf16 %v3383, %v3382
        %v3430 = vpack.c.bf16 %v3385, %v3384
        %v3431 = vpack.c.bf16 %v3387, %v3386
        %v3432 = vpack.c.bf16 %v3389, %v3388
        %v3433 = vpack.c.bf16 %v3391, %v3390
        %v3434 = vpack.c.bf16 %v3393, %v3392
        %v3435 = vpack.c.bf16 %v3395, %v3394
        %v3436 = vpack.c.bf16 %v3397, %v3396
        %v3437 = vpack.c.bf16 %v3399, %v3398
        %v3438 = vpack.c.bf16 %v3401, %v3400
        %v3439 = vpack.c.bf16 %v3403, %v3402
        %v3440 = vpack.c.bf16 %v3405, %v3404
        %v3441 = vpack.c.bf16 %v3407, %v3406
        %v3442 = vpack.c.bf16 %v3409, %v3408
        %v3443 = vpack.c.bf16 %v3411, %v3410
        %s3444 = scalar_lea.vmem %s2, 320
        %v3445 = vld [vmem:[%s3444] sm:$0xf]
        %v3446 = vld [vmem:[%s3444 + $0x4] sm:$0xf]
        %v3447 = vld [vmem:[%s3444 + $0x8] sm:$0xf]
        %v3448 = vld [vmem:[%s3444 + $0xc] sm:$0xf]
        %v3449 = vld [vmem:[%s3444 + $0x10] sm:$0xf]
        %v3450 = vld [vmem:[%s3444 + $0x14] sm:$0xf]
        %v3451 = vld [vmem:[%s3444 + $0x18] sm:$0xf]
        %v3452 = vld [vmem:[%s3444 + $0x1c] sm:$0xf]
        %v3453 = vld [vmem:[%s3444 + $0x20] sm:$0xf]
        %v3454 = vld [vmem:[%s3444 + $0x24] sm:$0xf]
        %v3455 = vld [vmem:[%s3444 + $0x28] sm:$0xf]
        %v3456 = vld [vmem:[%s3444 + $0x2c] sm:$0xf]
        %v3457 = vld [vmem:[%s3444 + $0x30] sm:$0xf]
        %v3458 = vld [vmem:[%s3444 + $0x34] sm:$0xf]
        %v3459 = vld [vmem:[%s3444 + $0x38] sm:$0xf]
        %v3460 = vld [vmem:[%s3444 + $0x3c] sm:$0xf]
        %v3461 = vld [vmem:[%s3 + $0x6] sm:$0x1]
        %v3462 = vlaneseq
        %v3463 = vshrl.u32 %v3462, 7
        %v3464 = vsub.s32 0, %v3463
        %v3465 = vrot.slane %v3461, %v3464
        %v3482 = vunpack.c.l.b16 %v3445
        %v3483 = vunpack.c.l.b16 %v3446
        %v3484 = vunpack.c.l.b16 %v3447
        %v3485 = vunpack.c.l.b16 %v3448
        %v3486 = vunpack.c.l.b16 %v3449
        %v3487 = vunpack.c.l.b16 %v3450
        %v3488 = vunpack.c.l.b16 %v3451
        %v3489 = vunpack.c.l.b16 %v3452
        %v3490 = vunpack.c.l.b16 %v3453
        %v3491 = vunpack.c.l.b16 %v3454
        %v3492 = vunpack.c.l.b16 %v3455
        %v3493 = vunpack.c.l.b16 %v3456
        %v3494 = vunpack.c.l.b16 %v3457
        %v3495 = vunpack.c.l.b16 %v3458
        %v3496 = vunpack.c.l.b16 %v3459
        %v3497 = vunpack.c.l.b16 %v3460
        %v3498 = vpack.c.b16 %v3483, %v3482
        %v3499 = vpack.c.b16 %v3485, %v3484
        %v3500 = vpack.c.b16 %v3487, %v3486
        %v3501 = vpack.c.b16 %v3489, %v3488
        %v3502 = vpack.c.b16 %v3491, %v3490
        %v3503 = vpack.c.b16 %v3493, %v3492
        %v3504 = vpack.c.b16 %v3495, %v3494
        %v3505 = vpack.c.b16 %v3497, %v3496
        %3514 = vmatprep.subr.bf16.mxu0 0
        %3515 = vmatpush1.bf16.msra.mxu0 %v3498
        %3516 = vmatprep.subr.bf16.mxu0 0
        %3517 = vmatpush1.bf16.msra.mxu0 %v3499
        %3518 = vmatprep.subr.bf16.mxu0 0
        %3519 = vmatpush1.bf16.msra.mxu0 %v3500
        %3520 = vmatprep.subr.bf16.mxu0 0
        %3521 = vmatpush1.bf16.msra.mxu0 %v3501
        %3522 = vmatprep.subr.bf16.mxu0 0
        %3523 = vmatpush1.bf16.msra.mxu0 %v3502
        %3524 = vmatprep.subr.bf16.mxu0 0
        %3525 = vmatpush1.bf16.msra.mxu0 %v3503
        %3526 = vmatprep.subr.bf16.mxu0 0
        %3527 = vmatpush1.bf16.msra.mxu0 %v3504
        %3528 = vmatprep.subr.bf16.mxu0 0
        %3529 = vmatpush1.bf16.msra.mxu0 %v3505
        %3530 = vmatprep.subr.bf16.mxu0 0
        %3531 = vmatpush1.bf16.msra.mxu0 0
        %3532 = vmatprep.subr.bf16.mxu0 0
        %3533 = vmatpush1.bf16.msra.mxu0 0
        %3534 = vmatprep.subr.bf16.mxu0 0
        %3535 = vmatpush1.bf16.msra.mxu0 0
        %3536 = vmatprep.subr.bf16.mxu0 0
        %3537 = vmatpush1.bf16.msra.mxu0 0
        %3538 = vmatprep.subr.bf16.mxu0 0
        %3539 = vmatpush1.bf16.msra.mxu0 0
        %3540 = vmatprep.subr.bf16.mxu0 0
        %3541 = vmatpush1.bf16.msra.mxu0 0
        %3542 = vmatprep.subr.bf16.mxu0 0
        %3543 = vmatpush1.bf16.msra.mxu0 0
        %3544 = vmatprep.subr.bf16.mxu0 0
        %3545 = vmatpush1.bf16.msra.mxu0 0
        %3546 = vmatprep.mubr.bf16.mxu0 0
        %3547 = vmatmul.mubr.bf16.gmra.mrb[0].mxu0 %v3412
        %v3548 = vpop.f32.mrb[0].mxu0
        %v3549 = vadd.f32 %v3465, %v3548
        %v3550 = vpop.f32.mrb[0].mxu0
        %v3551 = vpop.f32.mrb[0].mxu0
        %v3552 = vadd.f32 %v3465, %v3551
        %v3553 = vpop.f32.mrb[0].mxu0
        %3554 = vmatprep.mubr.bf16.mxu0 0
        %3555 = vmatmul.mubr.bf16.gmra.mrb[0].mxu0 %v3413
        %v3556 = vpop.f32.mrb[0].mxu0
        %v3557 = vadd.f32 %v3465, %v3556
        %v3558 = vpop.f32.mrb[0].mxu0
        %v3559 = vpop.f32.mrb[0].mxu0
        %v3560 = vadd.f32 %v3465, %v3559
        %v3561 = vpop.f32.mrb[0].mxu0
        %3562 = vmatprep.mubr.bf16.mxu0 0
        %3563 = vmatmul.mubr.bf16.gmra.mrb[0].mxu0 %v3414
        %v3564 = vpop.f32.mrb[0].mxu0
        %v3565 = vadd.f32 %v3465, %v3564
        %v3566 = vpop.f32.mrb[0].mxu0
        %v3567 = vpop.f32.mrb[0].mxu0
        %v3568 = vadd.f32 %v3465, %v3567
        %v3569 = vpop.f32.mrb[0].mxu0
        %3570 = vmatprep.mubr.bf16.mxu0 0
        %3571 = vmatmul.mubr.bf16.gmra.mrb[0].mxu0 %v3415
        %v3572 = vpop.f32.mrb[0].mxu0
        %v3573 = vadd.f32 %v3465, %v3572
        %v3574 = vpop.f32.mrb[0].mxu0
        %v3575 = vpop.f32.mrb[0].mxu0
        %v3576 = vadd.f32 %v3465, %v3575
        %v3577 = vpop.f32.mrb[0].mxu0
        %3578 = vmatprep.mubr.bf16.mxu0 0
        %3579 = vmatmul.mubr.bf16.gmra.mrb[0].mxu0 %v3416
        %v3580 = vpop.f32.mrb[0].mxu0
        %v3581 = vadd.f32 %v3465, %v3580
        %v3582 = vpop.f32.mrb[0].mxu0
        %v3583 = vpop.f32.mrb[0].mxu0
        %v3584 = vadd.f32 %v3465, %v3583
        %v3585 = vpop.f32.mrb[0].mxu0
        %3586 = vmatprep.mubr.bf16.mxu0 0
        %3587 = vmatmul.mubr.bf16.gmra.mrb[0].mxu0 %v3417
        %v3588 = vpop.f32.mrb[0].mxu0
        %v3589 = vadd.f32 %v3465, %v3588
        %v3590 = vpop.f32.mrb[0].mxu0
        %v3591 = vpop.f32.mrb[0].mxu0
        %v3592 = vadd.f32 %v3465, %v3591
        %v3593 = vpop.f32.mrb[0].mxu0
        %3594 = vmatprep.mubr.bf16.mxu0 0
        %3595 = vmatmul.mubr.bf16.gmra.mrb[0].mxu0 %v3418
        %v3596 = vpop.f32.mrb[0].mxu0
        %v3597 = vadd.f32 %v3465, %v3596
        %v3598 = vpop.f32.mrb[0].mxu0
        %v3599 = vpop.f32.mrb[0].mxu0
        %v3600 = vadd.f32 %v3465, %v3599
        %v3601 = vpop.f32.mrb[0].mxu0
        %3602 = vmatprep.mubr.bf16.mxu0 0
        %3603 = vmatmul.mubr.bf16.gmra.mrb[0].mxu0 %v3419
        %v3604 = vpop.f32.mrb[0].mxu0
        %v3605 = vadd.f32 %v3465, %v3604
        %v3606 = vpop.f32.mrb[0].mxu0
        %v3607 = vpop.f32.mrb[0].mxu0
        %v3608 = vadd.f32 %v3465, %v3607
        %v3609 = vpop.f32.mrb[0].mxu0
        %3610 = vmatprep.mubr.bf16.mxu0 0
        %3611 = vmatmul.mubr.bf16.gmra.mrb[0].mxu0 %v3420
        %v3612 = vpop.f32.mrb[0].mxu0
        %v3613 = vadd.f32 %v3465, %v3612
        %v3614 = vpop.f32.mrb[0].mxu0
        %v3615 = vpop.f32.mrb[0].mxu0
        %v3616 = vadd.f32 %v3465, %v3615
        %v3617 = vpop.f32.mrb[0].mxu0
        %3618 = vmatprep.mubr.bf16.mxu0 0
        %3619 = vmatmul.mubr.bf16.gmra.mrb[0].mxu0 %v3421
        %v3620 = vpop.f32.mrb[0].mxu0
        %v3621 = vadd.f32 %v3465, %v3620
        %v3622 = vpop.f32.mrb[0].mxu0
        %v3623 = vpop.f32.mrb[0].mxu0
        %v3624 = vadd.f32 %v3465, %v3623
        %v3625 = vpop.f32.mrb[0].mxu0
        %3626 = vmatprep.mubr.bf16.mxu0 0
        %3627 = vmatmul.mubr.bf16.gmra.mrb[0].mxu0 %v3422
        %v3628 = vpop.f32.mrb[0].mxu0
        %v3629 = vadd.f32 %v3465, %v3628
        %v3630 = vpop.f32.mrb[0].mxu0
        %v3631 = vpop.f32.mrb[0].mxu0
        %v3632 = vadd.f32 %v3465, %v3631
        %v3633 = vpop.f32.mrb[0].mxu0
        %3634 = vmatprep.mubr.bf16.mxu0 0
        %3635 = vmatmul.mubr.bf16.gmra.mrb[0].mxu0 %v3423
        %v3636 = vpop.f32.mrb[0].mxu0
        %v3637 = vadd.f32 %v3465, %v3636
        %v3638 = vpop.f32.mrb[0].mxu0
        %v3639 = vpop.f32.mrb[0].mxu0
        %v3640 = vadd.f32 %v3465, %v3639
        %v3641 = vpop.f32.mrb[0].mxu0
        %3642 = vmatprep.mubr.bf16.mxu0 0
        %3643 = vmatmul.mubr.bf16.gmra.mrb[0].mxu0 %v3424
        %v3644 = vpop.f32.mrb[0].mxu0
        %v3645 = vadd.f32 %v3465, %v3644
        %v3646 = vpop.f32.mrb[0].mxu0
        %v3647 = vpop.f32.mrb[0].mxu0
        %v3648 = vadd.f32 %v3465, %v3647
        %v3649 = vpop.f32.mrb[0].mxu0
        %3650 = vmatprep.mubr.bf16.mxu0 0
        %3651 = vmatmul.mubr.bf16.gmra.mrb[0].mxu0 %v3425
        %v3652 = vpop.f32.mrb[0].mxu0
        %v3653 = vadd.f32 %v3465, %v3652
        %v3654 = vpop.f32.mrb[0].mxu0
        %v3655 = vpop.f32.mrb[0].mxu0
        %v3656 = vadd.f32 %v3465, %v3655
        %v3657 = vpop.f32.mrb[0].mxu0
        %3658 = vmatprep.mubr.bf16.mxu0 0
        %3659 = vmatmul.mubr.bf16.gmra.mrb[0].mxu0 %v3426
        %v3660 = vpop.f32.mrb[0].mxu0
        %v3661 = vadd.f32 %v3465, %v3660
        %v3662 = vpop.f32.mrb[0].mxu0
        %v3663 = vpop.f32.mrb[0].mxu0
        %v3664 = vadd.f32 %v3465, %v3663
        %v3665 = vpop.f32.mrb[0].mxu0
        %3666 = vmatprep.mubr.bf16.mxu0 0
        %3667 = vmatmul.mubr.bf16.gmra.mrb[0].mxu0 %v3427
        %v3668 = vpop.f32.mrb[0].mxu0
        %v3669 = vadd.f32 %v3465, %v3668
        %v3670 = vpop.f32.mrb[0].mxu0
        %v3671 = vpop.f32.mrb[0].mxu0
        %v3672 = vadd.f32 %v3465, %v3671
        %v3673 = vpop.f32.mrb[0].mxu0
        %3674 = vmatprep.mubr.bf16.mxu0 0
        %3675 = vmatmul.mubr.bf16.gmra.mrb[0].mxu0 %v3428
        %v3676 = vpop.f32.mrb[0].mxu0
        %v3677 = vadd.f32 %v3465, %v3676
        %v3678 = vpop.f32.mrb[0].mxu0
        %v3679 = vpop.f32.mrb[0].mxu0
        %v3680 = vadd.f32 %v3465, %v3679
        %v3681 = vpop.f32.mrb[0].mxu0
        %3682 = vmatprep.mubr.bf16.mxu0 0
        %3683 = vmatmul.mubr.bf16.gmra.mrb[0].mxu0 %v3429
        %v3684 = vpop.f32.mrb[0].mxu0
        %v3685 = vadd.f32 %v3465, %v3684
        %v3686 = vpop.f32.mrb[0].mxu0
        %v3687 = vpop.f32.mrb[0].mxu0
        %v3688 = vadd.f32 %v3465, %v3687
        %v3689 = vpop.f32.mrb[0].mxu0
        %3690 = vmatprep.mubr.bf16.mxu0 0
        %3691 = vmatmul.mubr.bf16.gmra.mrb[0].mxu0 %v3430
        %v3692 = vpop.f32.mrb[0].mxu0
        %v3693 = vadd.f32 %v3465, %v3692
        %v3694 = vpop.f32.mrb[0].mxu0
        %v3695 = vpop.f32.mrb[0].mxu0
        %v3696 = vadd.f32 %v3465, %v3695
        %v3697 = vpop.f32.mrb[0].mxu0
        %3698 = vmatprep.mubr.bf16.mxu0 0
        %3699 = vmatmul.mubr.bf16.gmra.mrb[0].mxu0 %v3431
        %v3700 = vpop.f32.mrb[0].mxu0
        %v3701 = vadd.f32 %v3465, %v3700
        %v3702 = vpop.f32.mrb[0].mxu0
        %v3703 = vpop.f32.mrb[0].mxu0
        %v3704 = vadd.f32 %v3465, %v3703
        %v3705 = vpop.f32.mrb[0].mxu0
        %3706 = vmatprep.mubr.bf16.mxu0 0
        %3707 = vmatmul.mubr.bf16.gmra.mrb[0].mxu0 %v3432
        %v3708 = vpop.f32.mrb[0].mxu0
        %v3709 = vadd.f32 %v3465, %v3708
        %v3710 = vpop.f32.mrb[0].mxu0
        %v3711 = vpop.f32.mrb[0].mxu0
        %v3712 = vadd.f32 %v3465, %v3711
        %v3713 = vpop.f32.mrb[0].mxu0
        %3714 = vmatprep.mubr.bf16.mxu0 0
        %3715 = vmatmul.mubr.bf16.gmra.mrb[0].mxu0 %v3433
        %v3716 = vpop.f32.mrb[0].mxu0
        %v3717 = vadd.f32 %v3465, %v3716
        %v3718 = vpop.f32.mrb[0].mxu0
        %v3719 = vpop.f32.mrb[0].mxu0
        %v3720 = vadd.f32 %v3465, %v3719
        %v3721 = vpop.f32.mrb[0].mxu0
        %3722 = vmatprep.mubr.bf16.mxu0 0
        %3723 = vmatmul.mubr.bf16.gmra.mrb[0].mxu0 %v3434
        %v3724 = vpop.f32.mrb[0].mxu0
        %v3725 = vadd.f32 %v3465, %v3724
        %v3726 = vpop.f32.mrb[0].mxu0
        %v3727 = vpop.f32.mrb[0].mxu0
        %v3728 = vadd.f32 %v3465, %v3727
        %v3729 = vpop.f32.mrb[0].mxu0
        %3730 = vmatprep.mubr.bf16.mxu0 0
        %3731 = vmatmul.mubr.bf16.gmra.mrb[0].mxu0 %v3435
        %v3732 = vpop.f32.mrb[0].mxu0
        %v3733 = vadd.f32 %v3465, %v3732
        %v3734 = vpop.f32.mrb[0].mxu0
        %v3735 = vpop.f32.mrb[0].mxu0
        %v3736 = vadd.f32 %v3465, %v3735
        %v3737 = vpop.f32.mrb[0].mxu0
        %3738 = vmatprep.mubr.bf16.mxu0 0
        %3739 = vmatmul.mubr.bf16.gmra.mrb[0].mxu0 %v3436
        %v3740 = vpop.f32.mrb[0].mxu0
        %v3741 = vadd.f32 %v3465, %v3740
        %v3742 = vpop.f32.mrb[0].mxu0
        %v3743 = vpop.f32.mrb[0].mxu0
        %v3744 = vadd.f32 %v3465, %v3743
        %v3745 = vpop.f32.mrb[0].mxu0
        %3746 = vmatprep.mubr.bf16.mxu0 0
        %3747 = vmatmul.mubr.bf16.gmra.mrb[0].mxu0 %v3437
        %v3748 = vpop.f32.mrb[0].mxu0
        %v3749 = vadd.f32 %v3465, %v3748
        %v3750 = vpop.f32.mrb[0].mxu0
        %v3751 = vpop.f32.mrb[0].mxu0
        %v3752 = vadd.f32 %v3465, %v3751
        %v3753 = vpop.f32.mrb[0].mxu0
        %3754 = vmatprep.mubr.bf16.mxu0 0
        %3755 = vmatmul.mubr.bf16.gmra.mrb[0].mxu0 %v3438
        %v3756 = vpop.f32.mrb[0].mxu0
        %v3757 = vadd.f32 %v3465, %v3756
        %v3758 = vpop.f32.mrb[0].mxu0
        %v3759 = vpop.f32.mrb[0].mxu0
        %v3760 = vadd.f32 %v3465, %v3759
        %v3761 = vpop.f32.mrb[0].mxu0
        %3762 = vmatprep.mubr.bf16.mxu0 0
        %3763 = vmatmul.mubr.bf16.gmra.mrb[0].mxu0 %v3439
        %v3764 = vpop.f32.mrb[0].mxu0
        %v3765 = vadd.f32 %v3465, %v3764
        %v3766 = vpop.f32.mrb[0].mxu0
        %v3767 = vpop.f32.mrb[0].mxu0
        %v3768 = vadd.f32 %v3465, %v3767
        %v3769 = vpop.f32.mrb[0].mxu0
        %3770 = vmatprep.mubr.bf16.mxu0 0
        %3771 = vmatmul.mubr.bf16.gmra.mrb[0].mxu0 %v3440
        %v3772 = vpop.f32.mrb[0].mxu0
        %v3773 = vadd.f32 %v3465, %v3772
        %v3774 = vpop.f32.mrb[0].mxu0
        %v3775 = vpop.f32.mrb[0].mxu0
        %v3776 = vadd.f32 %v3465, %v3775
        %v3777 = vpop.f32.mrb[0].mxu0
        %3778 = vmatprep.mubr.bf16.mxu0 0
        %3779 = vmatmul.mubr.bf16.gmra.mrb[0].mxu0 %v3441
        %v3780 = vpop.f32.mrb[0].mxu0
        %v3781 = vadd.f32 %v3465, %v3780
        %v3782 = vpop.f32.mrb[0].mxu0
        %v3783 = vpop.f32.mrb[0].mxu0
        %v3784 = vadd.f32 %v3465, %v3783
        %v3785 = vpop.f32.mrb[0].mxu0
        %3786 = vmatprep.mubr.bf16.mxu0 0
        %3787 = vmatmul.mubr.bf16.gmra.mrb[0].mxu0 %v3442
        %v3788 = vpop.f32.mrb[0].mxu0
        %v3789 = vadd.f32 %v3465, %v3788
        %v3790 = vpop.f32.mrb[0].mxu0
        %v3791 = vpop.f32.mrb[0].mxu0
        %v3792 = vadd.f32 %v3465, %v3791
        %v3793 = vpop.f32.mrb[0].mxu0
        %3794 = vmatprep.mubr.bf16.mxu0 0
        %3795 = vmatmul.mubr.bf16.gmra.mrb[0].mxu0 %v3443
        %v3796 = vpop.f32.mrb[0].mxu0
        %v3797 = vadd.f32 %v3465, %v3796
        %v3798 = vpop.f32.mrb[0].mxu0
        %v3799 = vpop.f32.mrb[0].mxu0
        %v3800 = vadd.f32 %v3465, %v3799
        %v3801 = vpop.f32.mrb[0].mxu0
        %3802 = vdwg.mxu0
        %v3803 = vmax.f32 %v3549, 0.0
        %v3804 = vmax.f32 %v3552, 0.0
        %v3805 = vmax.f32 %v3557, 0.0
        %v3806 = vmax.f32 %v3560, 0.0
        %v3807 = vmax.f32 %v3565, 0.0
        %v3808 = vmax.f32 %v3568, 0.0
        %v3809 = vmax.f32 %v3573, 0.0
        %v3810 = vmax.f32 %v3576, 0.0
        %v3811 = vmax.f32 %v3581, 0.0
        %v3812 = vmax.f32 %v3584, 0.0
        %v3813 = vmax.f32 %v3589, 0.0
        %v3814 = vmax.f32 %v3592, 0.0
        %v3815 = vmax.f32 %v3597, 0.0
        %v3816 = vmax.f32 %v3600, 0.0
        %v3817 = vmax.f32 %v3605, 0.0
        %v3818 = vmax.f32 %v3608, 0.0
        %v3819 = vmax.f32 %v3613, 0.0
        %v3820 = vmax.f32 %v3616, 0.0
        %v3821 = vmax.f32 %v3621, 0.0
        %v3822 = vmax.f32 %v3624, 0.0
        %v3823 = vmax.f32 %v3629, 0.0
        %v3824 = vmax.f32 %v3632, 0.0
        %v3825 = vmax.f32 %v3637, 0.0
        %v3826 = vmax.f32 %v3640, 0.0
        %v3827 = vmax.f32 %v3645, 0.0
        %v3828 = vmax.f32 %v3648, 0.0
        %v3829 = vmax.f32 %v3653, 0.0
        %v3830 = vmax.f32 %v3656, 0.0
        %v3831 = vmax.f32 %v3661, 0.0
        %v3832 = vmax.f32 %v3664, 0.0
        %v3833 = vmax.f32 %v3669, 0.0
        %v3834 = vmax.f32 %v3672, 0.0
        %v3835 = vmax.f32 %v3677, 0.0
        %v3836 = vmax.f32 %v3680, 0.0
        %v3837 = vmax.f32 %v3685, 0.0
        %v3838 = vmax.f32 %v3688, 0.0
        %v3839 = vmax.f32 %v3693, 0.0
        %v3840 = vmax.f32 %v3696, 0.0
        %v3841 = vmax.f32 %v3701, 0.0
        %v3842 = vmax.f32 %v3704, 0.0
        %v3843 = vmax.f32 %v3709, 0.0
        %v3844 = vmax.f32 %v3712, 0.0
        %v3845 = vmax.f32 %v3717, 0.0
        %v3846 = vmax.f32 %v3720, 0.0
        %v3847 = vmax.f32 %v3725, 0.0
        %v3848 = vmax.f32 %v3728, 0.0
        %v3849 = vmax.f32 %v3733, 0.0
        %v3850 = vmax.f32 %v3736, 0.0
        %v3851 = vmax.f32 %v3741, 0.0
        %v3852 = vmax.f32 %v3744, 0.0
        %v3853 = vmax.f32 %v3749, 0.0
        %v3854 = vmax.f32 %v3752, 0.0
        %v3855 = vmax.f32 %v3757, 0.0
        %v3856 = vmax.f32 %v3760, 0.0
        %v3857 = vmax.f32 %v3765, 0.0
        %v3858 = vmax.f32 %v3768, 0.0
        %v3859 = vmax.f32 %v3773, 0.0
        %v3860 = vmax.f32 %v3776, 0.0
        %v3861 = vmax.f32 %v3781, 0.0
        %v3862 = vmax.f32 %v3784, 0.0
        %v3863 = vmax.f32 %v3789, 0.0
        %v3864 = vmax.f32 %v3792, 0.0
        %v3865 = vmax.f32 %v3797, 0.0
        %v3866 = vmax.f32 %v3800, 0.0
        %v3867 = vpack.c.bf16 %v3804, %v3803
        %v3868 = vpack.c.bf16 %v3806, %v3805
        %v3869 = vpack.c.bf16 %v3808, %v3807
        %v3870 = vpack.c.bf16 %v3810, %v3809
        %v3871 = vpack.c.bf16 %v3812, %v3811
        %v3872 = vpack.c.bf16 %v3814, %v3813
        %v3873 = vpack.c.bf16 %v3816, %v3815
        %v3874 = vpack.c.bf16 %v3818, %v3817
        %v3875 = vpack.c.bf16 %v3820, %v3819
        %v3876 = vpack.c.bf16 %v3822, %v3821
        %v3877 = vpack.c.bf16 %v3824, %v3823
        %v3878 = vpack.c.bf16 %v3826, %v3825
        %v3879 = vpack.c.bf16 %v3828, %v3827
        %v3880 = vpack.c.bf16 %v3830, %v3829
        %v3881 = vpack.c.bf16 %v3832, %v3831
        %v3882 = vpack.c.bf16 %v3834, %v3833
        %v3883 = vpack.c.bf16 %v3836, %v3835
        %v3884 = vpack.c.bf16 %v3838, %v3837
        %v3885 = vpack.c.bf16 %v3840, %v3839
        %v3886 = vpack.c.bf16 %v3842, %v3841
        %v3887 = vpack.c.bf16 %v3844, %v3843
        %v3888 = vpack.c.bf16 %v3846, %v3845
        %v3889 = vpack.c.bf16 %v3848, %v3847
        %v3890 = vpack.c.bf16 %v3850, %v3849
        %v3891 = vpack.c.bf16 %v3852, %v3851
        %v3892 = vpack.c.bf16 %v3854, %v3853
        %v3893 = vpack.c.bf16 %v3856, %v3855
        %v3894 = vpack.c.bf16 %v3858, %v3857
        %v3895 = vpack.c.bf16 %v3860, %v3859
        %v3896 = vpack.c.bf16 %v3862, %v3861
        %v3897 = vpack.c.bf16 %v3864, %v3863
        %v3898 = vpack.c.bf16 %v3866, %v3865
        %s3899 = scalar_lea.vmem %s2, 384
        %v3900 = vld [vmem:[%s3899] sm:$0xf]
        %v3901 = vld [vmem:[%s3899 + $0x4] sm:$0xf]
        %v3902 = vld [vmem:[%s3899 + $0x8] sm:$0xf]
        %v3903 = vld [vmem:[%s3899 + $0xc] sm:$0xf]
        %v3904 = vld [vmem:[%s3899 + $0x10] sm:$0xf]
        %v3905 = vld [vmem:[%s3899 + $0x14] sm:$0xf]
        %v3906 = vld [vmem:[%s3899 + $0x18] sm:$0xf]
        %v3907 = vld [vmem:[%s3899 + $0x1c] sm:$0xf]
        %v3908 = vld [vmem:[%s3899 + $0x20] sm:$0xf]
        %v3909 = vld [vmem:[%s3899 + $0x24] sm:$0xf]
        %v3910 = vld [vmem:[%s3899 + $0x28] sm:$0xf]
        %v3911 = vld [vmem:[%s3899 + $0x2c] sm:$0xf]
        %v3912 = vld [vmem:[%s3899 + $0x30] sm:$0xf]
        %v3913 = vld [vmem:[%s3899 + $0x34] sm:$0xf]
        %v3914 = vld [vmem:[%s3899 + $0x38] sm:$0xf]
        %v3915 = vld [vmem:[%s3899 + $0x3c] sm:$0xf]
        %v3916 = vld [vmem:[%s3 + $0x7] sm:$0x1]
        %v3917 = vlaneseq
        %v3918 = vshrl.u32 %v3917, 7
        %v3919 = vsub.s32 0, %v3918
        %v3920 = vrot.slane %v3916, %v3919
        %v3937 = vunpack.c.l.b16 %v3900
        %v3938 = vunpack.c.l.b16 %v3901
        %v3939 = vunpack.c.l.b16 %v3902
        %v3940 = vunpack.c.l.b16 %v3903
        %v3941 = vunpack.c.l.b16 %v3904
        %v3942 = vunpack.c.l.b16 %v3905
        %v3943 = vunpack.c.l.b16 %v3906
        %v3944 = vunpack.c.l.b16 %v3907
        %v3945 = vunpack.c.l.b16 %v3908
        %v3946 = vunpack.c.l.b16 %v3909
        %v3947 = vunpack.c.l.b16 %v3910
        %v3948 = vunpack.c.l.b16 %v3911
        %v3949 = vunpack.c.l.b16 %v3912
        %v3950 = vunpack.c.l.b16 %v3913
        %v3951 = vunpack.c.l.b16 %v3914
        %v3952 = vunpack.c.l.b16 %v3915
        %v3953 = vpack.c.b16 %v3938, %v3937
        %v3954 = vpack.c.b16 %v3940, %v3939
        %v3955 = vpack.c.b16 %v3942, %v3941
        %v3956 = vpack.c.b16 %v3944, %v3943
        %v3957 = vpack.c.b16 %v3946, %v3945
        %v3958 = vpack.c.b16 %v3948, %v3947
        %v3959 = vpack.c.b16 %v3950, %v3949
        %v3960 = vpack.c.b16 %v3952, %v3951
        %3969 = vmatprep.subr.bf16.mxu0 0
        %3970 = vmatpush1.bf16.msra.mxu0 %v3953
        %3971 = vmatprep.subr.bf16.mxu0 0
        %3972 = vmatpush1.bf16.msra.mxu0 %v3954
        %3973 = vmatprep.subr.bf16.mxu0 0
        %3974 = vmatpush1.bf16.msra.mxu0 %v3955
        %3975 = vmatprep.subr.bf16.mxu0 0
        %3976 = vmatpush1.bf16.msra.mxu0 %v3956
        %3977 = vmatprep.subr.bf16.mxu0 0
        %3978 = vmatpush1.bf16.msra.mxu0 %v3957
        %3979 = vmatprep.subr.bf16.mxu0 0
        %3980 = vmatpush1.bf16.msra.mxu0 %v3958
        %3981 = vmatprep.subr.bf16.mxu0 0
        %3982 = vmatpush1.bf16.msra.mxu0 %v3959
        %3983 = vmatprep.subr.bf16.mxu0 0
        %3984 = vmatpush1.bf16.msra.mxu0 %v3960
        %3985 = vmatprep.subr.bf16.mxu0 0
        %3986 = vmatpush1.bf16.msra.mxu0 0
        %3987 = vmatprep.subr.bf16.mxu0 0
        %3988 = vmatpush1.bf16.msra.mxu0 0
        %3989 = vmatprep.subr.bf16.mxu0 0
        %3990 = vmatpush1.bf16.msra.mxu0 0
        %3991 = vmatprep.subr.bf16.mxu0 0
        %3992 = vmatpush1.bf16.msra.mxu0 0
        %3993 = vmatprep.subr.bf16.mxu0 0
        %3994 = vmatpush1.bf16.msra.mxu0 0
        %3995 = vmatprep.subr.bf16.mxu0 0
        %3996 = vmatpush1.bf16.msra.mxu0 0
        %3997 = vmatprep.subr.bf16.mxu0 0
        %3998 = vmatpush1.bf16.msra.mxu0 0
        %3999 = vmatprep.subr.bf16.mxu0 0
        %4000 = vmatpush1.bf16.msra.mxu0 0
        %4001 = vmatprep.mubr.bf16.mxu0 0
        %4002 = vmatmul.mubr.bf16.gmra.mrb[0].mxu0 %v3867
        %v4003 = vpop.f32.mrb[0].mxu0
        %v4004 = vadd.f32 %v3920, %v4003
        %v4005 = vpop.f32.mrb[0].mxu0
        %v4006 = vpop.f32.mrb[0].mxu0
        %v4007 = vadd.f32 %v3920, %v4006
        %v4008 = vpop.f32.mrb[0].mxu0
        %4009 = vmatprep.mubr.bf16.mxu0 0
        %4010 = vmatmul.mubr.bf16.gmra.mrb[0].mxu0 %v3868
        %v4011 = vpop.f32.mrb[0].mxu0
        %v4012 = vadd.f32 %v3920, %v4011
        %v4013 = vpop.f32.mrb[0].mxu0
        %v4014 = vpop.f32.mrb[0].mxu0
        %v4015 = vadd.f32 %v3920, %v4014
        %v4016 = vpop.f32.mrb[0].mxu0
        %4017 = vmatprep.mubr.bf16.mxu0 0
        %4018 = vmatmul.mubr.bf16.gmra.mrb[0].mxu0 %v3869
        %v4019 = vpop.f32.mrb[0].mxu0
        %v4020 = vadd.f32 %v3920, %v4019
        %v4021 = vpop.f32.mrb[0].mxu0
        %v4022 = vpop.f32.mrb[0].mxu0
        %v4023 = vadd.f32 %v3920, %v4022
        %v4024 = vpop.f32.mrb[0].mxu0
        %4025 = vmatprep.mubr.bf16.mxu0 0
        %4026 = vmatmul.mubr.bf16.gmra.mrb[0].mxu0 %v3870
        %v4027 = vpop.f32.mrb[0].mxu0
        %v4028 = vadd.f32 %v3920, %v4027
        %v4029 = vpop.f32.mrb[0].mxu0
        %v4030 = vpop.f32.mrb[0].mxu0
        %v4031 = vadd.f32 %v3920, %v4030
        %v4032 = vpop.f32.mrb[0].mxu0
        %4033 = vmatprep.mubr.bf16.mxu0 0
        %4034 = vmatmul.mubr.bf16.gmra.mrb[0].mxu0 %v3871
        %v4035 = vpop.f32.mrb[0].mxu0
        %v4036 = vadd.f32 %v3920, %v4035
        %v4037 = vpop.f32.mrb[0].mxu0
        %v4038 = vpop.f32.mrb[0].mxu0
        %v4039 = vadd.f32 %v3920, %v4038
        %v4040 = vpop.f32.mrb[0].mxu0
        %4041 = vmatprep.mubr.bf16.mxu0 0
        %4042 = vmatmul.mubr.bf16.gmra.mrb[0].mxu0 %v3872
        %v4043 = vpop.f32.mrb[0].mxu0
        %v4044 = vadd.f32 %v3920, %v4043
        %v4045 = vpop.f32.mrb[0].mxu0
        %v4046 = vpop.f32.mrb[0].mxu0
        %v4047 = vadd.f32 %v3920, %v4046
        %v4048 = vpop.f32.mrb[0].mxu0
        %4049 = vmatprep.mubr.bf16.mxu0 0
        %4050 = vmatmul.mubr.bf16.gmra.mrb[0].mxu0 %v3873
        %v4051 = vpop.f32.mrb[0].mxu0
        %v4052 = vadd.f32 %v3920, %v4051
        %v4053 = vpop.f32.mrb[0].mxu0
        %v4054 = vpop.f32.mrb[0].mxu0
        %v4055 = vadd.f32 %v3920, %v4054
        %v4056 = vpop.f32.mrb[0].mxu0
        %4057 = vmatprep.mubr.bf16.mxu0 0
        %4058 = vmatmul.mubr.bf16.gmra.mrb[0].mxu0 %v3874
        %v4059 = vpop.f32.mrb[0].mxu0
        %v4060 = vadd.f32 %v3920, %v4059
        %v4061 = vpop.f32.mrb[0].mxu0
        %v4062 = vpop.f32.mrb[0].mxu0
        %v4063 = vadd.f32 %v3920, %v4062
        %v4064 = vpop.f32.mrb[0].mxu0
        %4065 = vmatprep.mubr.bf16.mxu0 0
        %4066 = vmatmul.mubr.bf16.gmra.mrb[0].mxu0 %v3875
        %v4067 = vpop.f32.mrb[0].mxu0
        %v4068 = vadd.f32 %v3920, %v4067
        %v4069 = vpop.f32.mrb[0].mxu0
        %v4070 = vpop.f32.mrb[0].mxu0
        %v4071 = vadd.f32 %v3920, %v4070
        %v4072 = vpop.f32.mrb[0].mxu0
        %4073 = vmatprep.mubr.bf16.mxu0 0
        %4074 = vmatmul.mubr.bf16.gmra.mrb[0].mxu0 %v3876
        %v4075 = vpop.f32.mrb[0].mxu0
        %v4076 = vadd.f32 %v3920, %v4075
        %v4077 = vpop.f32.mrb[0].mxu0
        %v4078 = vpop.f32.mrb[0].mxu0
        %v4079 = vadd.f32 %v3920, %v4078
        %v4080 = vpop.f32.mrb[0].mxu0
        %4081 = vmatprep.mubr.bf16.mxu0 0
        %4082 = vmatmul.mubr.bf16.gmra.mrb[0].mxu0 %v3877
        %v4083 = vpop.f32.mrb[0].mxu0
        %v4084 = vadd.f32 %v3920, %v4083
        %v4085 = vpop.f32.mrb[0].mxu0
        %v4086 = vpop.f32.mrb[0].mxu0
        %v4087 = vadd.f32 %v3920, %v4086
        %v4088 = vpop.f32.mrb[0].mxu0
        %4089 = vmatprep.mubr.bf16.mxu0 0
        %4090 = vmatmul.mubr.bf16.gmra.mrb[0].mxu0 %v3878
        %v4091 = vpop.f32.mrb[0].mxu0
        %v4092 = vadd.f32 %v3920, %v4091
        %v4093 = vpop.f32.mrb[0].mxu0
        %v4094 = vpop.f32.mrb[0].mxu0
        %v4095 = vadd.f32 %v3920, %v4094
        %v4096 = vpop.f32.mrb[0].mxu0
        %4097 = vmatprep.mubr.bf16.mxu0 0
        %4098 = vmatmul.mubr.bf16.gmra.mrb[0].mxu0 %v3879
        %v4099 = vpop.f32.mrb[0].mxu0
        %v4100 = vadd.f32 %v3920, %v4099
        %v4101 = vpop.f32.mrb[0].mxu0
        %v4102 = vpop.f32.mrb[0].mxu0
        %v4103 = vadd.f32 %v3920, %v4102
        %v4104 = vpop.f32.mrb[0].mxu0
        %4105 = vmatprep.mubr.bf16.mxu0 0
        %4106 = vmatmul.mubr.bf16.gmra.mrb[0].mxu0 %v3880
        %v4107 = vpop.f32.mrb[0].mxu0
        %v4108 = vadd.f32 %v3920, %v4107
        %v4109 = vpop.f32.mrb[0].mxu0
        %v4110 = vpop.f32.mrb[0].mxu0
        %v4111 = vadd.f32 %v3920, %v4110
        %v4112 = vpop.f32.mrb[0].mxu0
        %4113 = vmatprep.mubr.bf16.mxu0 0
        %4114 = vmatmul.mubr.bf16.gmra.mrb[0].mxu0 %v3881
        %v4115 = vpop.f32.mrb[0].mxu0
        %v4116 = vadd.f32 %v3920, %v4115
        %v4117 = vpop.f32.mrb[0].mxu0
        %v4118 = vpop.f32.mrb[0].mxu0
        %v4119 = vadd.f32 %v3920, %v4118
        %v4120 = vpop.f32.mrb[0].mxu0
        %4121 = vmatprep.mubr.bf16.mxu0 0
        %4122 = vmatmul.mubr.bf16.gmra.mrb[0].mxu0 %v3882
        %v4123 = vpop.f32.mrb[0].mxu0
        %v4124 = vadd.f32 %v3920, %v4123
        %v4125 = vpop.f32.mrb[0].mxu0
        %v4126 = vpop.f32.mrb[0].mxu0
        %v4127 = vadd.f32 %v3920, %v4126
        %v4128 = vpop.f32.mrb[0].mxu0
        %4129 = vmatprep.mubr.bf16.mxu0 0
        %4130 = vmatmul.mubr.bf16.gmra.mrb[0].mxu0 %v3883
        %v4131 = vpop.f32.mrb[0].mxu0
        %v4132 = vadd.f32 %v3920, %v4131
        %v4133 = vpop.f32.mrb[0].mxu0
        %v4134 = vpop.f32.mrb[0].mxu0
        %v4135 = vadd.f32 %v3920, %v4134
        %v4136 = vpop.f32.mrb[0].mxu0
        %4137 = vmatprep.mubr.bf16.mxu0 0
        %4138 = vmatmul.mubr.bf16.gmra.mrb[0].mxu0 %v3884
        %v4139 = vpop.f32.mrb[0].mxu0
        %v4140 = vadd.f32 %v3920, %v4139
        %v4141 = vpop.f32.mrb[0].mxu0
        %v4142 = vpop.f32.mrb[0].mxu0
        %v4143 = vadd.f32 %v3920, %v4142
        %v4144 = vpop.f32.mrb[0].mxu0
        %4145 = vmatprep.mubr.bf16.mxu0 0
        %4146 = vmatmul.mubr.bf16.gmra.mrb[0].mxu0 %v3885
        %v4147 = vpop.f32.mrb[0].mxu0
        %v4148 = vadd.f32 %v3920, %v4147
        %v4149 = vpop.f32.mrb[0].mxu0
        %v4150 = vpop.f32.mrb[0].mxu0
        %v4151 = vadd.f32 %v3920, %v4150
        %v4152 = vpop.f32.mrb[0].mxu0
        %4153 = vmatprep.mubr.bf16.mxu0 0
        %4154 = vmatmul.mubr.bf16.gmra.mrb[0].mxu0 %v3886
        %v4155 = vpop.f32.mrb[0].mxu0
        %v4156 = vadd.f32 %v3920, %v4155
        %v4157 = vpop.f32.mrb[0].mxu0
        %v4158 = vpop.f32.mrb[0].mxu0
        %v4159 = vadd.f32 %v3920, %v4158
        %v4160 = vpop.f32.mrb[0].mxu0
        %4161 = vmatprep.mubr.bf16.mxu0 0
        %4162 = vmatmul.mubr.bf16.gmra.mrb[0].mxu0 %v3887
        %v4163 = vpop.f32.mrb[0].mxu0
        %v4164 = vadd.f32 %v3920, %v4163
        %v4165 = vpop.f32.mrb[0].mxu0
        %v4166 = vpop.f32.mrb[0].mxu0
        %v4167 = vadd.f32 %v3920, %v4166
        %v4168 = vpop.f32.mrb[0].mxu0
        %4169 = vmatprep.mubr.bf16.mxu0 0
        %4170 = vmatmul.mubr.bf16.gmra.mrb[0].mxu0 %v3888
        %v4171 = vpop.f32.mrb[0].mxu0
        %v4172 = vadd.f32 %v3920, %v4171
        %v4173 = vpop.f32.mrb[0].mxu0
        %v4174 = vpop.f32.mrb[0].mxu0
        %v4175 = vadd.f32 %v3920, %v4174
        %v4176 = vpop.f32.mrb[0].mxu0
        %4177 = vmatprep.mubr.bf16.mxu0 0
        %4178 = vmatmul.mubr.bf16.gmra.mrb[0].mxu0 %v3889
        %v4179 = vpop.f32.mrb[0].mxu0
        %v4180 = vadd.f32 %v3920, %v4179
        %v4181 = vpop.f32.mrb[0].mxu0
        %v4182 = vpop.f32.mrb[0].mxu0
        %v4183 = vadd.f32 %v3920, %v4182
        %v4184 = vpop.f32.mrb[0].mxu0
        %4185 = vmatprep.mubr.bf16.mxu0 0
        %4186 = vmatmul.mubr.bf16.gmra.mrb[0].mxu0 %v3890
        %v4187 = vpop.f32.mrb[0].mxu0
        %v4188 = vadd.f32 %v3920, %v4187
        %v4189 = vpop.f32.mrb[0].mxu0
        %v4190 = vpop.f32.mrb[0].mxu0
        %v4191 = vadd.f32 %v3920, %v4190
        %v4192 = vpop.f32.mrb[0].mxu0
        %4193 = vmatprep.mubr.bf16.mxu0 0
        %4194 = vmatmul.mubr.bf16.gmra.mrb[0].mxu0 %v3891
        %v4195 = vpop.f32.mrb[0].mxu0
        %v4196 = vadd.f32 %v3920, %v4195
        %v4197 = vpop.f32.mrb[0].mxu0
        %v4198 = vpop.f32.mrb[0].mxu0
        %v4199 = vadd.f32 %v3920, %v4198
        %v4200 = vpop.f32.mrb[0].mxu0
        %4201 = vmatprep.mubr.bf16.mxu0 0
        %4202 = vmatmul.mubr.bf16.gmra.mrb[0].mxu0 %v3892
        %v4203 = vpop.f32.mrb[0].mxu0
        %v4204 = vadd.f32 %v3920, %v4203
        %v4205 = vpop.f32.mrb[0].mxu0
        %v4206 = vpop.f32.mrb[0].mxu0
        %v4207 = vadd.f32 %v3920, %v4206
        %v4208 = vpop.f32.mrb[0].mxu0
        %4209 = vmatprep.mubr.bf16.mxu0 0
        %4210 = vmatmul.mubr.bf16.gmra.mrb[0].mxu0 %v3893
        %v4211 = vpop.f32.mrb[0].mxu0
        %v4212 = vadd.f32 %v3920, %v4211
        %v4213 = vpop.f32.mrb[0].mxu0
        %v4214 = vpop.f32.mrb[0].mxu0
        %v4215 = vadd.f32 %v3920, %v4214
        %v4216 = vpop.f32.mrb[0].mxu0
        %4217 = vmatprep.mubr.bf16.mxu0 0
        %4218 = vmatmul.mubr.bf16.gmra.mrb[0].mxu0 %v3894
        %v4219 = vpop.f32.mrb[0].mxu0
        %v4220 = vadd.f32 %v3920, %v4219
        %v4221 = vpop.f32.mrb[0].mxu0
        %v4222 = vpop.f32.mrb[0].mxu0
        %v4223 = vadd.f32 %v3920, %v4222
        %v4224 = vpop.f32.mrb[0].mxu0
        %4225 = vmatprep.mubr.bf16.mxu0 0
        %4226 = vmatmul.mubr.bf16.gmra.mrb[0].mxu0 %v3895
        %v4227 = vpop.f32.mrb[0].mxu0
        %v4228 = vadd.f32 %v3920, %v4227
        %v4229 = vpop.f32.mrb[0].mxu0
        %v4230 = vpop.f32.mrb[0].mxu0
        %v4231 = vadd.f32 %v3920, %v4230
        %v4232 = vpop.f32.mrb[0].mxu0
        %4233 = vmatprep.mubr.bf16.mxu0 0
        %4234 = vmatmul.mubr.bf16.gmra.mrb[0].mxu0 %v3896
        %v4235 = vpop.f32.mrb[0].mxu0
        %v4236 = vadd.f32 %v3920, %v4235
        %v4237 = vpop.f32.mrb[0].mxu0
        %v4238 = vpop.f32.mrb[0].mxu0
        %v4239 = vadd.f32 %v3920, %v4238
        %v4240 = vpop.f32.mrb[0].mxu0
        %4241 = vmatprep.mubr.bf16.mxu0 0
        %4242 = vmatmul.mubr.bf16.gmra.mrb[0].mxu0 %v3897
        %v4243 = vpop.f32.mrb[0].mxu0
        %v4244 = vadd.f32 %v3920, %v4243
        %v4245 = vpop.f32.mrb[0].mxu0
        %v4246 = vpop.f32.mrb[0].mxu0
        %v4247 = vadd.f32 %v3920, %v4246
        %v4248 = vpop.f32.mrb[0].mxu0
        %4249 = vmatprep.mubr.bf16.mxu0 0
        %4250 = vmatmul.mubr.bf16.gmra.mrb[0].mxu0 %v3898
        %v4251 = vpop.f32.mrb[0].mxu0
        %v4252 = vadd.f32 %v3920, %v4251
        %v4253 = vpop.f32.mrb[0].mxu0
        %v4254 = vpop.f32.mrb[0].mxu0
        %v4255 = vadd.f32 %v3920, %v4254
        %v4256 = vpop.f32.mrb[0].mxu0
        %4257 = vdwg.mxu0
        %v4258 = vmax.f32 %v4004, 0.0
        %v4259 = vmax.f32 %v4007, 0.0
        %v4260 = vmax.f32 %v4012, 0.0
        %v4261 = vmax.f32 %v4015, 0.0
        %v4262 = vmax.f32 %v4020, 0.0
        %v4263 = vmax.f32 %v4023, 0.0
        %v4264 = vmax.f32 %v4028, 0.0
        %v4265 = vmax.f32 %v4031, 0.0
        %v4266 = vmax.f32 %v4036, 0.0
        %v4267 = vmax.f32 %v4039, 0.0
        %v4268 = vmax.f32 %v4044, 0.0
        %v4269 = vmax.f32 %v4047, 0.0
        %v4270 = vmax.f32 %v4052, 0.0
        %v4271 = vmax.f32 %v4055, 0.0
        %v4272 = vmax.f32 %v4060, 0.0
        %v4273 = vmax.f32 %v4063, 0.0
        %v4274 = vmax.f32 %v4068, 0.0
        %v4275 = vmax.f32 %v4071, 0.0
        %v4276 = vmax.f32 %v4076, 0.0
        %v4277 = vmax.f32 %v4079, 0.0
        %v4278 = vmax.f32 %v4084, 0.0
        %v4279 = vmax.f32 %v4087, 0.0
        %v4280 = vmax.f32 %v4092, 0.0
        %v4281 = vmax.f32 %v4095, 0.0
        %v4282 = vmax.f32 %v4100, 0.0
        %v4283 = vmax.f32 %v4103, 0.0
        %v4284 = vmax.f32 %v4108, 0.0
        %v4285 = vmax.f32 %v4111, 0.0
        %v4286 = vmax.f32 %v4116, 0.0
        %v4287 = vmax.f32 %v4119, 0.0
        %v4288 = vmax.f32 %v4124, 0.0
        %v4289 = vmax.f32 %v4127, 0.0
        %v4290 = vmax.f32 %v4132, 0.0
        %v4291 = vmax.f32 %v4135, 0.0
        %v4292 = vmax.f32 %v4140, 0.0
        %v4293 = vmax.f32 %v4143, 0.0
        %v4294 = vmax.f32 %v4148, 0.0
        %v4295 = vmax.f32 %v4151, 0.0
        %v4296 = vmax.f32 %v4156, 0.0
        %v4297 = vmax.f32 %v4159, 0.0
        %v4298 = vmax.f32 %v4164, 0.0
        %v4299 = vmax.f32 %v4167, 0.0
        %v4300 = vmax.f32 %v4172, 0.0
        %v4301 = vmax.f32 %v4175, 0.0
        %v4302 = vmax.f32 %v4180, 0.0
        %v4303 = vmax.f32 %v4183, 0.0
        %v4304 = vmax.f32 %v4188, 0.0
        %v4305 = vmax.f32 %v4191, 0.0
        %v4306 = vmax.f32 %v4196, 0.0
        %v4307 = vmax.f32 %v4199, 0.0
        %v4308 = vmax.f32 %v4204, 0.0
        %v4309 = vmax.f32 %v4207, 0.0
        %v4310 = vmax.f32 %v4212, 0.0
        %v4311 = vmax.f32 %v4215, 0.0
        %v4312 = vmax.f32 %v4220, 0.0
        %v4313 = vmax.f32 %v4223, 0.0
        %v4314 = vmax.f32 %v4228, 0.0
        %v4315 = vmax.f32 %v4231, 0.0
        %v4316 = vmax.f32 %v4236, 0.0
        %v4317 = vmax.f32 %v4239, 0.0
        %v4318 = vmax.f32 %v4244, 0.0
        %v4319 = vmax.f32 %v4247, 0.0
        %v4320 = vmax.f32 %v4252, 0.0
        %v4321 = vmax.f32 %v4255, 0.0
        %v4322 = vpack.c.bf16 %v4259, %v4258
        %v4323 = vpack.c.bf16 %v4261, %v4260
        %v4324 = vpack.c.bf16 %v4263, %v4262
        %v4325 = vpack.c.bf16 %v4265, %v4264
        %v4326 = vpack.c.bf16 %v4267, %v4266
        %v4327 = vpack.c.bf16 %v4269, %v4268
        %v4328 = vpack.c.bf16 %v4271, %v4270
        %v4329 = vpack.c.bf16 %v4273, %v4272
        %v4330 = vpack.c.bf16 %v4275, %v4274
        %v4331 = vpack.c.bf16 %v4277, %v4276
        %v4332 = vpack.c.bf16 %v4279, %v4278
        %v4333 = vpack.c.bf16 %v4281, %v4280
        %v4334 = vpack.c.bf16 %v4283, %v4282
        %v4335 = vpack.c.bf16 %v4285, %v4284
        %v4336 = vpack.c.bf16 %v4287, %v4286
        %v4337 = vpack.c.bf16 %v4289, %v4288
        %v4338 = vpack.c.bf16 %v4291, %v4290
        %v4339 = vpack.c.bf16 %v4293, %v4292
        %v4340 = vpack.c.bf16 %v4295, %v4294
        %v4341 = vpack.c.bf16 %v4297, %v4296
        %v4342 = vpack.c.bf16 %v4299, %v4298
        %v4343 = vpack.c.bf16 %v4301, %v4300
        %v4344 = vpack.c.bf16 %v4303, %v4302
        %v4345 = vpack.c.bf16 %v4305, %v4304
        %v4346 = vpack.c.bf16 %v4307, %v4306
        %v4347 = vpack.c.bf16 %v4309, %v4308
        %v4348 = vpack.c.bf16 %v4311, %v4310
        %v4349 = vpack.c.bf16 %v4313, %v4312
        %v4350 = vpack.c.bf16 %v4315, %v4314
        %v4351 = vpack.c.bf16 %v4317, %v4316
        %v4352 = vpack.c.bf16 %v4319, %v4318
        %v4353 = vpack.c.bf16 %v4321, %v4320
        %v4354 = vld [vmem:[%s4] sm:$0xf]
        %v4355 = vld [vmem:[%s4 + $0x4] sm:$0xf]
        %v4356 = vld [vmem:[%s4 + $0x8] sm:$0xf]
        %v4357 = vld [vmem:[%s4 + $0xc] sm:$0xf]
        %v4358 = vld [vmem:[%s4 + $0x10] sm:$0xf]
        %v4359 = vld [vmem:[%s4 + $0x14] sm:$0xf]
        %v4360 = vld [vmem:[%s4 + $0x18] sm:$0xf]
        %v4361 = vld [vmem:[%s4 + $0x1c] sm:$0xf]
        %v4362 = vld [vmem:[%s4 + $0x20] sm:$0xf]
        %v4363 = vld [vmem:[%s4 + $0x24] sm:$0xf]
        %v4364 = vld [vmem:[%s4 + $0x28] sm:$0xf]
        %v4365 = vld [vmem:[%s4 + $0x2c] sm:$0xf]
        %v4366 = vld [vmem:[%s4 + $0x30] sm:$0xf]
        %v4367 = vld [vmem:[%s4 + $0x34] sm:$0xf]
        %v4368 = vld [vmem:[%s4 + $0x38] sm:$0xf]
        %v4369 = vld [vmem:[%s4 + $0x3c] sm:$0xf]
        %v4370 = vld [vmem:[%s5] sm:$0x1]
        %v4372 = vlaneseq
        %v4373 = vshrl.u32 %v4372, 7
        %v4374 = vsub.s32 0, %v4373
        %v4375 = vrot.slane %v4370, %v4374
        %v4393 = vunpack.c.l.b16 %v4354
        %v4394 = vunpack.c.l.b16 %v4355
        %v4395 = vunpack.c.l.b16 %v4356
        %v4396 = vunpack.c.l.b16 %v4357
        %v4397 = vunpack.c.l.b16 %v4358
        %v4398 = vunpack.c.l.b16 %v4359
        %v4399 = vunpack.c.l.b16 %v4360
        %v4400 = vunpack.c.l.b16 %v4361
        %v4401 = vunpack.c.l.b16 %v4362
        %v4402 = vunpack.c.l.b16 %v4363
        %v4403 = vunpack.c.l.b16 %v4364
        %v4404 = vunpack.c.l.b16 %v4365
        %v4405 = vunpack.c.l.b16 %v4366
        %v4406 = vunpack.c.l.b16 %v4367
        %v4407 = vunpack.c.l.b16 %v4368
        %v4408 = vunpack.c.l.b16 %v4369
        %v4409 = vpack.c.b16 %v4394, %v4393
        %v4410 = vpack.c.b16 %v4396, %v4395
        %v4411 = vpack.c.b16 %v4398, %v4397
        %v4412 = vpack.c.b16 %v4400, %v4399
        %v4413 = vpack.c.b16 %v4402, %v4401
        %v4414 = vpack.c.b16 %v4404, %v4403
        %v4415 = vpack.c.b16 %v4406, %v4405
        %v4416 = vpack.c.b16 %v4408, %v4407
        %4425 = vmatprep.subr.bf16.mxu0 0
        %4426 = vmatpush1.bf16.msra.mxu0 %v4409
        %4427 = vmatprep.subr.bf16.mxu0 0
        %4428 = vmatpush1.bf16.msra.mxu0 %v4410
        %4429 = vmatprep.subr.bf16.mxu0 0
        %4430 = vmatpush1.bf16.msra.mxu0 %v4411
        %4431 = vmatprep.subr.bf16.mxu0 0
        %4432 = vmatpush1.bf16.msra.mxu0 %v4412
        %4433 = vmatprep.subr.bf16.mxu0 0
        %4434 = vmatpush1.bf16.msra.mxu0 %v4413
        %4435 = vmatprep.subr.bf16.mxu0 0
        %4436 = vmatpush1.bf16.msra.mxu0 %v4414
        %4437 = vmatprep.subr.bf16.mxu0 0
        %4438 = vmatpush1.bf16.msra.mxu0 %v4415
        %4439 = vmatprep.subr.bf16.mxu0 0
        %4440 = vmatpush1.bf16.msra.mxu0 %v4416
        %4441 = vmatprep.subr.bf16.mxu0 0
        %4442 = vmatpush1.bf16.msra.mxu0 0
        %4443 = vmatprep.subr.bf16.mxu0 0
        %4444 = vmatpush1.bf16.msra.mxu0 0
        %4445 = vmatprep.subr.bf16.mxu0 0
        %4446 = vmatpush1.bf16.msra.mxu0 0
        %4447 = vmatprep.subr.bf16.mxu0 0
        %4448 = vmatpush1.bf16.msra.mxu0 0
        %4449 = vmatprep.subr.bf16.mxu0 0
        %4450 = vmatpush1.bf16.msra.mxu0 0
        %4451 = vmatprep.subr.bf16.mxu0 0
        %4452 = vmatpush1.bf16.msra.mxu0 0
        %4453 = vmatprep.subr.bf16.mxu0 0
        %4454 = vmatpush1.bf16.msra.mxu0 0
        %4455 = vmatprep.subr.bf16.mxu0 0
        %4456 = vmatpush1.bf16.msra.mxu0 0
        %4457 = vmatprep.mubr.bf16.mxu0 0
        %4458 = vmatmul.mubr.bf16.gmra.mrb[0].mxu0 %v4322
        %v4459 = vpop.f32.mrb[0].mxu0
        %v4460 = vadd.f32 %v4375, %v4459
        %v4461 = vpop.f32.mrb[0].mxu0
        %v4462 = vpop.f32.mrb[0].mxu0
        %v4463 = vadd.f32 %v4375, %v4462
        %v4464 = vpop.f32.mrb[0].mxu0
        %4465 = vmatprep.mubr.bf16.mxu0 0
        %4466 = vmatmul.mubr.bf16.gmra.mrb[0].mxu0 %v4323
        %v4467 = vpop.f32.mrb[0].mxu0
        %v4468 = vadd.f32 %v4375, %v4467
        %v4469 = vpop.f32.mrb[0].mxu0
        %v4470 = vpop.f32.mrb[0].mxu0
        %v4471 = vadd.f32 %v4375, %v4470
        %v4472 = vpop.f32.mrb[0].mxu0
        %4473 = vmatprep.mubr.bf16.mxu0 0
        %4474 = vmatmul.mubr.bf16.gmra.mrb[0].mxu0 %v4324
        %v4475 = vpop.f32.mrb[0].mxu0
        %v4476 = vadd.f32 %v4375, %v4475
        %v4477 = vpop.f32.mrb[0].mxu0
        %v4478 = vpop.f32.mrb[0].mxu0
        %v4479 = vadd.f32 %v4375, %v4478
        %v4480 = vpop.f32.mrb[0].mxu0
        %4481 = vmatprep.mubr.bf16.mxu0 0
        %4482 = vmatmul.mubr.bf16.gmra.mrb[0].mxu0 %v4325
        %v4483 = vpop.f32.mrb[0].mxu0
        %v4484 = vadd.f32 %v4375, %v4483
        %v4485 = vpop.f32.mrb[0].mxu0
        %v4486 = vpop.f32.mrb[0].mxu0
        %v4487 = vadd.f32 %v4375, %v4486
        %v4488 = vpop.f32.mrb[0].mxu0
        %4489 = vmatprep.mubr.bf16.mxu0 0
        %4490 = vmatmul.mubr.bf16.gmra.mrb[0].mxu0 %v4326
        %v4491 = vpop.f32.mrb[0].mxu0
        %v4492 = vadd.f32 %v4375, %v4491
        %v4493 = vpop.f32.mrb[0].mxu0
        %v4494 = vpop.f32.mrb[0].mxu0
        %v4495 = vadd.f32 %v4375, %v4494
        %v4496 = vpop.f32.mrb[0].mxu0
        %4497 = vmatprep.mubr.bf16.mxu0 0
        %4498 = vmatmul.mubr.bf16.gmra.mrb[0].mxu0 %v4327
        %v4499 = vpop.f32.mrb[0].mxu0
        %v4500 = vadd.f32 %v4375, %v4499
        %v4501 = vpop.f32.mrb[0].mxu0
        %v4502 = vpop.f32.mrb[0].mxu0
        %v4503 = vadd.f32 %v4375, %v4502
        %v4504 = vpop.f32.mrb[0].mxu0
        %4505 = vmatprep.mubr.bf16.mxu0 0
        %4506 = vmatmul.mubr.bf16.gmra.mrb[0].mxu0 %v4328
        %v4507 = vpop.f32.mrb[0].mxu0
        %v4508 = vadd.f32 %v4375, %v4507
        %v4509 = vpop.f32.mrb[0].mxu0
        %v4510 = vpop.f32.mrb[0].mxu0
        %v4511 = vadd.f32 %v4375, %v4510
        %v4512 = vpop.f32.mrb[0].mxu0
        %4513 = vmatprep.mubr.bf16.mxu0 0
        %4514 = vmatmul.mubr.bf16.gmra.mrb[0].mxu0 %v4329
        %v4515 = vpop.f32.mrb[0].mxu0
        %v4516 = vadd.f32 %v4375, %v4515
        %v4517 = vpop.f32.mrb[0].mxu0
        %v4518 = vpop.f32.mrb[0].mxu0
        %v4519 = vadd.f32 %v4375, %v4518
        %v4520 = vpop.f32.mrb[0].mxu0
        %4521 = vmatprep.mubr.bf16.mxu0 0
        %4522 = vmatmul.mubr.bf16.gmra.mrb[0].mxu0 %v4330
        %v4523 = vpop.f32.mrb[0].mxu0
        %v4524 = vadd.f32 %v4375, %v4523
        %v4525 = vpop.f32.mrb[0].mxu0
        %v4526 = vpop.f32.mrb[0].mxu0
        %v4527 = vadd.f32 %v4375, %v4526
        %v4528 = vpop.f32.mrb[0].mxu0
        %4529 = vmatprep.mubr.bf16.mxu0 0
        %4530 = vmatmul.mubr.bf16.gmra.mrb[0].mxu0 %v4331
        %v4531 = vpop.f32.mrb[0].mxu0
        %v4532 = vadd.f32 %v4375, %v4531
        %v4533 = vpop.f32.mrb[0].mxu0
        %v4534 = vpop.f32.mrb[0].mxu0
        %v4535 = vadd.f32 %v4375, %v4534
        %v4536 = vpop.f32.mrb[0].mxu0
        %4537 = vmatprep.mubr.bf16.mxu0 0
        %4538 = vmatmul.mubr.bf16.gmra.mrb[0].mxu0 %v4332
        %v4539 = vpop.f32.mrb[0].mxu0
        %v4540 = vadd.f32 %v4375, %v4539
        %v4541 = vpop.f32.mrb[0].mxu0
        %v4542 = vpop.f32.mrb[0].mxu0
        %v4543 = vadd.f32 %v4375, %v4542
        %v4544 = vpop.f32.mrb[0].mxu0
        %4545 = vmatprep.mubr.bf16.mxu0 0
        %4546 = vmatmul.mubr.bf16.gmra.mrb[0].mxu0 %v4333
        %v4547 = vpop.f32.mrb[0].mxu0
        %v4548 = vadd.f32 %v4375, %v4547
        %v4549 = vpop.f32.mrb[0].mxu0
        %v4550 = vpop.f32.mrb[0].mxu0
        %v4551 = vadd.f32 %v4375, %v4550
        %v4552 = vpop.f32.mrb[0].mxu0
        %4553 = vmatprep.mubr.bf16.mxu0 0
        %4554 = vmatmul.mubr.bf16.gmra.mrb[0].mxu0 %v4334
        %v4555 = vpop.f32.mrb[0].mxu0
        %v4556 = vadd.f32 %v4375, %v4555
        %v4557 = vpop.f32.mrb[0].mxu0
        %v4558 = vpop.f32.mrb[0].mxu0
        %v4559 = vadd.f32 %v4375, %v4558
        %v4560 = vpop.f32.mrb[0].mxu0
        %4561 = vmatprep.mubr.bf16.mxu0 0
        %4562 = vmatmul.mubr.bf16.gmra.mrb[0].mxu0 %v4335
        %v4563 = vpop.f32.mrb[0].mxu0
        %v4564 = vadd.f32 %v4375, %v4563
        %v4565 = vpop.f32.mrb[0].mxu0
        %v4566 = vpop.f32.mrb[0].mxu0
        %v4567 = vadd.f32 %v4375, %v4566
        %v4568 = vpop.f32.mrb[0].mxu0
        %4569 = vmatprep.mubr.bf16.mxu0 0
        %4570 = vmatmul.mubr.bf16.gmra.mrb[0].mxu0 %v4336
        %v4571 = vpop.f32.mrb[0].mxu0
        %v4572 = vadd.f32 %v4375, %v4571
        %v4573 = vpop.f32.mrb[0].mxu0
        %v4574 = vpop.f32.mrb[0].mxu0
        %v4575 = vadd.f32 %v4375, %v4574
        %v4576 = vpop.f32.mrb[0].mxu0
        %4577 = vmatprep.mubr.bf16.mxu0 0
        %4578 = vmatmul.mubr.bf16.gmra.mrb[0].mxu0 %v4337
        %v4579 = vpop.f32.mrb[0].mxu0
        %v4580 = vadd.f32 %v4375, %v4579
        %v4581 = vpop.f32.mrb[0].mxu0
        %v4582 = vpop.f32.mrb[0].mxu0
        %v4583 = vadd.f32 %v4375, %v4582
        %v4584 = vpop.f32.mrb[0].mxu0
        %4585 = vmatprep.mubr.bf16.mxu0 0
        %4586 = vmatmul.mubr.bf16.gmra.mrb[0].mxu0 %v4338
        %v4587 = vpop.f32.mrb[0].mxu0
        %v4588 = vadd.f32 %v4375, %v4587
        %v4589 = vpop.f32.mrb[0].mxu0
        %v4590 = vpop.f32.mrb[0].mxu0
        %v4591 = vadd.f32 %v4375, %v4590
        %v4592 = vpop.f32.mrb[0].mxu0
        %4593 = vmatprep.mubr.bf16.mxu0 0
        %4594 = vmatmul.mubr.bf16.gmra.mrb[0].mxu0 %v4339
        %v4595 = vpop.f32.mrb[0].mxu0
        %v4596 = vadd.f32 %v4375, %v4595
        %v4597 = vpop.f32.mrb[0].mxu0
        %v4598 = vpop.f32.mrb[0].mxu0
        %v4599 = vadd.f32 %v4375, %v4598
        %v4600 = vpop.f32.mrb[0].mxu0
        %4601 = vmatprep.mubr.bf16.mxu0 0
        %4602 = vmatmul.mubr.bf16.gmra.mrb[0].mxu0 %v4340
        %v4603 = vpop.f32.mrb[0].mxu0
        %v4604 = vadd.f32 %v4375, %v4603
        %v4605 = vpop.f32.mrb[0].mxu0
        %v4606 = vpop.f32.mrb[0].mxu0
        %v4607 = vadd.f32 %v4375, %v4606
        %v4608 = vpop.f32.mrb[0].mxu0
        %4609 = vmatprep.mubr.bf16.mxu0 0
        %4610 = vmatmul.mubr.bf16.gmra.mrb[0].mxu0 %v4341
        %v4611 = vpop.f32.mrb[0].mxu0
        %v4612 = vadd.f32 %v4375, %v4611
        %v4613 = vpop.f32.mrb[0].mxu0
        %v4614 = vpop.f32.mrb[0].mxu0
        %v4615 = vadd.f32 %v4375, %v4614
        %v4616 = vpop.f32.mrb[0].mxu0
        %4617 = vmatprep.mubr.bf16.mxu0 0
        %4618 = vmatmul.mubr.bf16.gmra.mrb[0].mxu0 %v4342
        %v4619 = vpop.f32.mrb[0].mxu0
        %v4620 = vadd.f32 %v4375, %v4619
        %v4621 = vpop.f32.mrb[0].mxu0
        %v4622 = vpop.f32.mrb[0].mxu0
        %v4623 = vadd.f32 %v4375, %v4622
        %v4624 = vpop.f32.mrb[0].mxu0
        %4625 = vmatprep.mubr.bf16.mxu0 0
        %4626 = vmatmul.mubr.bf16.gmra.mrb[0].mxu0 %v4343
        %v4627 = vpop.f32.mrb[0].mxu0
        %v4628 = vadd.f32 %v4375, %v4627
        %v4629 = vpop.f32.mrb[0].mxu0
        %v4630 = vpop.f32.mrb[0].mxu0
        %v4631 = vadd.f32 %v4375, %v4630
        %v4632 = vpop.f32.mrb[0].mxu0
        %4633 = vmatprep.mubr.bf16.mxu0 0
        %4634 = vmatmul.mubr.bf16.gmra.mrb[0].mxu0 %v4344
        %v4635 = vpop.f32.mrb[0].mxu0
        %v4636 = vadd.f32 %v4375, %v4635
        %v4637 = vpop.f32.mrb[0].mxu0
        %v4638 = vpop.f32.mrb[0].mxu0
        %v4639 = vadd.f32 %v4375, %v4638
        %v4640 = vpop.f32.mrb[0].mxu0
        %4641 = vmatprep.mubr.bf16.mxu0 0
        %4642 = vmatmul.mubr.bf16.gmra.mrb[0].mxu0 %v4345
        %v4643 = vpop.f32.mrb[0].mxu0
        %v4644 = vadd.f32 %v4375, %v4643
        %v4645 = vpop.f32.mrb[0].mxu0
        %v4646 = vpop.f32.mrb[0].mxu0
        %v4647 = vadd.f32 %v4375, %v4646
        %v4648 = vpop.f32.mrb[0].mxu0
        %4649 = vmatprep.mubr.bf16.mxu0 0
        %4650 = vmatmul.mubr.bf16.gmra.mrb[0].mxu0 %v4346
        %v4651 = vpop.f32.mrb[0].mxu0
        %v4652 = vadd.f32 %v4375, %v4651
        %v4653 = vpop.f32.mrb[0].mxu0
        %v4654 = vpop.f32.mrb[0].mxu0
        %v4655 = vadd.f32 %v4375, %v4654
        %v4656 = vpop.f32.mrb[0].mxu0
        %4657 = vmatprep.mubr.bf16.mxu0 0
        %4658 = vmatmul.mubr.bf16.gmra.mrb[0].mxu0 %v4347
        %v4659 = vpop.f32.mrb[0].mxu0
        %v4660 = vadd.f32 %v4375, %v4659
        %v4661 = vpop.f32.mrb[0].mxu0
        %v4662 = vpop.f32.mrb[0].mxu0
        %v4663 = vadd.f32 %v4375, %v4662
        %v4664 = vpop.f32.mrb[0].mxu0
        %4665 = vmatprep.mubr.bf16.mxu0 0
        %4666 = vmatmul.mubr.bf16.gmra.mrb[0].mxu0 %v4348
        %v4667 = vpop.f32.mrb[0].mxu0
        %v4668 = vadd.f32 %v4375, %v4667
        %v4669 = vpop.f32.mrb[0].mxu0
        %v4670 = vpop.f32.mrb[0].mxu0
        %v4671 = vadd.f32 %v4375, %v4670
        %v4672 = vpop.f32.mrb[0].mxu0
        %4673 = vmatprep.mubr.bf16.mxu0 0
        %4674 = vmatmul.mubr.bf16.gmra.mrb[0].mxu0 %v4349
        %v4675 = vpop.f32.mrb[0].mxu0
        %v4676 = vadd.f32 %v4375, %v4675
        %v4677 = vpop.f32.mrb[0].mxu0
        %v4678 = vpop.f32.mrb[0].mxu0
        %v4679 = vadd.f32 %v4375, %v4678
        %v4680 = vpop.f32.mrb[0].mxu0
        %4681 = vmatprep.mubr.bf16.mxu0 0
        %4682 = vmatmul.mubr.bf16.gmra.mrb[0].mxu0 %v4350
        %v4683 = vpop.f32.mrb[0].mxu0
        %v4684 = vadd.f32 %v4375, %v4683
        %v4685 = vpop.f32.mrb[0].mxu0
        %v4686 = vpop.f32.mrb[0].mxu0
        %v4687 = vadd.f32 %v4375, %v4686
        %v4688 = vpop.f32.mrb[0].mxu0
        %4689 = vmatprep.mubr.bf16.mxu0 0
        %4690 = vmatmul.mubr.bf16.gmra.mrb[0].mxu0 %v4351
        %v4691 = vpop.f32.mrb[0].mxu0
        %v4692 = vadd.f32 %v4375, %v4691
        %v4693 = vpop.f32.mrb[0].mxu0
        %v4694 = vpop.f32.mrb[0].mxu0
        %v4695 = vadd.f32 %v4375, %v4694
        %v4696 = vpop.f32.mrb[0].mxu0
        %4697 = vmatprep.mubr.bf16.mxu0 0
        %4698 = vmatmul.mubr.bf16.gmra.mrb[0].mxu0 %v4352
        %v4699 = vpop.f32.mrb[0].mxu0
        %v4700 = vadd.f32 %v4375, %v4699
        %v4701 = vpop.f32.mrb[0].mxu0
        %v4702 = vpop.f32.mrb[0].mxu0
        %v4703 = vadd.f32 %v4375, %v4702
        %v4704 = vpop.f32.mrb[0].mxu0
        %4705 = vmatprep.mubr.bf16.mxu0 0
        %4706 = vmatmul.mubr.bf16.gmra.mrb[0].mxu0 %v4353
        %v4707 = vpop.f32.mrb[0].mxu0
        %v4708 = vadd.f32 %v4375, %v4707
        %v4709 = vpop.f32.mrb[0].mxu0
        %v4710 = vpop.f32.mrb[0].mxu0
        %v4711 = vadd.f32 %v4375, %v4710
        %v4712 = vpop.f32.mrb[0].mxu0
        %4713 = vdwg.mxu0
        %4714 = vst [vmem:[%s245] sm:$0xff] %v4460
        %4715 = vst [vmem:[%s245 + $0x8] sm:$0xff] %v4463
        %4716 = vst [vmem:[%s245 + $0x10] sm:$0xff] %v4468
        %4717 = vst [vmem:[%s245 + $0x18] sm:$0xff] %v4471
        %4718 = vst [vmem:[%s245 + $0x20] sm:$0xff] %v4476
        %4719 = vst [vmem:[%s245 + $0x28] sm:$0xff] %v4479
        %4720 = vst [vmem:[%s245 + $0x30] sm:$0xff] %v4484
        %4721 = vst [vmem:[%s245 + $0x38] sm:$0xff] %v4487
        %4722 = vst [vmem:[%s245 + $0x40] sm:$0xff] %v4492
        %4723 = vst [vmem:[%s245 + $0x48] sm:$0xff] %v4495
        %4724 = vst [vmem:[%s245 + $0x50] sm:$0xff] %v4500
        %4725 = vst [vmem:[%s245 + $0x58] sm:$0xff] %v4503
        %4726 = vst [vmem:[%s245 + $0x60] sm:$0xff] %v4508
        %4727 = vst [vmem:[%s245 + $0x68] sm:$0xff] %v4511
        %4728 = vst [vmem:[%s245 + $0x70] sm:$0xff] %v4516
        %4729 = vst [vmem:[%s245 + $0x78] sm:$0xff] %v4519
        %4730 = vst [vmem:[%s245 + $0x80] sm:$0xff] %v4524
        %4731 = vst [vmem:[%s245 + $0x88] sm:$0xff] %v4527
        %4732 = vst [vmem:[%s245 + $0x90] sm:$0xff] %v4532
        %4733 = vst [vmem:[%s245 + $0x98] sm:$0xff] %v4535
        %4734 = vst [vmem:[%s245 + $0xa0] sm:$0xff] %v4540
        %4735 = vst [vmem:[%s245 + $0xa8] sm:$0xff] %v4543
        %4736 = vst [vmem:[%s245 + $0xb0] sm:$0xff] %v4548
        %4737 = vst [vmem:[%s245 + $0xb8] sm:$0xff] %v4551
        %4738 = vst [vmem:[%s245 + $0xc0] sm:$0xff] %v4556
        %4739 = vst [vmem:[%s245 + $0xc8] sm:$0xff] %v4559
        %4740 = vst [vmem:[%s245 + $0xd0] sm:$0xff] %v4564
        %4741 = vst [vmem:[%s245 + $0xd8] sm:$0xff] %v4567
        %4742 = vst [vmem:[%s245 + $0xe0] sm:$0xff] %v4572
        %4743 = vst [vmem:[%s245 + $0xe8] sm:$0xff] %v4575
        %4744 = vst [vmem:[%s245 + $0xf0] sm:$0xff] %v4580
        %4745 = vst [vmem:[%s245 + $0xf8] sm:$0xff] %v4583
        %4746 = vst [vmem:[%s245 + $0x100] sm:$0xff] %v4588
        %4747 = vst [vmem:[%s245 + $0x108] sm:$0xff] %v4591
        %4748 = vst [vmem:[%s245 + $0x110] sm:$0xff] %v4596
        %4749 = vst [vmem:[%s245 + $0x118] sm:$0xff] %v4599
        %4750 = vst [vmem:[%s245 + $0x120] sm:$0xff] %v4604
        %4751 = vst [vmem:[%s245 + $0x128] sm:$0xff] %v4607
        %4752 = vst [vmem:[%s245 + $0x130] sm:$0xff] %v4612
        %4753 = vst [vmem:[%s245 + $0x138] sm:$0xff] %v4615
        %4754 = vst [vmem:[%s245 + $0x140] sm:$0xff] %v4620
        %4755 = vst [vmem:[%s245 + $0x148] sm:$0xff] %v4623
        %4756 = vst [vmem:[%s245 + $0x150] sm:$0xff] %v4628
        %4757 = vst [vmem:[%s245 + $0x158] sm:$0xff] %v4631
        %4758 = vst [vmem:[%s245 + $0x160] sm:$0xff] %v4636
        %4759 = vst [vmem:[%s245 + $0x168] sm:$0xff] %v4639
        %4760 = vst [vmem:[%s245 + $0x170] sm:$0xff] %v4644
        %4761 = vst [vmem:[%s245 + $0x178] sm:$0xff] %v4647
        %4762 = vst [vmem:[%s245 + $0x180] sm:$0xff] %v4652
        %4763 = vst [vmem:[%s245 + $0x188] sm:$0xff] %v4655
        %4764 = vst [vmem:[%s245 + $0x190] sm:$0xff] %v4660
        %4765 = vst [vmem:[%s245 + $0x198] sm:$0xff] %v4663
        %4766 = vst [vmem:[%s245 + $0x1a0] sm:$0xff] %v4668
        %4767 = vst [vmem:[%s245 + $0x1a8] sm:$0xff] %v4671
        %4768 = vst [vmem:[%s245 + $0x1b0] sm:$0xff] %v4676
        %4769 = vst [vmem:[%s245 + $0x1b8] sm:$0xff] %v4679
        %4770 = vst [vmem:[%s245 + $0x1c0] sm:$0xff] %v4684
        %4771 = vst [vmem:[%s245 + $0x1c8] sm:$0xff] %v4687
        %4772 = vst [vmem:[%s245 + $0x1d0] sm:$0xff] %v4692
        %4773 = vst [vmem:[%s245 + $0x1d8] sm:$0xff] %v4695
        %4774 = vst [vmem:[%s245 + $0x1e0] sm:$0xff] %v4700
        %4775 = vst [vmem:[%s245 + $0x1e8] sm:$0xff] %v4703
        %4776 = vst [vmem:[%s245 + $0x1f0] sm:$0xff] %v4708
        %4777 = vst [vmem:[%s245 + $0x1f8] sm:$0xff] %v4711
        %s4778 = sand.u32 %s159, 1
        %s4779 = scalar_lea.sflag [#allocation3], %s4778
        %s4780 = sand.u32 %s159, 1
        %s4781 = smul.addr %s4780, 512
        %s4782 = scalar_lea.vmem [#allocation2], %s4781
        // Predicated region
        $region45: #{tpu_custom_call.1} parent=43 // pred_check
          %p4783 = pneg %p169
        $region46: #{tpu_custom_call.1} parent=43 // pred_check_branch
          %4785 = sbr.rel (%p4783) target = $region48
        $region47: #{tpu_custom_call.1} parent=43 // pred_region
          %s4786 = smul.u32 64, %s20
          %s4788 = ssub.s32 8192, 8192
          %4789 = vsyncadd %s4779, %s4788
          %s4790 = smul.addr %s4786, 128
          %s4791 = scalar_lea.hbm %s6, %s4790
          %s4792 = sshll.u32 %s4782, 4
          %s4793 = int_to_ptr.vmem [resolvable:$true] %s4792
          %4798 = dma.vmem_to_hbm [thread:$0]  %s4793, 8192, %s4791, %s4779, 128, 128, 8
        $region48: #{tpu_custom_call.1} parent=43 // pred_fallthru
          _
      $region44: #{tpu_custom_call.1} parent=5 // pred_fallthru
        _
      %p4799 = scmp.le.s32.totalorder 2, %s15
      // Predicated region
      $region49: #{tpu_custom_call.1} parent=5 // pred_check
        %p4800 = pneg %p4799
      $region50: #{tpu_custom_call.1} parent=5 // pred_check_branch
        %4802 = sbr.rel (%p4800) target = $region52
      $region51: #{tpu_custom_call.1} parent=5 // pred_region
        %s4803 = ssub.s32 %s15, 2
        // Predicated region
        $region53: #{tpu_custom_call.1} parent=51 // pred_check
          %p4804 = pneg %p175
        $region54: #{tpu_custom_call.1} parent=51 // pred_check_branch
          %4806 = sbr.rel (%p4804) target = $region56
        $region55: #{tpu_custom_call.1} parent=51 // pred_region
          %s4807 = sand.u32 %s160, 1
          %s4808 = scalar_lea.sflag [#allocation3], %s4807
          %s4809 = sand.u32 %s160, 1
          %s4810 = smul.addr %s4809, 512
          %s4811 = scalar_lea.vmem [#allocation2], %s4810
          %4812 = dma.done %s4808, 8192
        $region56: #{tpu_custom_call.1} parent=51 // pred_fallthru
          _
      $region52: #{tpu_custom_call.1} parent=5 // pred_fallthru
        _
    $region6: #{tpu_custom_call.1} parent=1 // loop_footer
      %s19 = sadd.s32 1, %s15
    $region7: #{tpu_custom_call.1} parent=1 // loop_footer_branch
      %14 = sbr.rel target = $region3
    $region8: #{tpu_custom_call.1} parent=1 // loop_exit
      _
    %4813 = vsyncpa [#allocation3], 1
    %s4814 = scalar_lea.sflag [#allocation3], 1
    %4815 = vsyncpa %s4814, 1

</llo_original>
